<compile_context>
chip_gen: v7x
topology: tpu7x:2x2x1
jax: 0.10.0
libtpu: 0.0.40
codegen_flags: <defaults>
</compile_context>

<pallas_src>
import functools

import jax
import jax.numpy as jnp
from jax.experimental import pallas as pl
from jax.experimental.pallas import tpu as pltpu


# ----------------------------- fused Pallas kernel -----------------------------

def _fused_tracking_kernel(x_ref, t_ref, pe_ref, po_ref, csel_ref,
                           r_ref, qe_ref, qo_ref, s_ref,
                           bdw1_ref, b1t_ref, bdw2_ref, b2t_ref,
                           wf1_ref, bf1_ref, wf2_ref, bf2_ref,
                           wf3_ref, bf3_ref, o_ref, *, c1, c2):
    """NB samples per grid step; all activations are 2-D VMEM slabs.

    Activation layouts (rows always pack the batch):
      x2d  : (NB*10, 136)    row = b*10 + h_pad , col = w_pad*4  + ci
      y1   : (NB*8 , 32*c1)  row = b*8  + h     , col = w*c1     + co
      p1p  : (NB*6 , 18*c1)  row = b*6  + h_pad , col = w_pad*c1 + ci   (conv2 input, zero-padded)
      y2   : (NB*4 , 16*c2)  row = b*4  + h     , col = w*c2     + co
      p2   : (NB*3 , 15*c2)  row = b*3  + h     , col = w*c2     + co
    """
    f32 = jnp.float32
    x2d = x_ref[...]                                   # (NB*10, 136)
    nb8 = pe_ref.shape[1]                              # NB*8
    nb4 = qe_ref.shape[1]                              # NB*4
    nb = s_ref.shape[1]                                # NB

    # conv1 (3x3, pad 1) + bias + ReLU: per-tap row shift = selection matmul,
    # per-tap channel mix = block-diagonal weight matmul, f32 accumulation.
    acc1 = jnp.zeros((nb8, 32 * c1), f32)
    for dy in range(3):
        xr = jnp.dot(t_ref[dy], x2d, preferred_element_type=f32)        # (NB*8, 136)
        for dx in range(3):
            t = dy * 3 + dx
            acc1 = acc1 + jnp.dot(xr[:, dx * 4: dx * 4 + 128],
                                  bdw1_ref[t], preferred_element_type=f32)
    y1 = jnp.maximum(acc1 + b1t_ref[...], 0.0)                          # (NB*8, 32*c1)

    # maxpool 2x2 stride 2, fused with conv2's zero padding.
    # rows: even/odd selection matmuls (zero rows double as spatial padding).
    prow = jnp.maximum(jnp.dot(pe_ref[...], y1, preferred_element_type=f32),
                       jnp.dot(po_ref[...], y1, preferred_element_type=f32))  # (NB*6, 32*c1)
    # cols: adjacent max, then stride-2 subsample + zero-pad via csel matmul.
    cmax = jnp.maximum(prow[:, 0:31 * c1], prow[:, c1:32 * c1])               # (NB*6, 31*c1)
    p1p = jnp.dot(cmax, csel_ref[...], preferred_element_type=f32)            # (NB*6, 18*c1)

    # conv2 (3x3, pad 1) + bias + ReLU.
    acc2 = jnp.zeros((nb4, 16 * c2), f32)
    for dy in range(3):
        rr = jnp.dot(r_ref[dy], p1p, preferred_element_type=f32)        # (NB*4, 18*c1)
        for dx in range(3):
            t = dy * 3 + dx
            acc2 = acc2 + jnp.dot(rr[:, dx * c1: (dx + 16) * c1],
                                  bdw2_ref[t], preferred_element_type=f32)
    y2 = jnp.maximum(acc2 + b2t_ref[...], 0.0)                          # (NB*4, 16*c2)

    # maxpool 2x2 stride 1.
    rmax2 = jnp.maximum(jnp.dot(qe_ref[...], y2, preferred_element_type=f32),
                        jnp.dot(qo_ref[...], y2, preferred_element_type=f32))  # (NB*3, 16*c2)
    p2 = jnp.maximum(rmax2[:, 0:15 * c2], rmax2[:, c2:16 * c2])                # (NB*3, 15*c2)

    # fc1 -> ReLU -> fc2 -> ReLU -> fc3.  torch's (C,H,W) flatten order is folded
    # into wf1 at prep time; the per-sample row grouping is done by S selections.
    # TODO(synk): Dropout(p=drop1/drop2) omitted — eval-mode identity; training
    # mode would use pltpu.prng_seed / pltpu.stateful_bernoulli.
    h = jnp.zeros((nb, wf1_ref.shape[2]), f32)
    for r in range(3):
        g = jnp.dot(s_ref[r], p2, preferred_element_type=f32)           # (NB, 15*c2)
        h = h + jnp.dot(g, wf1_ref[r], preferred_element_type=f32)      # (NB, l1)
    h = jnp.maximum(h + bf1_ref[...], 0.0)
    h = jnp.maximum(jnp.dot(h, wf2_ref[...], preferred_element_type=f32) + bf2_ref[...], 0.0)
    out = jnp.dot(h, wf3_ref[...], preferred_element_type=f32) + bf3_ref[...]
    o_ref[...] = out.astype(o_ref.dtype)


# ----------------------------- one-time param prep (host-side) -----------------------------

def prepare_kernel_params(p):
    """Transform torch-layout params into the fused kernel's layout (runs once)."""
    cw1, cw2 = p["cw1"], p["cw2"]
    cin, c1 = cw1.shape[2], cw1.shape[3]
    c2 = cw2.shape[3]
    l1 = p["fw1"].shape[1]
    assert cin == 4 and cw1.shape[:2] == (3, 3) and cw2.shape[:2] == (3, 3)

    # Block-diagonal conv weights: bdw[t][(w,ci),(v,co)] = W[t][ci,co] * (w == v).
    eye32 = jnp.eye(32, dtype=jnp.float32)
    eye16 = jnp.eye(16, dtype=jnp.float32)
    bdw1 = jnp.einsum("dio,wv->dwivo", cw1.reshape(9, cin, c1), eye32).reshape(9, 32 * cin, 32 * c1)
    bdw2 = jnp.einsum("dio,wv->dwivo", cw2.reshape(9, c1, c2), eye16).reshape(9, 16 * c1, 16 * c2)
    b1t = jnp.tile(p["cb1"], 32).reshape(1, 32 * c1)
    b2t = jnp.tile(p["cb2"], 16).reshape(1, 16 * c2)

    # Pool1 column stride-2 subsampling as a 0/1 selection matmul; its zero
    # columns double as conv2's horizontal zero padding.
    wsel = jnp.zeros((31, 18), jnp.float32).at[jnp.arange(0, 31, 2), jnp.arange(1, 17)].set(1.0)
    csel = jnp.einsum("wv,ij->wivj", wsel, jnp.eye(c1, dtype=jnp.float32)).reshape(31 * c1, 18 * c1)

    # fc1 weight rows are in torch's flatten order (co, h, w); permute once to the
    # kernel's (h, w*c2 + co) layout so the flatten transpose disappears.
    wf1 = jnp.transpose(p["fw1"].reshape(c2, 3, 15, l1), (1, 2, 0, 3)).reshape(3, 15 * c2, l1)

    return {
        "bdw1": bdw1, "b1t": b1t, "csel": csel,
        "bdw2": bdw2, "b2t": b2t,
        "wf1": wf1, "bf1": p["fb1"].reshape(1, -1),
        "wf2": p["fw2"], "bf2": p["fb2"].reshape(1, -1),
        "wf3": p["fw3"], "bf3": p["fb3"].reshape(1, -1),
    }


# ----------------------------- batched row-selection matrices -----------------------------

def _row_shift_sel(nb, rows_out, rows_in, shift):
    """M[b*rows_out + h, b*rows_in + h + shift] = 1  (block-diagonal over batch)."""
    b = jnp.repeat(jnp.arange(nb), rows_out)
    h = jnp.tile(jnp.arange(rows_out), nb)
    m = jnp.zeros((nb * rows_out, nb * rows_in), jnp.float32)
    return m.at[b * rows_out + h, b * rows_in + h + shift].set(1.0)


def _pool1_row_sel(nb, odd):
    """M[b*6 + r + 1, b*8 + 2r + odd] = 1 — stride-2 row pick + conv2 zero pad rows."""
    b = jnp.repeat(jnp.arange(nb), 4)
    r = jnp.tile(jnp.arange(4), nb)
    m = jnp.zeros((nb * 6, nb * 8), jnp.float32)
    return m.at[b * 6 + r + 1, b * 8 + 2 * r + odd].set(1.0)


def _make_selectors(nb):
    return {
        "T": jnp.stack([_row_shift_sel(nb, 8, 10, d) for d in range(3)]),   # conv1 tap rows
        "Pe": _pool1_row_sel(nb, 0), "Po": _pool1_row_sel(nb, 1),           # pool1 rows (+pad)
        "R": jnp.stack([_row_shift_sel(nb, 4, 6, d) for d in range(3)]),    # conv2 tap rows
        "Qe": _row_shift_sel(nb, 3, 4, 0), "Qo": _row_shift_sel(nb, 3, 4, 1),  # pool2 rows
        "S": jnp.stack([_row_shift_sel(nb, 1, 3, r) for r in range(3)]),    # flatten row groups
    }


# ----------------------------- fused forward wrapper -----------------------------

_NB = 8  # samples per grid step (batch tile)

_INPUT_KEYS = ("T", "Pe", "Po", "csel", "R", "Qe", "Qo", "S",
               "bdw1", "b1t", "bdw2", "b2t",
               "wf1", "bf1", "wf2", "bf2", "wf3", "bf3")


def tracking_model_forward(x_nchw, kp):
    """Matches TrackingModel.forward (eval mode) with a single fused pallas_call."""
    n, cin, hh, ww = x_nchw.shape
    assert (cin, hh, ww) == (4, 8, 32), "fc1 in-features 3*15*conv2 implies a (4, 8, 32) input"
    c1 = kp["b1t"].shape[1] // 32
    c2 = kp["b2t"].shape[1] // 16

    nb = _NB
    n_pad = ((n + nb - 1) // nb) * nb

    # Glue (plain XLA, runs once): pad batch, NCHW -> NHWC, zero-pad spatial by 1,
    # flatten to a 2-D slab (rows = b*10 + h_pad, cols = w_pad*4 + ci).
    xp = jnp.pad(x_nchw, ((0, n_pad - n), (0, 0), (0, 0), (0, 0)))
    xh = jnp.transpose(xp, (0, 2, 3, 1))
    xh = jnp.pad(xh, ((0, 0), (1, 1), (1, 1), (0, 0)))
    x2d = xh.reshape(n_pad * (hh + 2), (ww + 2) * cin)          # (n_pad*10, 136)

    ops = dict(kp)
    ops.update(_make_selectors(nb))

    def _const_spec(a):
        zeros = (0,) * a.ndim
        return pl.BlockSpec(a.shape, lambda i, z=zeros: z)      # weights stay VMEM-resident

    in_specs = [pl.BlockSpec((nb * (hh + 2), (ww + 2) * cin), lambda i: (i, 0))]
    in_specs += [_const_spec(ops[k]) for k in _INPUT_KEYS]

    out = pl.pallas_call(
        functools.partial(_fused_tracking_kernel, c1=c1, c2=c2),
        grid=(n_pad // nb,),
        in_specs=in_specs,
        out_specs=pl.BlockSpec((nb, 4), lambda i: (i, 0)),
        out_shape=jax.ShapeDtypeStruct((n_pad, 4), jnp.float32),
        compiler_params=pltpu.CompilerParams(
            dimension_semantics=("parallel",),        # batch tiles shard over v7x's 2 TensorCores
            vmem_limit_bytes=32 * 1024 * 1024),
    )(x2d, *[ops[k] for k in _INPUT_KEYS])
    return out[:n]


# ----------------------------- deterministic params -----------------------------

def _uniform(key, shape, limit):
    return jax.random.uniform(key, shape, jnp.float32, -limit, limit)


def init_params(conv1, conv2, l1, l2, key):
    ks = jax.random.split(key, 10)
    d_flat = 3 * 15 * conv2

    def xavier(k, fan_in, fan_out, shape):
        return _uniform(k, shape, (6.0 / (fan_in + fan_out)) ** 0.5)

    return {
        # conv weights in HWIO layout (3,3,Cin,Cout)
        "cw1": _uniform(ks[0], (3, 3, 4, conv1), (1.0 / (9 * 4)) ** 0.5),
        "cb1": _uniform(ks[1], (conv1,), (1.0 / (9 * 4)) ** 0.5),
        "cw2": _uniform(ks[2], (3, 3, conv1, conv2), (1.0 / (9 * conv1)) ** 0.5),
        "cb2": _uniform(ks[3], (conv2,), (1.0 / (9 * conv1)) ** 0.5),
        "fw1": xavier(ks[4], d_flat, l1, (d_flat, l1)),
        "fb1": _uniform(ks[5], (l1,), (1.0 / d_flat) ** 0.5),
        "fw2": xavier(ks[6], l1, l2, (l1, l2)),
        "fb2": _uniform(ks[7], (l2,), (1.0 / l1) ** 0.5),
        "fw3": xavier(ks[8], l2, 4, (l2, 4)),
        "fb3": _uniform(ks[9], (4,), (1.0 / l2) ** 0.5),
    }


# ----------------------------- pure-JAX reference (for validation) -----------------------------

def reference_forward(x_nchw, p):
    dn = ("NCHW", "OIHW", "NCHW")
    w1 = jnp.transpose(p["cw1"], (3, 2, 0, 1))
    y = jax.lax.conv_general_dilated(x_nchw, w1, (1, 1), ((1, 1), (1, 1)),
                                     dimension_numbers=dn)
    y = jax.nn.relu(y + p["cb1"][None, :, None, None])
    y = jax.lax.reduce_window(y, -jnp.inf, jax.lax.max, (1, 1, 2, 2), (1, 1, 2, 2), "VALID")
    w2 = jnp.transpose(p["cw2"], (3, 2, 0, 1))
    y = jax.lax.conv_general_dilated(y, w2, (1, 1), ((1, 1), (1, 1)),
                                     dimension_numbers=dn)
    y = jax.nn.relu(y + p["cb2"][None, :, None, None])
    y = jax.lax.reduce_window(y, -jnp.inf, jax.lax.max, (1, 1, 2, 2), (1, 1, 1, 1), "VALID")
    y = y.reshape(y.shape[0], -1)
    y = jax.nn.relu(y @ p["fw1"] + p["fb1"])
    y = jax.nn.relu(y @ p["fw2"] + p["fb2"])
    return y @ p["fw3"] + p["fb3"]


# ----------------------------- main -----------------------------

if __name__ == "__main__":
    # Model hyper-params (small): conv1=8, conv2=8, drop1/drop2 unused (eval), l1=32, l2=16.
    CONV1, CONV2, L1, L2 = 8, 8, 32, 16
    BATCH = 2

    key = jax.random.PRNGKey(0)
    kx, kparam = jax.random.split(key)
    params = init_params(CONV1, CONV2, L1, L2, kparam)
    kernel_params = prepare_kernel_params(params)      # one-time host-side weight transform

    # Input must be (N, 4, 8, 32): fc1 expects 3*15*conv2 features after the two pools.
    x = jax.random.normal(kx, (BATCH, 4, 8, 32), dtype=jnp.float32)

    fwd = jax.jit(tracking_model_forward)
    out = jax.block_until_ready(fwd(x, kernel_params))
    assert out.shape == (BATCH, 4), out.shape

    ref = jax.block_until_ready(reference_forward(x, params))
    assert jnp.allclose(out, ref, atol=1e-2, rtol=1e-2), (out, ref)

    print("KERNEL_OK")
</pallas_src>

<mosaic_0001>
module attributes {stable_mosaic.version = 11 : i64} {
  func.func @_fused_tracking_kernel(%arg0: i32, %arg1: memref<80x136xf32, #tpu.memory_space<vmem>>, %arg2: memref<3x64x80xf32, #tpu.memory_space<vmem>>, %arg3: memref<48x64xf32, #tpu.memory_space<vmem>>, %arg4: memref<48x64xf32, #tpu.memory_space<vmem>>, %arg5: memref<248x144xf32, #tpu.memory_space<vmem>>, %arg6: memref<3x32x48xf32, #tpu.memory_space<vmem>>, %arg7: memref<24x32xf32, #tpu.memory_space<vmem>>, %arg8: memref<24x32xf32, #tpu.memory_space<vmem>>, %arg9: memref<3x8x24xf32, #tpu.memory_space<vmem>>, %arg10: memref<9x128x256xf32, #tpu.memory_space<vmem>>, %arg11: memref<1x256xf32, #tpu.memory_space<vmem>>, %arg12: memref<9x128x128xf32, #tpu.memory_space<vmem>>, %arg13: memref<1x128xf32, #tpu.memory_space<vmem>>, %arg14: memref<3x120x32xf32, #tpu.memory_space<vmem>>, %arg15: memref<1x32xf32, #tpu.memory_space<vmem>>, %arg16: memref<32x16xf32, #tpu.memory_space<vmem>>, %arg17: memref<1x16xf32, #tpu.memory_space<vmem>>, %arg18: memref<16x4xf32, #tpu.memory_space<vmem>>, %arg19: memref<1x4xf32, #tpu.memory_space<vmem>>, %arg20: memref<8x4xf32, #tpu.memory_space<vmem>>) attributes {dimension_semantics = [#tpu.dimension_semantics<parallel>], iteration_bounds = array<i64: 1>, scalar_prefetch = 0 : i64, scratch_operands = 0 : i64, tpu.core_type = #tpu.core_type<tc>, window_params = [{transform_indices = @transform_0, window_bounds = array<i64: 80, 136>}, {pipeline_mode = #tpu.pipeline_mode<synchronous>, transform_indices = @transform_1, window_bounds = array<i64: 3, 64, 80>}, {pipeline_mode = #tpu.pipeline_mode<synchronous>, transform_indices = @transform_2, window_bounds = array<i64: 48, 64>}, {pipeline_mode = #tpu.pipeline_mode<synchronous>, transform_indices = @transform_3, window_bounds = array<i64: 48, 64>}, {pipeline_mode = #tpu.pipeline_mode<synchronous>, transform_indices = @transform_4, window_bounds = array<i64: 248, 144>}, {pipeline_mode = #tpu.pipeline_mode<synchronous>, transform_indices = @transform_5, window_bounds = array<i64: 3, 32, 48>}, {pipeline_mode = #tpu.pipeline_mode<synchronous>, transform_indices = @transform_6, window_bounds = array<i64: 24, 32>}, {pipeline_mode = #tpu.pipeline_mode<synchronous>, transform_indices = @transform_7, window_bounds = array<i64: 24, 32>}, {pipeline_mode = #tpu.pipeline_mode<synchronous>, transform_indices = @transform_8, window_bounds = array<i64: 3, 8, 24>}, {pipeline_mode = #tpu.pipeline_mode<synchronous>, transform_indices = @transform_9, window_bounds = array<i64: 9, 128, 256>}, {pipeline_mode = #tpu.pipeline_mode<synchronous>, transform_indices = @transform_10, window_bounds = array<i64: 1, 256>}, {pipeline_mode = #tpu.pipeline_mode<synchronous>, transform_indices = @transform_11, window_bounds = array<i64: 9, 128, 128>}, {pipeline_mode = #tpu.pipeline_mode<synchronous>, transform_indices = @transform_12, window_bounds = array<i64: 1, 128>}, {pipeline_mode = #tpu.pipeline_mode<synchronous>, transform_indices = @transform_13, window_bounds = array<i64: 3, 120, 32>}, {pipeline_mode = #tpu.pipeline_mode<synchronous>, transform_indices = @transform_14, window_bounds = array<i64: 1, 32>}, {pipeline_mode = #tpu.pipeline_mode<synchronous>, transform_indices = @transform_15, window_bounds = array<i64: 32, 16>}, {pipeline_mode = #tpu.pipeline_mode<synchronous>, transform_indices = @transform_16, window_bounds = array<i64: 1, 16>}, {pipeline_mode = #tpu.pipeline_mode<synchronous>, transform_indices = @transform_17, window_bounds = array<i64: 16, 4>}, {pipeline_mode = #tpu.pipeline_mode<synchronous>, transform_indices = @transform_18, window_bounds = array<i64: 1, 4>}, {transform_indices = @transform_19, window_bounds = array<i64: 8, 4>}]} {
    %c0 = arith.constant 0 : index
    %c0_0 = arith.constant 0 : index
    %0 = vector.load %arg1[%c0, %c0_0] : memref<80x136xf32, #tpu.memory_space<vmem>>, vector<80x136xf32>
    %cst = arith.constant 0.000000e+00 : f32
    %1 = vector.broadcast %cst : f32 to vector<64x256xf32>
    %c0_1 = arith.constant 0 : index
    %c0_2 = arith.constant 0 : index
    %c0_3 = arith.constant 0 : index
    %2 = vector.load %arg2[%c0_1, %c0_2, %c0_3] : memref<3x64x80xf32, #tpu.memory_space<vmem>>, vector<1x64x80xf32>
    %3 = vector.shape_cast %2 : vector<1x64x80xf32> to vector<64x80xf32>
    %cst_4 = arith.constant dense<0.000000e+00> : vector<64x136xf32>
    %4 = tpu.matmul %3, %0, %cst_4 {dimension_numbers = #tpu.dot_dimension_numbers<[1], [0], [0], [1], [0, 0, 1, 1], [], []>} : vector<64x80xf32>, vector<80x136xf32>, vector<64x136xf32> -> vector<64x136xf32>
    %5 = vector.extract_strided_slice %4 {offsets = [0, 0], sizes = [64, 128], strides = [1, 1]} : vector<64x136xf32> to vector<64x128xf32>
    %c0_5 = arith.constant 0 : index
    %c0_6 = arith.constant 0 : index
    %c0_7 = arith.constant 0 : index
    %6 = vector.load %arg10[%c0_5, %c0_6, %c0_7] : memref<9x128x256xf32, #tpu.memory_space<vmem>>, vector<1x128x256xf32>
    %7 = vector.shape_cast %6 : vector<1x128x256xf32> to vector<128x256xf32>
    %cst_8 = arith.constant dense<0.000000e+00> : vector<64x256xf32>
    %8 = tpu.matmul %5, %7, %cst_8 {dimension_numbers = #tpu.dot_dimension_numbers<[1], [0], [0], [1], [0, 0, 1, 1], [], []>} : vector<64x128xf32>, vector<128x256xf32>, vector<64x256xf32> -> vector<64x256xf32>
    %9 = arith.addf %1, %8 : vector<64x256xf32>
    %10 = vector.extract_strided_slice %4 {offsets = [0, 4], sizes = [64, 128], strides = [1, 1]} : vector<64x136xf32> to vector<64x128xf32>
    %c1 = arith.constant 1 : index
    %c0_9 = arith.constant 0 : index
    %c0_10 = arith.constant 0 : index
    %11 = vector.load %arg10[%c1, %c0_9, %c0_10] : memref<9x128x256xf32, #tpu.memory_space<vmem>>, vector<1x128x256xf32>
    %12 = vector.shape_cast %11 : vector<1x128x256xf32> to vector<128x256xf32>
    %cst_11 = arith.constant dense<0.000000e+00> : vector<64x256xf32>
    %13 = tpu.matmul %10, %12, %cst_11 {dimension_numbers = #tpu.dot_dimension_numbers<[1], [0], [0], [1], [0, 0, 1, 1], [], []>} : vector<64x128xf32>, vector<128x256xf32>, vector<64x256xf32> -> vector<64x256xf32>
    %14 = arith.addf %9, %13 : vector<64x256xf32>
    %15 = vector.extract_strided_slice %4 {offsets = [0, 8], sizes = [64, 128], strides = [1, 1]} : vector<64x136xf32> to vector<64x128xf32>
    %c2 = arith.constant 2 : index
    %c0_12 = arith.constant 0 : index
    %c0_13 = arith.constant 0 : index
    %16 = vector.load %arg10[%c2, %c0_12, %c0_13] : memref<9x128x256xf32, #tpu.memory_space<vmem>>, vector<1x128x256xf32>
    %17 = vector.shape_cast %16 : vector<1x128x256xf32> to vector<128x256xf32>
    %cst_14 = arith.constant dense<0.000000e+00> : vector<64x256xf32>
    %18 = tpu.matmul %15, %17, %cst_14 {dimension_numbers = #tpu.dot_dimension_numbers<[1], [0], [0], [1], [0, 0, 1, 1], [], []>} : vector<64x128xf32>, vector<128x256xf32>, vector<64x256xf32> -> vector<64x256xf32>
    %19 = arith.addf %14, %18 : vector<64x256xf32>
    %c1_15 = arith.constant 1 : index
    %c0_16 = arith.constant 0 : index
    %c0_17 = arith.constant 0 : index
    %20 = vector.load %arg2[%c1_15, %c0_16, %c0_17] : memref<3x64x80xf32, #tpu.memory_space<vmem>>, vector<1x64x80xf32>
    %21 = vector.shape_cast %20 : vector<1x64x80xf32> to vector<64x80xf32>
    %cst_18 = arith.constant dense<0.000000e+00> : vector<64x136xf32>
    %22 = tpu.matmul %21, %0, %cst_18 {dimension_numbers = #tpu.dot_dimension_numbers<[1], [0], [0], [1], [0, 0, 1, 1], [], []>} : vector<64x80xf32>, vector<80x136xf32>, vector<64x136xf32> -> vector<64x136xf32>
    %23 = vector.extract_strided_slice %22 {offsets = [0, 0], sizes = [64, 128], strides = [1, 1]} : vector<64x136xf32> to vector<64x128xf32>
    %c3 = arith.constant 3 : index
    %c0_19 = arith.constant 0 : index
    %c0_20 = arith.constant 0 : index
    %24 = vector.load %arg10[%c3, %c0_19, %c0_20] : memref<9x128x256xf32, #tpu.memory_space<vmem>>, vector<1x128x256xf32>
    %25 = vector.shape_cast %24 : vector<1x128x256xf32> to vector<128x256xf32>
    %cst_21 = arith.constant dense<0.000000e+00> : vector<64x256xf32>
    %26 = tpu.matmul %23, %25, %cst_21 {dimension_numbers = #tpu.dot_dimension_numbers<[1], [0], [0], [1], [0, 0, 1, 1], [], []>} : vector<64x128xf32>, vector<128x256xf32>, vector<64x256xf32> -> vector<64x256xf32>
    %27 = arith.addf %19, %26 : vector<64x256xf32>
    %28 = vector.extract_strided_slice %22 {offsets = [0, 4], sizes = [64, 128], strides = [1, 1]} : vector<64x136xf32> to vector<64x128xf32>
    %c4 = arith.constant 4 : index
    %c0_22 = arith.constant 0 : index
    %c0_23 = arith.constant 0 : index
    %29 = vector.load %arg10[%c4, %c0_22, %c0_23] : memref<9x128x256xf32, #tpu.memory_space<vmem>>, vector<1x128x256xf32>
    %30 = vector.shape_cast %29 : vector<1x128x256xf32> to vector<128x256xf32>
    %cst_24 = arith.constant dense<0.000000e+00> : vector<64x256xf32>
    %31 = tpu.matmul %28, %30, %cst_24 {dimension_numbers = #tpu.dot_dimension_numbers<[1], [0], [0], [1], [0, 0, 1, 1], [], []>} : vector<64x128xf32>, vector<128x256xf32>, vector<64x256xf32> -> vector<64x256xf32>
    %32 = arith.addf %27, %31 : vector<64x256xf32>
    %33 = vector.extract_strided_slice %22 {offsets = [0, 8], sizes = [64, 128], strides = [1, 1]} : vector<64x136xf32> to vector<64x128xf32>
    %c5 = arith.constant 5 : index
    %c0_25 = arith.constant 0 : index
    %c0_26 = arith.constant 0 : index
    %34 = vector.load %arg10[%c5, %c0_25, %c0_26] : memref<9x128x256xf32, #tpu.memory_space<vmem>>, vector<1x128x256xf32>
    %35 = vector.shape_cast %34 : vector<1x128x256xf32> to vector<128x256xf32>
    %cst_27 = arith.constant dense<0.000000e+00> : vector<64x256xf32>
    %36 = tpu.matmul %33, %35, %cst_27 {dimension_numbers = #tpu.dot_dimension_numbers<[1], [0], [0], [1], [0, 0, 1, 1], [], []>} : vector<64x128xf32>, vector<128x256xf32>, vector<64x256xf32> -> vector<64x256xf32>
    %37 = arith.addf %32, %36 : vector<64x256xf32>
    %c2_28 = arith.constant 2 : index
    %c0_29 = arith.constant 0 : index
    %c0_30 = arith.constant 0 : index
    %38 = vector.load %arg2[%c2_28, %c0_29, %c0_30] : memref<3x64x80xf32, #tpu.memory_space<vmem>>, vector<1x64x80xf32>
    %39 = vector.shape_cast %38 : vector<1x64x80xf32> to vector<64x80xf32>
    %cst_31 = arith.constant dense<0.000000e+00> : vector<64x136xf32>
    %40 = tpu.matmul %39, %0, %cst_31 {dimension_numbers = #tpu.dot_dimension_numbers<[1], [0], [0], [1], [0, 0, 1, 1], [], []>} : vector<64x80xf32>, vector<80x136xf32>, vector<64x136xf32> -> vector<64x136xf32>
    %41 = vector.extract_strided_slice %40 {offsets = [0, 0], sizes = [64, 128], strides = [1, 1]} : vector<64x136xf32> to vector<64x128xf32>
    %c6 = arith.constant 6 : index
    %c0_32 = arith.constant 0 : index
    %c0_33 = arith.constant 0 : index
    %42 = vector.load %arg10[%c6, %c0_32, %c0_33] : memref<9x128x256xf32, #tpu.memory_space<vmem>>, vector<1x128x256xf32>
    %43 = vector.shape_cast %42 : vector<1x128x256xf32> to vector<128x256xf32>
    %cst_34 = arith.constant dense<0.000000e+00> : vector<64x256xf32>
    %44 = tpu.matmul %41, %43, %cst_34 {dimension_numbers = #tpu.dot_dimension_numbers<[1], [0], [0], [1], [0, 0, 1, 1], [], []>} : vector<64x128xf32>, vector<128x256xf32>, vector<64x256xf32> -> vector<64x256xf32>
    %45 = arith.addf %37, %44 : vector<64x256xf32>
    %46 = vector.extract_strided_slice %40 {offsets = [0, 4], sizes = [64, 128], strides = [1, 1]} : vector<64x136xf32> to vector<64x128xf32>
    %c7 = arith.constant 7 : index
    %c0_35 = arith.constant 0 : index
    %c0_36 = arith.constant 0 : index
    %47 = vector.load %arg10[%c7, %c0_35, %c0_36] : memref<9x128x256xf32, #tpu.memory_space<vmem>>, vector<1x128x256xf32>
    %48 = vector.shape_cast %47 : vector<1x128x256xf32> to vector<128x256xf32>
    %cst_37 = arith.constant dense<0.000000e+00> : vector<64x256xf32>
    %49 = tpu.matmul %46, %48, %cst_37 {dimension_numbers = #tpu.dot_dimension_numbers<[1], [0], [0], [1], [0, 0, 1, 1], [], []>} : vector<64x128xf32>, vector<128x256xf32>, vector<64x256xf32> -> vector<64x256xf32>
    %50 = arith.addf %45, %49 : vector<64x256xf32>
    %51 = vector.extract_strided_slice %40 {offsets = [0, 8], sizes = [64, 128], strides = [1, 1]} : vector<64x136xf32> to vector<64x128xf32>
    %c8 = arith.constant 8 : index
    %c0_38 = arith.constant 0 : index
    %c0_39 = arith.constant 0 : index
    %52 = vector.load %arg10[%c8, %c0_38, %c0_39] : memref<9x128x256xf32, #tpu.memory_space<vmem>>, vector<1x128x256xf32>
    %53 = vector.shape_cast %52 : vector<1x128x256xf32> to vector<128x256xf32>
    %cst_40 = arith.constant dense<0.000000e+00> : vector<64x256xf32>
    %54 = tpu.matmul %51, %53, %cst_40 {dimension_numbers = #tpu.dot_dimension_numbers<[1], [0], [0], [1], [0, 0, 1, 1], [], []>} : vector<64x128xf32>, vector<128x256xf32>, vector<64x256xf32> -> vector<64x256xf32>
    %55 = arith.addf %50, %54 : vector<64x256xf32>
    %c0_41 = arith.constant 0 : index
    %c0_42 = arith.constant 0 : index
    %56 = vector.load %arg11[%c0_41, %c0_42] : memref<1x256xf32, #tpu.memory_space<vmem>>, vector<1x256xf32>
    %57 = vector.broadcast %56 : vector<1x256xf32> to vector<64x256xf32>
    %58 = arith.addf %55, %57 : vector<64x256xf32>
    %cst_43 = arith.constant 0.000000e+00 : f32
    %59 = vector.broadcast %cst_43 : f32 to vector<64x256xf32>
    %60 = arith.maximumf %58, %59 : vector<64x256xf32>
    %c0_44 = arith.constant 0 : index
    %c0_45 = arith.constant 0 : index
    %61 = vector.load %arg3[%c0_44, %c0_45] : memref<48x64xf32, #tpu.memory_space<vmem>>, vector<48x64xf32>
    %cst_46 = arith.constant dense<0.000000e+00> : vector<48x256xf32>
    %62 = tpu.matmul %61, %60, %cst_46 {dimension_numbers = #tpu.dot_dimension_numbers<[1], [0], [0], [1], [0, 0, 1, 1], [], []>} : vector<48x64xf32>, vector<64x256xf32>, vector<48x256xf32> -> vector<48x256xf32>
    %c0_47 = arith.constant 0 : index
    %c0_48 = arith.constant 0 : index
    %63 = vector.load %arg4[%c0_47, %c0_48] : memref<48x64xf32, #tpu.memory_space<vmem>>, vector<48x64xf32>
    %cst_49 = arith.constant dense<0.000000e+00> : vector<48x256xf32>
    %64 = tpu.matmul %63, %60, %cst_49 {dimension_numbers = #tpu.dot_dimension_numbers<[1], [0], [0], [1], [0, 0, 1, 1], [], []>} : vector<48x64xf32>, vector<64x256xf32>, vector<48x256xf32> -> vector<48x256xf32>
    %65 = arith.maximumf %62, %64 : vector<48x256xf32>
    %66 = vector.extract_strided_slice %65 {offsets = [0, 0], sizes = [48, 248], strides = [1, 1]} : vector<48x256xf32> to vector<48x248xf32>
    %67 = vector.extract_strided_slice %65 {offsets = [0, 8], sizes = [48, 248], strides = [1, 1]} : vector<48x256xf32> to vector<48x248xf32>
    %68 = arith.maximumf %66, %67 : vector<48x248xf32>
    %c0_50 = arith.constant 0 : index
    %c0_51 = arith.constant 0 : index
    %69 = vector.load %arg5[%c0_50, %c0_51] : memref<248x144xf32, #tpu.memory_space<vmem>>, vector<248x144xf32>
    %cst_52 = arith.constant dense<0.000000e+00> : vector<48x144xf32>
    %70 = tpu.matmul %68, %69, %cst_52 {dimension_numbers = #tpu.dot_dimension_numbers<[1], [0], [0], [1], [0, 0, 1, 1], [], []>} : vector<48x248xf32>, vector<248x144xf32>, vector<48x144xf32> -> vector<48x144xf32>
    %cst_53 = arith.constant 0.000000e+00 : f32
    %71 = vector.broadcast %cst_53 : f32 to vector<32x128xf32>
    %c0_54 = arith.constant 0 : index
    %c0_55 = arith.constant 0 : index
    %c0_56 = arith.constant 0 : index
    %72 = vector.load %arg6[%c0_54, %c0_55, %c0_56] : memref<3x32x48xf32, #tpu.memory_space<vmem>>, vector<1x32x48xf32>
    %73 = vector.shape_cast %72 : vector<1x32x48xf32> to vector<32x48xf32>
    %cst_57 = arith.constant dense<0.000000e+00> : vector<32x144xf32>
    %74 = tpu.matmul %73, %70, %cst_57 {dimension_numbers = #tpu.dot_dimension_numbers<[1], [0], [0], [1], [0, 0, 1, 1], [], []>} : vector<32x48xf32>, vector<48x144xf32>, vector<32x144xf32> -> vector<32x144xf32>
    %75 = vector.extract_strided_slice %74 {offsets = [0, 0], sizes = [32, 128], strides = [1, 1]} : vector<32x144xf32> to vector<32x128xf32>
    %c0_58 = arith.constant 0 : index
    %c0_59 = arith.constant 0 : index
    %c0_60 = arith.constant 0 : index
    %76 = vector.load %arg12[%c0_58, %c0_59, %c0_60] : memref<9x128x128xf32, #tpu.memory_space<vmem>>, vector<1x128x128xf32>
    %77 = vector.shape_cast %76 : vector<1x128x128xf32> to vector<128x128xf32>
    %cst_61 = arith.constant dense<0.000000e+00> : vector<32x128xf32>
    %78 = tpu.matmul %75, %77, %cst_61 {dimension_numbers = #tpu.dot_dimension_numbers<[1], [0], [0], [1], [0, 0, 1, 1], [], []>} : vector<32x128xf32>, vector<128x128xf32>, vector<32x128xf32> -> vector<32x128xf32>
    %79 = arith.addf %71, %78 : vector<32x128xf32>
    %80 = vector.extract_strided_slice %74 {offsets = [0, 8], sizes = [32, 128], strides = [1, 1]} : vector<32x144xf32> to vector<32x128xf32>
    %c1_62 = arith.constant 1 : index
    %c0_63 = arith.constant 0 : index
    %c0_64 = arith.constant 0 : index
    %81 = vector.load %arg12[%c1_62, %c0_63, %c0_64] : memref<9x128x128xf32, #tpu.memory_space<vmem>>, vector<1x128x128xf32>
    %82 = vector.shape_cast %81 : vector<1x128x128xf32> to vector<128x128xf32>
    %cst_65 = arith.constant dense<0.000000e+00> : vector<32x128xf32>
    %83 = tpu.matmul %80, %82, %cst_65 {dimension_numbers = #tpu.dot_dimension_numbers<[1], [0], [0], [1], [0, 0, 1, 1], [], []>} : vector<32x128xf32>, vector<128x128xf32>, vector<32x128xf32> -> vector<32x128xf32>
    %84 = arith.addf %79, %83 : vector<32x128xf32>
    %85 = vector.extract_strided_slice %74 {offsets = [0, 16], sizes = [32, 128], strides = [1, 1]} : vector<32x144xf32> to vector<32x128xf32>
    %c2_66 = arith.constant 2 : index
    %c0_67 = arith.constant 0 : index
    %c0_68 = arith.constant 0 : index
    %86 = vector.load %arg12[%c2_66, %c0_67, %c0_68] : memref<9x128x128xf32, #tpu.memory_space<vmem>>, vector<1x128x128xf32>
    %87 = vector.shape_cast %86 : vector<1x128x128xf32> to vector<128x128xf32>
    %cst_69 = arith.constant dense<0.000000e+00> : vector<32x128xf32>
    %88 = tpu.matmul %85, %87, %cst_69 {dimension_numbers = #tpu.dot_dimension_numbers<[1], [0], [0], [1], [0, 0, 1, 1], [], []>} : vector<32x128xf32>, vector<128x128xf32>, vector<32x128xf32> -> vector<32x128xf32>
    %89 = arith.addf %84, %88 : vector<32x128xf32>
    %c1_70 = arith.constant 1 : index
    %c0_71 = arith.constant 0 : index
    %c0_72 = arith.constant 0 : index
    %90 = vector.load %arg6[%c1_70, %c0_71, %c0_72] : memref<3x32x48xf32, #tpu.memory_space<vmem>>, vector<1x32x48xf32>
    %91 = vector.shape_cast %90 : vector<1x32x48xf32> to vector<32x48xf32>
    %cst_73 = arith.constant dense<0.000000e+00> : vector<32x144xf32>
    %92 = tpu.matmul %91, %70, %cst_73 {dimension_numbers = #tpu.dot_dimension_numbers<[1], [0], [0], [1], [0, 0, 1, 1], [], []>} : vector<32x48xf32>, vector<48x144xf32>, vector<32x144xf32> -> vector<32x144xf32>
    %93 = vector.extract_strided_slice %92 {offsets = [0, 0], sizes = [32, 128], strides = [1, 1]} : vector<32x144xf32> to vector<32x128xf32>
    %c3_74 = arith.constant 3 : index
    %c0_75 = arith.constant 0 : index
    %c0_76 = arith.constant 0 : index
    %94 = vector.load %arg12[%c3_74, %c0_75, %c0_76] : memref<9x128x128xf32, #tpu.memory_space<vmem>>, vector<1x128x128xf32>
    %95 = vector.shape_cast %94 : vector<1x128x128xf32> to vector<128x128xf32>
    %cst_77 = arith.constant dense<0.000000e+00> : vector<32x128xf32>
    %96 = tpu.matmul %93, %95, %cst_77 {dimension_numbers = #tpu.dot_dimension_numbers<[1], [0], [0], [1], [0, 0, 1, 1], [], []>} : vector<32x128xf32>, vector<128x128xf32>, vector<32x128xf32> -> vector<32x128xf32>
    %97 = arith.addf %89, %96 : vector<32x128xf32>
    %98 = vector.extract_strided_slice %92 {offsets = [0, 8], sizes = [32, 128], strides = [1, 1]} : vector<32x144xf32> to vector<32x128xf32>
    %c4_78 = arith.constant 4 : index
    %c0_79 = arith.constant 0 : index
    %c0_80 = arith.constant 0 : index
    %99 = vector.load %arg12[%c4_78, %c0_79, %c0_80] : memref<9x128x128xf32, #tpu.memory_space<vmem>>, vector<1x128x128xf32>
    %100 = vector.shape_cast %99 : vector<1x128x128xf32> to vector<128x128xf32>
    %cst_81 = arith.constant dense<0.000000e+00> : vector<32x128xf32>
    %101 = tpu.matmul %98, %100, %cst_81 {dimension_numbers = #tpu.dot_dimension_numbers<[1], [0], [0], [1], [0, 0, 1, 1], [], []>} : vector<32x128xf32>, vector<128x128xf32>, vector<32x128xf32> -> vector<32x128xf32>
    %102 = arith.addf %97, %101 : vector<32x128xf32>
    %103 = vector.extract_strided_slice %92 {offsets = [0, 16], sizes = [32, 128], strides = [1, 1]} : vector<32x144xf32> to vector<32x128xf32>
    %c5_82 = arith.constant 5 : index
    %c0_83 = arith.constant 0 : index
    %c0_84 = arith.constant 0 : index
    %104 = vector.load %arg12[%c5_82, %c0_83, %c0_84] : memref<9x128x128xf32, #tpu.memory_space<vmem>>, vector<1x128x128xf32>
    %105 = vector.shape_cast %104 : vector<1x128x128xf32> to vector<128x128xf32>
    %cst_85 = arith.constant dense<0.000000e+00> : vector<32x128xf32>
    %106 = tpu.matmul %103, %105, %cst_85 {dimension_numbers = #tpu.dot_dimension_numbers<[1], [0], [0], [1], [0, 0, 1, 1], [], []>} : vector<32x128xf32>, vector<128x128xf32>, vector<32x128xf32> -> vector<32x128xf32>
    %107 = arith.addf %102, %106 : vector<32x128xf32>
    %c2_86 = arith.constant 2 : index
    %c0_87 = arith.constant 0 : index
    %c0_88 = arith.constant 0 : index
    %108 = vector.load %arg6[%c2_86, %c0_87, %c0_88] : memref<3x32x48xf32, #tpu.memory_space<vmem>>, vector<1x32x48xf32>
    %109 = vector.shape_cast %108 : vector<1x32x48xf32> to vector<32x48xf32>
    %cst_89 = arith.constant dense<0.000000e+00> : vector<32x144xf32>
    %110 = tpu.matmul %109, %70, %cst_89 {dimension_numbers = #tpu.dot_dimension_numbers<[1], [0], [0], [1], [0, 0, 1, 1], [], []>} : vector<32x48xf32>, vector<48x144xf32>, vector<32x144xf32> -> vector<32x144xf32>
    %111 = vector.extract_strided_slice %110 {offsets = [0, 0], sizes = [32, 128], strides = [1, 1]} : vector<32x144xf32> to vector<32x128xf32>
    %c6_90 = arith.constant 6 : index
    %c0_91 = arith.constant 0 : index
    %c0_92 = arith.constant 0 : index
    %112 = vector.load %arg12[%c6_90, %c0_91, %c0_92] : memref<9x128x128xf32, #tpu.memory_space<vmem>>, vector<1x128x128xf32>
    %113 = vector.shape_cast %112 : vector<1x128x128xf32> to vector<128x128xf32>
    %cst_93 = arith.constant dense<0.000000e+00> : vector<32x128xf32>
    %114 = tpu.matmul %111, %113, %cst_93 {dimension_numbers = #tpu.dot_dimension_numbers<[1], [0], [0], [1], [0, 0, 1, 1], [], []>} : vector<32x128xf32>, vector<128x128xf32>, vector<32x128xf32> -> vector<32x128xf32>
    %115 = arith.addf %107, %114 : vector<32x128xf32>
    %116 = vector.extract_strided_slice %110 {offsets = [0, 8], sizes = [32, 128], strides = [1, 1]} : vector<32x144xf32> to vector<32x128xf32>
    %c7_94 = arith.constant 7 : index
    %c0_95 = arith.constant 0 : index
    %c0_96 = arith.constant 0 : index
    %117 = vector.load %arg12[%c7_94, %c0_95, %c0_96] : memref<9x128x128xf32, #tpu.memory_space<vmem>>, vector<1x128x128xf32>
    %118 = vector.shape_cast %117 : vector<1x128x128xf32> to vector<128x128xf32>
    %cst_97 = arith.constant dense<0.000000e+00> : vector<32x128xf32>
    %119 = tpu.matmul %116, %118, %cst_97 {dimension_numbers = #tpu.dot_dimension_numbers<[1], [0], [0], [1], [0, 0, 1, 1], [], []>} : vector<32x128xf32>, vector<128x128xf32>, vector<32x128xf32> -> vector<32x128xf32>
    %120 = arith.addf %115, %119 : vector<32x128xf32>
    %121 = vector.extract_strided_slice %110 {offsets = [0, 16], sizes = [32, 128], strides = [1, 1]} : vector<32x144xf32> to vector<32x128xf32>
    %c8_98 = arith.constant 8 : index
    %c0_99 = arith.constant 0 : index
    %c0_100 = arith.constant 0 : index
    %122 = vector.load %arg12[%c8_98, %c0_99, %c0_100] : memref<9x128x128xf32, #tpu.memory_space<vmem>>, vector<1x128x128xf32>
    %123 = vector.shape_cast %122 : vector<1x128x128xf32> to vector<128x128xf32>
    %cst_101 = arith.constant dense<0.000000e+00> : vector<32x128xf32>
    %124 = tpu.matmul %121, %123, %cst_101 {dimension_numbers = #tpu.dot_dimension_numbers<[1], [0], [0], [1], [0, 0, 1, 1], [], []>} : vector<32x128xf32>, vector<128x128xf32>, vector<32x128xf32> -> vector<32x128xf32>
    %125 = arith.addf %120, %124 : vector<32x128xf32>
    %c0_102 = arith.constant 0 : index
    %c0_103 = arith.constant 0 : index
    %126 = vector.load %arg13[%c0_102, %c0_103] : memref<1x128xf32, #tpu.memory_space<vmem>>, vector<1x128xf32>
    %127 = vector.broadcast %126 : vector<1x128xf32> to vector<32x128xf32>
    %128 = arith.addf %125, %127 : vector<32x128xf32>
    %cst_104 = arith.constant 0.000000e+00 : f32
    %129 = vector.broadcast %cst_104 : f32 to vector<32x128xf32>
    %130 = arith.maximumf %128, %129 : vector<32x128xf32>
    %c0_105 = arith.constant 0 : index
    %c0_106 = arith.constant 0 : index
    %131 = vector.load %arg7[%c0_105, %c0_106] : memref<24x32xf32, #tpu.memory_space<vmem>>, vector<24x32xf32>
    %cst_107 = arith.constant dense<0.000000e+00> : vector<24x128xf32>
    %132 = tpu.matmul %131, %130, %cst_107 {dimension_numbers = #tpu.dot_dimension_numbers<[1], [0], [0], [1], [0, 0, 1, 1], [], []>} : vector<24x32xf32>, vector<32x128xf32>, vector<24x128xf32> -> vector<24x128xf32>
    %c0_108 = arith.constant 0 : index
    %c0_109 = arith.constant 0 : index
    %133 = vector.load %arg8[%c0_108, %c0_109] : memref<24x32xf32, #tpu.memory_space<vmem>>, vector<24x32xf32>
    %cst_110 = arith.constant dense<0.000000e+00> : vector<24x128xf32>
    %134 = tpu.matmul %133, %130, %cst_110 {dimension_numbers = #tpu.dot_dimension_numbers<[1], [0], [0], [1], [0, 0, 1, 1], [], []>} : vector<24x32xf32>, vector<32x128xf32>, vector<24x128xf32> -> vector<24x128xf32>
    %135 = arith.maximumf %132, %134 : vector<24x128xf32>
    %136 = vector.extract_strided_slice %135 {offsets = [0, 0], sizes = [24, 120], strides = [1, 1]} : vector<24x128xf32> to vector<24x120xf32>
    %137 = vector.extract_strided_slice %135 {offsets = [0, 8], sizes = [24, 120], strides = [1, 1]} : vector<24x128xf32> to vector<24x120xf32>
    %138 = arith.maximumf %136, %137 : vector<24x120xf32>
    %cst_111 = arith.constant 0.000000e+00 : f32
    %139 = vector.broadcast %cst_111 : f32 to vector<8x32xf32>
    %c0_112 = arith.constant 0 : index
    %c0_113 = arith.constant 0 : index
    %c0_114 = arith.constant 0 : index
    %140 = vector.load %arg9[%c0_112, %c0_113, %c0_114] : memref<3x8x24xf32, #tpu.memory_space<vmem>>, vector<1x8x24xf32>
    %141 = vector.shape_cast %140 : vector<1x8x24xf32> to vector<8x24xf32>
    %cst_115 = arith.constant dense<0.000000e+00> : vector<8x120xf32>
    %142 = tpu.matmul %141, %138, %cst_115 {dimension_numbers = #tpu.dot_dimension_numbers<[1], [0], [0], [1], [0, 0, 1, 1], [], []>} : vector<8x24xf32>, vector<24x120xf32>, vector<8x120xf32> -> vector<8x120xf32>
    %c0_116 = arith.constant 0 : index
    %c0_117 = arith.constant 0 : index
    %c0_118 = arith.constant 0 : index
    %143 = vector.load %arg14[%c0_116, %c0_117, %c0_118] : memref<3x120x32xf32, #tpu.memory_space<vmem>>, vector<1x120x32xf32>
    %144 = vector.shape_cast %143 : vector<1x120x32xf32> to vector<120x32xf32>
    %cst_119 = arith.constant dense<0.000000e+00> : vector<8x32xf32>
    %145 = tpu.matmul %142, %144, %cst_119 {dimension_numbers = #tpu.dot_dimension_numbers<[1], [0], [0], [1], [0, 0, 1, 1], [], []>} : vector<8x120xf32>, vector<120x32xf32>, vector<8x32xf32> -> vector<8x32xf32>
    %146 = arith.addf %139, %145 : vector<8x32xf32>
    %c1_120 = arith.constant 1 : index
    %c0_121 = arith.constant 0 : index
    %c0_122 = arith.constant 0 : index
    %147 = vector.load %arg9[%c1_120, %c0_121, %c0_122] : memref<3x8x24xf32, #tpu.memory_space<vmem>>, vector<1x8x24xf32>
    %148 = vector.shape_cast %147 : vector<1x8x24xf32> to vector<8x24xf32>
    %cst_123 = arith.constant dense<0.000000e+00> : vector<8x120xf32>
    %149 = tpu.matmul %148, %138, %cst_123 {dimension_numbers = #tpu.dot_dimension_numbers<[1], [0], [0], [1], [0, 0, 1, 1], [], []>} : vector<8x24xf32>, vector<24x120xf32>, vector<8x120xf32> -> vector<8x120xf32>
    %c1_124 = arith.constant 1 : index
    %c0_125 = arith.constant 0 : index
    %c0_126 = arith.constant 0 : index
    %150 = vector.load %arg14[%c1_124, %c0_125, %c0_126] : memref<3x120x32xf32, #tpu.memory_space<vmem>>, vector<1x120x32xf32>
    %151 = vector.shape_cast %150 : vector<1x120x32xf32> to vector<120x32xf32>
    %cst_127 = arith.constant dense<0.000000e+00> : vector<8x32xf32>
    %152 = tpu.matmul %149, %151, %cst_127 {dimension_numbers = #tpu.dot_dimension_numbers<[1], [0], [0], [1], [0, 0, 1, 1], [], []>} : vector<8x120xf32>, vector<120x32xf32>, vector<8x32xf32> -> vector<8x32xf32>
    %153 = arith.addf %146, %152 : vector<8x32xf32>
    %c2_128 = arith.constant 2 : index
    %c0_129 = arith.constant 0 : index
    %c0_130 = arith.constant 0 : index
    %154 = vector.load %arg9[%c2_128, %c0_129, %c0_130] : memref<3x8x24xf32, #tpu.memory_space<vmem>>, vector<1x8x24xf32>
    %155 = vector.shape_cast %154 : vector<1x8x24xf32> to vector<8x24xf32>
    %cst_131 = arith.constant dense<0.000000e+00> : vector<8x120xf32>
    %156 = tpu.matmul %155, %138, %cst_131 {dimension_numbers = #tpu.dot_dimension_numbers<[1], [0], [0], [1], [0, 0, 1, 1], [], []>} : vector<8x24xf32>, vector<24x120xf32>, vector<8x120xf32> -> vector<8x120xf32>
    %c2_132 = arith.constant 2 : index
    %c0_133 = arith.constant 0 : index
    %c0_134 = arith.constant 0 : index
    %157 = vector.load %arg14[%c2_132, %c0_133, %c0_134] : memref<3x120x32xf32, #tpu.memory_space<vmem>>, vector<1x120x32xf32>
    %158 = vector.shape_cast %157 : vector<1x120x32xf32> to vector<120x32xf32>
    %cst_135 = arith.constant dense<0.000000e+00> : vector<8x32xf32>
    %159 = tpu.matmul %156, %158, %cst_135 {dimension_numbers = #tpu.dot_dimension_numbers<[1], [0], [0], [1], [0, 0, 1, 1], [], []>} : vector<8x120xf32>, vector<120x32xf32>, vector<8x32xf32> -> vector<8x32xf32>
    %160 = arith.addf %153, %159 : vector<8x32xf32>
    %c0_136 = arith.constant 0 : index
    %c0_137 = arith.constant 0 : index
    %161 = vector.load %arg15[%c0_136, %c0_137] : memref<1x32xf32, #tpu.memory_space<vmem>>, vector<1x32xf32>
    %162 = vector.broadcast %161 : vector<1x32xf32> to vector<8x32xf32>
    %163 = arith.addf %160, %162 : vector<8x32xf32>
    %cst_138 = arith.constant 0.000000e+00 : f32
    %164 = vector.broadcast %cst_138 : f32 to vector<8x32xf32>
    %165 = arith.maximumf %163, %164 : vector<8x32xf32>
    %c0_139 = arith.constant 0 : index
    %c0_140 = arith.constant 0 : index
    %166 = vector.load %arg16[%c0_139, %c0_140] : memref<32x16xf32, #tpu.memory_space<vmem>>, vector<32x16xf32>
    %cst_141 = arith.constant dense<0.000000e+00> : vector<8x16xf32>
    %167 = tpu.matmul %165, %166, %cst_141 {dimension_numbers = #tpu.dot_dimension_numbers<[1], [0], [0], [1], [0, 0, 1, 1], [], []>} : vector<8x32xf32>, vector<32x16xf32>, vector<8x16xf32> -> vector<8x16xf32>
    %c0_142 = arith.constant 0 : index
    %c0_143 = arith.constant 0 : index
    %168 = vector.load %arg17[%c0_142, %c0_143] : memref<1x16xf32, #tpu.memory_space<vmem>>, vector<1x16xf32>
    %169 = vector.broadcast %168 : vector<1x16xf32> to vector<8x16xf32>
    %170 = arith.addf %167, %169 : vector<8x16xf32>
    %cst_144 = arith.constant 0.000000e+00 : f32
    %171 = vector.broadcast %cst_144 : f32 to vector<8x16xf32>
    %172 = arith.maximumf %170, %171 : vector<8x16xf32>
    %c0_145 = arith.constant 0 : index
    %c0_146 = arith.constant 0 : index
    %173 = vector.load %arg18[%c0_145, %c0_146] : memref<16x4xf32, #tpu.memory_space<vmem>>, vector<16x4xf32>
    %cst_147 = arith.constant dense<0.000000e+00> : vector<8x4xf32>
    %174 = tpu.matmul %172, %173, %cst_147 {dimension_numbers = #tpu.dot_dimension_numbers<[1], [0], [0], [1], [0, 0, 1, 1], [], []>} : vector<8x16xf32>, vector<16x4xf32>, vector<8x4xf32> -> vector<8x4xf32>
    %c0_148 = arith.constant 0 : index
    %c0_149 = arith.constant 0 : index
    %175 = vector.load %arg19[%c0_148, %c0_149] : memref<1x4xf32, #tpu.memory_space<vmem>>, vector<1x4xf32>
    %176 = vector.broadcast %175 : vector<1x4xf32> to vector<8x4xf32>
    %177 = arith.addf %174, %176 : vector<8x4xf32>
    %c0_150 = arith.constant 0 : index
    %c0_151 = arith.constant 0 : index
    %178 = vector.load %arg20[%c0_150, %c0_151] : memref<8x4xf32, #tpu.memory_space<vmem>>, vector<8x4xf32>
    tpu.vector_store %arg20[%c0_150, %c0_151], %177 {strides = array<i32>} : memref<8x4xf32, #tpu.memory_space<vmem>>, vector<8x4xf32>,
    return
  }
  func.func @transform_0(%arg0: i32) -> (i32, i32) {
    %c0_i32 = arith.constant 0 : i32
    %c0_i32_0 = arith.constant 0 : i32
    return %arg0, %c0_i32 : i32, i32
  }
  func.func @transform_1(%arg0: i32) -> (i32, i32, i32) {
    %c0_i32 = arith.constant 0 : i32
    %c0_i32_0 = arith.constant 0 : i32
    %c0_i32_1 = arith.constant 0 : i32
    %c0_i32_2 = arith.constant 0 : i32
    return %c0_i32, %c0_i32_0, %c0_i32_1 : i32, i32, i32
  }
  func.func @transform_2(%arg0: i32) -> (i32, i32) {
    %c0_i32 = arith.constant 0 : i32
    %c0_i32_0 = arith.constant 0 : i32
    %c0_i32_1 = arith.constant 0 : i32
    return %c0_i32, %c0_i32_0 : i32, i32
  }
  func.func @transform_3(%arg0: i32) -> (i32, i32) {
    %c0_i32 = arith.constant 0 : i32
    %c0_i32_0 = arith.constant 0 : i32
    %c0_i32_1 = arith.constant 0 : i32
    return %c0_i32, %c0_i32_0 : i32, i32
  }
  func.func @transform_4(%arg0: i32) -> (i32, i32) {
    %c0_i32 = arith.constant 0 : i32
    %c0_i32_0 = arith.constant 0 : i32
    %c0_i32_1 = arith.constant 0 : i32
    return %c0_i32, %c0_i32_0 : i32, i32
  }
  func.func @transform_5(%arg0: i32) -> (i32, i32, i32) {
    %c0_i32 = arith.constant 0 : i32
    %c0_i32_0 = arith.constant 0 : i32
    %c0_i32_1 = arith.constant 0 : i32
    %c0_i32_2 = arith.constant 0 : i32
    return %c0_i32, %c0_i32_0, %c0_i32_1 : i32, i32, i32
  }
  func.func @transform_6(%arg0: i32) -> (i32, i32) {
    %c0_i32 = arith.constant 0 : i32
    %c0_i32_0 = arith.constant 0 : i32
    %c0_i32_1 = arith.constant 0 : i32
    return %c0_i32, %c0_i32_0 : i32, i32
  }
  func.func @transform_7(%arg0: i32) -> (i32, i32) {
    %c0_i32 = arith.constant 0 : i32
    %c0_i32_0 = arith.constant 0 : i32
    %c0_i32_1 = arith.constant 0 : i32
    return %c0_i32, %c0_i32_0 : i32, i32
  }
  func.func @transform_8(%arg0: i32) -> (i32, i32, i32) {
    %c0_i32 = arith.constant 0 : i32
    %c0_i32_0 = arith.constant 0 : i32
    %c0_i32_1 = arith.constant 0 : i32
    %c0_i32_2 = arith.constant 0 : i32
    return %c0_i32, %c0_i32_0, %c0_i32_1 : i32, i32, i32
  }
  func.func @transform_9(%arg0: i32) -> (i32, i32, i32) {
    %c0_i32 = arith.constant 0 : i32
    %c0_i32_0 = arith.constant 0 : i32
    %c0_i32_1 = arith.constant 0 : i32
    %c0_i32_2 = arith.constant 0 : i32
    return %c0_i32, %c0_i32_0, %c0_i32_1 : i32, i32, i32
  }
  func.func @transform_10(%arg0: i32) -> (i32, i32) {
    %c0_i32 = arith.constant 0 : i32
    %c0_i32_0 = arith.constant 0 : i32
    %c0_i32_1 = arith.constant 0 : i32
    return %c0_i32, %c0_i32_0 : i32, i32
  }
  func.func @transform_11(%arg0: i32) -> (i32, i32, i32) {
    %c0_i32 = arith.constant 0 : i32
    %c0_i32_0 = arith.constant 0 : i32
    %c0_i32_1 = arith.constant 0 : i32
    %c0_i32_2 = arith.constant 0 : i32
    return %c0_i32, %c0_i32_0, %c0_i32_1 : i32, i32, i32
  }
  func.func @transform_12(%arg0: i32) -> (i32, i32) {
    %c0_i32 = arith.constant 0 : i32
    %c0_i32_0 = arith.constant 0 : i32
    %c0_i32_1 = arith.constant 0 : i32
    return %c0_i32, %c0_i32_0 : i32, i32
  }
  func.func @transform_13(%arg0: i32) -> (i32, i32, i32) {
    %c0_i32 = arith.constant 0 : i32
    %c0_i32_0 = arith.constant 0 : i32
    %c0_i32_1 = arith.constant 0 : i32
    %c0_i32_2 = arith.constant 0 : i32
    return %c0_i32, %c0_i32_0, %c0_i32_1 : i32, i32, i32
  }
  func.func @transform_14(%arg0: i32) -> (i32, i32) {
    %c0_i32 = arith.constant 0 : i32
    %c0_i32_0 = arith.constant 0 : i32
    %c0_i32_1 = arith.constant 0 : i32
    return %c0_i32, %c0_i32_0 : i32, i32
  }
  func.func @transform_15(%arg0: i32) -> (i32, i32) {
    %c0_i32 = arith.constant 0 : i32
    %c0_i32_0 = arith.constant 0 : i32
    %c0_i32_1 = arith.constant 0 : i32
    return %c0_i32, %c0_i32_0 : i32, i32
  }
  func.func @transform_16(%arg0: i32) -> (i32, i32) {
    %c0_i32 = arith.constant 0 : i32
    %c0_i32_0 = arith.constant 0 : i32
    %c0_i32_1 = arith.constant 0 : i32
    return %c0_i32, %c0_i32_0 : i32, i32
  }
  func.func @transform_17(%arg0: i32) -> (i32, i32) {
    %c0_i32 = arith.constant 0 : i32
    %c0_i32_0 = arith.constant 0 : i32
    %c0_i32_1 = arith.constant 0 : i32
    return %c0_i32, %c0_i32_0 : i32, i32
  }
  func.func @transform_18(%arg0: i32) -> (i32, i32) {
    %c0_i32 = arith.constant 0 : i32
    %c0_i32_0 = arith.constant 0 : i32
    %c0_i32_1 = arith.constant 0 : i32
    return %c0_i32, %c0_i32_0 : i32, i32
  }
  func.func @transform_19(%arg0: i32) -> (i32, i32) {
    %c0_i32 = arith.constant 0 : i32
    %c0_i32_0 = arith.constant 0 : i32
    return %arg0, %c0_i32 : i32, i32
  }
}

</mosaic_0001>

<llo_original>
// kernel: tracking_model_forward.1
$region0: #{tracking_model_forward.1}
  #allocation0 [shape = 'u32[]', space=smem, size = 0x4, offset = 0x4, fixed_abs, tag = 'smem constant byte address 0x4 - core index']
  #allocation1 [shape = 'u32[144,128]{1,0:T(1,128)}', space=vmem, size = 0x12000, scoped, tag = 'internal scratch']
  %s0 = inlined_call_operand.vmem [shape: f32[80,136], index: 0, kind: input, shape index: {}]
  %s1 = inlined_call_operand.vmem [shape: f32[3,64,80], index: 1, kind: input, shape index: {}]
  %s2 = inlined_call_operand.vmem [shape: f32[48,64], index: 2, kind: input, shape index: {}]
  %s3 = inlined_call_operand.vmem [shape: f32[48,64], index: 3, kind: input, shape index: {}]
  %s4 = inlined_call_operand.vmem [shape: f32[248,144], index: 4, kind: input, shape index: {}]
  %s5 = inlined_call_operand.vmem [shape: f32[3,32,48], index: 5, kind: input, shape index: {}]
  %s6 = inlined_call_operand.vmem [shape: f32[24,32], index: 6, kind: input, shape index: {}]
  %s7 = inlined_call_operand.vmem [shape: f32[24,32], index: 7, kind: input, shape index: {}]
  %s8 = inlined_call_operand.vmem [shape: f32[3,8,24], index: 8, kind: input, shape index: {}]
  %s9 = inlined_call_operand.vmem [shape: f32[9,128,256], index: 9, kind: input, shape index: {}]
  %s10 = inlined_call_operand.vmem [shape: f32[1,256], index: 10, kind: input, shape index: {}]
  %s11 = inlined_call_operand.vmem [shape: f32[9,128,128], index: 11, kind: input, shape index: {}]
  %s12 = inlined_call_operand.vmem [shape: f32[1,128], index: 12, kind: input, shape index: {}]
  %s13 = inlined_call_operand.vmem [shape: f32[3,120,32], index: 13, kind: input, shape index: {}]
  %s14 = inlined_call_operand.vmem [shape: f32[1,32], index: 14, kind: input, shape index: {}]
  %s15 = inlined_call_operand.vmem [shape: f32[32,16], index: 15, kind: input, shape index: {}]
  %s16 = inlined_call_operand.vmem [shape: f32[1,16], index: 16, kind: input, shape index: {}]
  %s17 = inlined_call_operand.vmem [shape: f32[16,4], index: 17, kind: input, shape index: {}]
  %s18 = inlined_call_operand.vmem [shape: f32[1,4], index: 18, kind: input, shape index: {}]
  %s19 = inlined_call_operand.vmem [shape: f32[8,4], index: 19, kind: output, shape index: {}]
  %s20 = sld [smem:[#allocation0]]
  $region86: #{tracking_model_forward.1} parent=0
    _
  %s22 = ssub.s32 1, %s20
  %s23 = scalar_select 0, %s22, %s20
  // Predicated region
  $region2: #{tracking_model_forward.1} parent=0 // pred_check
    _
  $region3: #{tracking_model_forward.1} parent=0 // pred_check_branch
    %25 = sbr.rel (0) target = $region5
  $region4: #{tracking_model_forward.1} parent=0 // pred_region
    _
  $region5: #{tracking_model_forward.1} parent=0 // pred_fallthru
    _
  // Predicated region
  $region6: #{tracking_model_forward.1} parent=0 // pred_check
    _
  $region7: #{tracking_model_forward.1} parent=0 // pred_check_branch
    %27 = sbr.rel (0) target = $region9
  $region8: #{tracking_model_forward.1} parent=0 // pred_region
    _
  $region9: #{tracking_model_forward.1} parent=0 // pred_fallthru
    _
  // Predicated region
  $region10: #{tracking_model_forward.1} parent=0 // pred_check
    _
  $region11: #{tracking_model_forward.1} parent=0 // pred_check_branch
    %29 = sbr.rel (0) target = $region13
  $region12: #{tracking_model_forward.1} parent=0 // pred_region
    _
  $region13: #{tracking_model_forward.1} parent=0 // pred_fallthru
    _
  // Predicated region
  $region14: #{tracking_model_forward.1} parent=0 // pred_check
    _
  $region15: #{tracking_model_forward.1} parent=0 // pred_check_branch
    %31 = sbr.rel (0) target = $region17
  $region16: #{tracking_model_forward.1} parent=0 // pred_region
    _
  $region17: #{tracking_model_forward.1} parent=0 // pred_fallthru
    _
  // Predicated region
  $region18: #{tracking_model_forward.1} parent=0 // pred_check
    _
  $region19: #{tracking_model_forward.1} parent=0 // pred_check_branch
    %33 = sbr.rel (0) target = $region21
  $region20: #{tracking_model_forward.1} parent=0 // pred_region
    _
  $region21: #{tracking_model_forward.1} parent=0 // pred_fallthru
    _
  // Predicated region
  $region22: #{tracking_model_forward.1} parent=0 // pred_check
    _
  $region23: #{tracking_model_forward.1} parent=0 // pred_check_branch
    %35 = sbr.rel (0) target = $region25
  $region24: #{tracking_model_forward.1} parent=0 // pred_region
    _
  $region25: #{tracking_model_forward.1} parent=0 // pred_fallthru
    _
  // Predicated region
  $region26: #{tracking_model_forward.1} parent=0 // pred_check
    _
  $region27: #{tracking_model_forward.1} parent=0 // pred_check_branch
    %37 = sbr.rel (0) target = $region29
  $region28: #{tracking_model_forward.1} parent=0 // pred_region
    _
  $region29: #{tracking_model_forward.1} parent=0 // pred_fallthru
    _
  // Predicated region
  $region30: #{tracking_model_forward.1} parent=0 // pred_check
    _
  $region31: #{tracking_model_forward.1} parent=0 // pred_check_branch
    %39 = sbr.rel (0) target = $region33
  $region32: #{tracking_model_forward.1} parent=0 // pred_region
    _
  $region33: #{tracking_model_forward.1} parent=0 // pred_fallthru
    _
  // Predicated region
  $region34: #{tracking_model_forward.1} parent=0 // pred_check
    _
  $region35: #{tracking_model_forward.1} parent=0 // pred_check_branch
    %41 = sbr.rel (0) target = $region37
  $region36: #{tracking_model_forward.1} parent=0 // pred_region
    _
  $region37: #{tracking_model_forward.1} parent=0 // pred_fallthru
    _
  // Predicated region
  $region38: #{tracking_model_forward.1} parent=0 // pred_check
    _
  $region39: #{tracking_model_forward.1} parent=0 // pred_check_branch
    %43 = sbr.rel (0) target = $region41
  $region40: #{tracking_model_forward.1} parent=0 // pred_region
    _
  $region41: #{tracking_model_forward.1} parent=0 // pred_fallthru
    _
  // Predicated region
  $region42: #{tracking_model_forward.1} parent=0 // pred_check
    _
  $region43: #{tracking_model_forward.1} parent=0 // pred_check_branch
    %45 = sbr.rel (0) target = $region45
  $region44: #{tracking_model_forward.1} parent=0 // pred_region
    _
  $region45: #{tracking_model_forward.1} parent=0 // pred_fallthru
    _
  // Predicated region
  $region46: #{tracking_model_forward.1} parent=0 // pred_check
    _
  $region47: #{tracking_model_forward.1} parent=0 // pred_check_branch
    %47 = sbr.rel (0) target = $region49
  $region48: #{tracking_model_forward.1} parent=0 // pred_region
    _
  $region49: #{tracking_model_forward.1} parent=0 // pred_fallthru
    _
  // Predicated region
  $region50: #{tracking_model_forward.1} parent=0 // pred_check
    _
  $region51: #{tracking_model_forward.1} parent=0 // pred_check_branch
    %49 = sbr.rel (0) target = $region53
  $region52: #{tracking_model_forward.1} parent=0 // pred_region
    _
  $region53: #{tracking_model_forward.1} parent=0 // pred_fallthru
    _
  // Predicated region
  $region54: #{tracking_model_forward.1} parent=0 // pred_check
    _
  $region55: #{tracking_model_forward.1} parent=0 // pred_check_branch
    %51 = sbr.rel (0) target = $region57
  $region56: #{tracking_model_forward.1} parent=0 // pred_region
    _
  $region57: #{tracking_model_forward.1} parent=0 // pred_fallthru
    _
  // Predicated region
  $region58: #{tracking_model_forward.1} parent=0 // pred_check
    _
  $region59: #{tracking_model_forward.1} parent=0 // pred_check_branch
    %53 = sbr.rel (0) target = $region61
  $region60: #{tracking_model_forward.1} parent=0 // pred_region
    _
  $region61: #{tracking_model_forward.1} parent=0 // pred_fallthru
    _
  // Predicated region
  $region62: #{tracking_model_forward.1} parent=0 // pred_check
    _
  $region63: #{tracking_model_forward.1} parent=0 // pred_check_branch
    %55 = sbr.rel (0) target = $region65
  $region64: #{tracking_model_forward.1} parent=0 // pred_region
    _
  $region65: #{tracking_model_forward.1} parent=0 // pred_fallthru
    _
  // Predicated region
  $region66: #{tracking_model_forward.1} parent=0 // pred_check
    _
  $region67: #{tracking_model_forward.1} parent=0 // pred_check_branch
    %57 = sbr.rel (0) target = $region69
  $region68: #{tracking_model_forward.1} parent=0 // pred_region
    _
  $region69: #{tracking_model_forward.1} parent=0 // pred_fallthru
    _
  // Predicated region
  $region70: #{tracking_model_forward.1} parent=0 // pred_check
    _
  $region71: #{tracking_model_forward.1} parent=0 // pred_check_branch
    %59 = sbr.rel (0) target = $region73
  $region72: #{tracking_model_forward.1} parent=0 // pred_region
    _
  $region73: #{tracking_model_forward.1} parent=0 // pred_fallthru
    _
  // Predicated region
  $region74: #{tracking_model_forward.1} parent=0 // pred_check
    _
  $region75: #{tracking_model_forward.1} parent=0 // pred_check_branch
    %61 = sbr.rel (0) target = $region77
  $region76: #{tracking_model_forward.1} parent=0 // pred_region
    _
  $region77: #{tracking_model_forward.1} parent=0 // pred_fallthru
    _
  %v62 = vld [vmem:[%s0] sm:$0xff]
  %v63 = vld [vmem:[%s0 + $0x8] sm:$0xff]
  %v64 = vld [vmem:[%s0 + $0x10] sm:$0xff]
  %v65 = vld [vmem:[%s0 + $0x18] sm:$0xff]
  %v66 = vld [vmem:[%s0 + $0x20] sm:$0xff]
  %v67 = vld [vmem:[%s0 + $0x28] sm:$0xff]
  %v68 = vld [vmem:[%s0 + $0x30] sm:$0xff]
  %v69 = vld [vmem:[%s0 + $0x38] sm:$0xff]
  %v70 = vld [vmem:[%s0 + $0x40] sm:$0xff]
  %v71 = vld [vmem:[%s0 + $0x48] sm:$0xff]
  %v72 = vld [vmem:[%s0 + $0x50] sm:$0xff]
  %v73 = vld [vmem:[%s0 + $0x58] sm:$0xff]
  %v74 = vld [vmem:[%s0 + $0x60] sm:$0xff]
  %v75 = vld [vmem:[%s0 + $0x68] sm:$0xff]
  %v76 = vld [vmem:[%s0 + $0x70] sm:$0xff]
  %v77 = vld [vmem:[%s0 + $0x78] sm:$0xff]
  %v78 = vld [vmem:[%s0 + $0x80] sm:$0xff]
  %v79 = vld [vmem:[%s0 + $0x88] sm:$0xff]
  %v80 = vld [vmem:[%s0 + $0x90] sm:$0xff]
  %v81 = vld [vmem:[%s0 + $0x98] sm:$0xff]
  %v82 = vld [vmem:[%s1] sm:$0xff]
  %v83 = vld [vmem:[%s1 + $0x8] sm:$0xff]
  %v84 = vld [vmem:[%s1 + $0x10] sm:$0xff]
  %v85 = vld [vmem:[%s1 + $0x18] sm:$0xff]
  %v86 = vld [vmem:[%s1 + $0x20] sm:$0xff]
  %v87 = vld [vmem:[%s1 + $0x28] sm:$0xff]
  %v88 = vld [vmem:[%s1 + $0x30] sm:$0xff]
  %v89 = vld [vmem:[%s1 + $0x38] sm:$0xff]
  %vm90 = vcmask 654336
  %v92 = vsel %vm90, %v82, 0
  %v95 = vsel %vm90, %v83, 0
  %v98 = vsel %vm90, %v84, 0
  %v101 = vsel %vm90, %v85, 0
  %v104 = vsel %vm90, %v86, 0
  %v107 = vsel %vm90, %v87, 0
  %v110 = vsel %vm90, %v88, 0
  %v113 = vsel %vm90, %v89, 0
  %115 = vmatprep.subr.mxu0 %v63
  %116 = vmatpush1.msra.mxu0 %v62
  %117 = vmatprep.subr.mxu0 %v65
  %118 = vmatpush1.msra.mxu0 %v64
  %119 = vmatprep.subr.mxu0 %v67
  %120 = vmatpush1.msra.mxu0 %v66
  %121 = vmatprep.subr.mxu0 %v69
  %122 = vmatpush1.msra.mxu0 %v68
  %123 = vmatprep.subr.mxu0 %v71
  %124 = vmatpush1.msra.mxu0 %v70
  %125 = vmatprep.subr.mxu0 %v73
  %126 = vmatpush1.msra.mxu0 %v72
  %127 = vmatprep.subr.mxu0 %v75
  %128 = vmatpush1.msra.mxu0 %v74
  %129 = vmatprep.subr.mxu0 %v77
  %130 = vmatpush1.msra.mxu0 %v76
  %131 = vmatprep.subr.mxu0 %v79
  %132 = vmatpush1.msra.mxu0 %v78
  %133 = vmatprep.subr.mxu0 %v81
  %134 = vmatpush1.msra.mxu0 %v80
  %135 = vmatprep.subr.mxu0 0.0
  %136 = vmatpush1.msra.mxu0 0.0
  %137 = vmatprep.subr.mxu0 0.0
  %138 = vmatpush1.msra.mxu0 0.0
  %139 = vmatprep.subr.mxu0 0.0
  %140 = vmatpush1.msra.mxu0 0.0
  %141 = vmatprep.subr.mxu0 0.0
  %142 = vmatpush1.msra.mxu0 0.0
  %143 = vmatprep.subr.mxu0 0.0
  %144 = vmatpush1.msra.mxu0 0.0
  %145 = vmatprep.subr.mxu0 0.0
  %146 = vmatpush1.msra.mxu0 0.0
  %147 = vmatprep.subr.mxu0 0.0
  %148 = vmatpush1.msra.mxu0 0.0
  %149 = vmatprep.subr.mxu0 0.0
  %150 = vmatpush1.msra.mxu0 0.0
  %151 = vmatprep.subr.mxu0 0.0
  %152 = vmatpush1.msra.mxu0 0.0
  %153 = vmatprep.subr.mxu0 0.0
  %154 = vmatpush1.msra.mxu0 0.0
  %155 = vmatprep.subr.mxu0 0.0
  %156 = vmatpush1.msra.mxu0 0.0
  %157 = vmatprep.subr.mxu0 0.0
  %158 = vmatpush1.msra.mxu0 0.0
  %159 = vmatprep.subr.mxu0 0.0
  %160 = vmatpush1.msra.mxu0 0.0
  %161 = vmatprep.subr.mxu0 0.0
  %162 = vmatpush1.msra.mxu0 0.0
  %163 = vmatprep.subr.mxu0 0.0
  %164 = vmatpush1.msra.mxu0 0.0
  %165 = vmatprep.subr.mxu0 0.0
  %166 = vmatpush1.msra.mxu0 0.0
  %167 = vmatprep.subr.mxu0 0.0
  %168 = vmatpush1.msra.mxu0 0.0
  %169 = vmatprep.subr.mxu0 0.0
  %170 = vmatpush1.msra.mxu0 0.0
  %171 = vmatprep.subr.mxu0 0.0
  %172 = vmatpush1.msra.mxu0 0.0
  %173 = vmatprep.subr.mxu0 0.0
  %174 = vmatpush1.msra.mxu0 0.0
  %175 = vmatprep.subr.mxu0 0.0
  %176 = vmatpush1.msra.mxu0 0.0
  %177 = vmatprep.subr.mxu0 0.0
  %178 = vmatpush1.msra.mxu0 0.0
  %179 = vmatprep.mubr.f32.mxu0 0.0
  %180 = vmatmul.mubr.f32.gmra.mrb[0].mxu0 %v92
  %v181 = vpop.f32.mrb[0].mxu0
  %v182 = vadd.f32 0.0, %v181
  %v183 = vpop.f32.mrb[0].mxu0
  %v184 = vadd.f32 0.0, %v183
  %185 = vmatprep.mubr.f32.mxu0 0.0
  %186 = vmatmul.mubr.f32.gmra.mrb[0].mxu0 %v95
  %v187 = vpop.f32.mrb[0].mxu0
  %v188 = vadd.f32 0.0, %v187
  %v189 = vpop.f32.mrb[0].mxu0
  %v190 = vadd.f32 0.0, %v189
  %191 = vmatprep.mubr.f32.mxu0 0.0
  %192 = vmatmul.mubr.f32.gmra.mrb[0].mxu0 %v98
  %v193 = vpop.f32.mrb[0].mxu0
  %v194 = vadd.f32 0.0, %v193
  %v195 = vpop.f32.mrb[0].mxu0
  %v196 = vadd.f32 0.0, %v195
  %197 = vmatprep.mubr.f32.mxu0 0.0
  %198 = vmatmul.mubr.f32.gmra.mrb[0].mxu0 %v101
  %v199 = vpop.f32.mrb[0].mxu0
  %v200 = vadd.f32 0.0, %v199
  %v201 = vpop.f32.mrb[0].mxu0
  %v202 = vadd.f32 0.0, %v201
  %203 = vmatprep.mubr.f32.mxu0 0.0
  %204 = vmatmul.mubr.f32.gmra.mrb[0].mxu0 %v104
  %v205 = vpop.f32.mrb[0].mxu0
  %v206 = vadd.f32 0.0, %v205
  %v207 = vpop.f32.mrb[0].mxu0
  %v208 = vadd.f32 0.0, %v207
  %209 = vmatprep.mubr.f32.mxu0 0.0
  %210 = vmatmul.mubr.f32.gmra.mrb[0].mxu0 %v107
  %v211 = vpop.f32.mrb[0].mxu0
  %v212 = vadd.f32 0.0, %v211
  %v213 = vpop.f32.mrb[0].mxu0
  %v214 = vadd.f32 0.0, %v213
  %215 = vmatprep.mubr.f32.mxu0 0.0
  %216 = vmatmul.mubr.f32.gmra.mrb[0].mxu0 %v110
  %v217 = vpop.f32.mrb[0].mxu0
  %v218 = vadd.f32 0.0, %v217
  %v219 = vpop.f32.mrb[0].mxu0
  %v220 = vadd.f32 0.0, %v219
  %221 = vmatprep.mubr.f32.mxu0 0.0
  %222 = vmatmul.mubr.f32.gmra.mrb[0].mxu0 %v113
  %v223 = vpop.f32.mrb[0].mxu0
  %v224 = vadd.f32 0.0, %v223
  %v225 = vpop.f32.mrb[0].mxu0
  %v226 = vadd.f32 0.0, %v225
  %227 = vdwg.mxu0
  %v228 = vld [vmem:[%s9] sm:$0xff]
  %v229 = vld [vmem:[%s9 + $0x8] sm:$0xff]
  %v230 = vld [vmem:[%s9 + $0x10] sm:$0xff]
  %v231 = vld [vmem:[%s9 + $0x18] sm:$0xff]
  %v232 = vld [vmem:[%s9 + $0x20] sm:$0xff]
  %v233 = vld [vmem:[%s9 + $0x28] sm:$0xff]
  %v234 = vld [vmem:[%s9 + $0x30] sm:$0xff]
  %v235 = vld [vmem:[%s9 + $0x38] sm:$0xff]
  %v236 = vld [vmem:[%s9 + $0x40] sm:$0xff]
  %v237 = vld [vmem:[%s9 + $0x48] sm:$0xff]
  %v238 = vld [vmem:[%s9 + $0x50] sm:$0xff]
  %v239 = vld [vmem:[%s9 + $0x58] sm:$0xff]
  %v240 = vld [vmem:[%s9 + $0x60] sm:$0xff]
  %v241 = vld [vmem:[%s9 + $0x68] sm:$0xff]
  %v242 = vld [vmem:[%s9 + $0x70] sm:$0xff]
  %v243 = vld [vmem:[%s9 + $0x78] sm:$0xff]
  %v244 = vld [vmem:[%s9 + $0x80] sm:$0xff]
  %v245 = vld [vmem:[%s9 + $0x88] sm:$0xff]
  %v246 = vld [vmem:[%s9 + $0x90] sm:$0xff]
  %v247 = vld [vmem:[%s9 + $0x98] sm:$0xff]
  %v248 = vld [vmem:[%s9 + $0xa0] sm:$0xff]
  %v249 = vld [vmem:[%s9 + $0xa8] sm:$0xff]
  %v250 = vld [vmem:[%s9 + $0xb0] sm:$0xff]
  %v251 = vld [vmem:[%s9 + $0xb8] sm:$0xff]
  %v252 = vld [vmem:[%s9 + $0xc0] sm:$0xff]
  %v253 = vld [vmem:[%s9 + $0xc8] sm:$0xff]
  %v254 = vld [vmem:[%s9 + $0xd0] sm:$0xff]
  %v255 = vld [vmem:[%s9 + $0xd8] sm:$0xff]
  %v256 = vld [vmem:[%s9 + $0xe0] sm:$0xff]
  %v257 = vld [vmem:[%s9 + $0xe8] sm:$0xff]
  %v258 = vld [vmem:[%s9 + $0xf0] sm:$0xff]
  %v259 = vld [vmem:[%s9 + $0xf8] sm:$0xff]
  %s260 = scalar_lea.vmem %s9, 256
  %v261 = vld [vmem:[%s260] sm:$0xff]
  %v262 = vld [vmem:[%s260 + $0x8] sm:$0xff]
  %v263 = vld [vmem:[%s260 + $0x10] sm:$0xff]
  %v264 = vld [vmem:[%s260 + $0x18] sm:$0xff]
  %v265 = vld [vmem:[%s260 + $0x20] sm:$0xff]
  %v266 = vld [vmem:[%s260 + $0x28] sm:$0xff]
  %v267 = vld [vmem:[%s260 + $0x30] sm:$0xff]
  %v268 = vld [vmem:[%s260 + $0x38] sm:$0xff]
  %v269 = vld [vmem:[%s260 + $0x40] sm:$0xff]
  %v270 = vld [vmem:[%s260 + $0x48] sm:$0xff]
  %v271 = vld [vmem:[%s260 + $0x50] sm:$0xff]
  %v272 = vld [vmem:[%s260 + $0x58] sm:$0xff]
  %v273 = vld [vmem:[%s260 + $0x60] sm:$0xff]
  %v274 = vld [vmem:[%s260 + $0x68] sm:$0xff]
  %v275 = vld [vmem:[%s260 + $0x70] sm:$0xff]
  %v276 = vld [vmem:[%s260 + $0x78] sm:$0xff]
  %v277 = vld [vmem:[%s260 + $0x80] sm:$0xff]
  %v278 = vld [vmem:[%s260 + $0x88] sm:$0xff]
  %v279 = vld [vmem:[%s260 + $0x90] sm:$0xff]
  %v280 = vld [vmem:[%s260 + $0x98] sm:$0xff]
  %v281 = vld [vmem:[%s260 + $0xa0] sm:$0xff]
  %v282 = vld [vmem:[%s260 + $0xa8] sm:$0xff]
  %v283 = vld [vmem:[%s260 + $0xb0] sm:$0xff]
  %v284 = vld [vmem:[%s260 + $0xb8] sm:$0xff]
  %v285 = vld [vmem:[%s260 + $0xc0] sm:$0xff]
  %v286 = vld [vmem:[%s260 + $0xc8] sm:$0xff]
  %v287 = vld [vmem:[%s260 + $0xd0] sm:$0xff]
  %v288 = vld [vmem:[%s260 + $0xd8] sm:$0xff]
  %v289 = vld [vmem:[%s260 + $0xe0] sm:$0xff]
  %v290 = vld [vmem:[%s260 + $0xe8] sm:$0xff]
  %v291 = vld [vmem:[%s260 + $0xf0] sm:$0xff]
  %v292 = vld [vmem:[%s260 + $0xf8] sm:$0xff]
  %309 = vrot.lane.b32.xlu0 %v182, 124
  %v310 = vpop.permute.xlu0 %309
  %311 = vrot.lane.b32.xlu0 %v184, 124
  %v312 = vpop.permute.xlu0 %311
  %313 = vrot.lane.b32.xlu0 %v188, 124
  %v314 = vpop.permute.xlu0 %313
  %315 = vrot.lane.b32.xlu0 %v190, 124
  %v316 = vpop.permute.xlu0 %315
  %317 = vrot.lane.b32.xlu0 %v194, 124
  %v318 = vpop.permute.xlu0 %317
  %319 = vrot.lane.b32.xlu0 %v196, 124
  %v320 = vpop.permute.xlu0 %319
  %321 = vrot.lane.b32.xlu0 %v200, 124
  %v322 = vpop.permute.xlu0 %321
  %323 = vrot.lane.b32.xlu0 %v202, 124
  %v324 = vpop.permute.xlu0 %323
  %325 = vrot.lane.b32.xlu0 %v206, 124
  %v326 = vpop.permute.xlu0 %325
  %327 = vrot.lane.b32.xlu0 %v208, 124
  %v328 = vpop.permute.xlu0 %327
  %329 = vrot.lane.b32.xlu0 %v212, 124
  %v330 = vpop.permute.xlu0 %329
  %331 = vrot.lane.b32.xlu0 %v214, 124
  %v332 = vpop.permute.xlu0 %331
  %333 = vrot.lane.b32.xlu0 %v218, 124
  %v334 = vpop.permute.xlu0 %333
  %335 = vrot.lane.b32.xlu0 %v220, 124
  %v336 = vpop.permute.xlu0 %335
  %337 = vrot.lane.b32.xlu0 %v224, 124
  %v338 = vpop.permute.xlu0 %337
  %339 = vrot.lane.b32.xlu0 %v226, 124
  %v340 = vpop.permute.xlu0 %339
  %vm341 = vcmask 1014784
  %v342 = vsel %vm341, %v310, %v312
  %v343 = vsel %vm341, %v314, %v316
  %v344 = vsel %vm341, %v318, %v320
  %v345 = vsel %vm341, %v322, %v324
  %v346 = vsel %vm341, %v326, %v328
  %v347 = vsel %vm341, %v330, %v332
  %v348 = vsel %vm341, %v334, %v336
  %v349 = vsel %vm341, %v338, %v340
  %358 = vmatprep.subr.mxu0 %v262
  %359 = vmatpush1.msra.mxu0 %v261
  %360 = vmatprep.subr.mxu0 %v264
  %361 = vmatpush1.msra.mxu0 %v263
  %362 = vmatprep.subr.mxu0 %v266
  %363 = vmatpush1.msra.mxu0 %v265
  %364 = vmatprep.subr.mxu0 %v268
  %365 = vmatpush1.msra.mxu0 %v267
  %366 = vmatprep.subr.mxu0 %v270
  %367 = vmatpush1.msra.mxu0 %v269
  %368 = vmatprep.subr.mxu0 %v272
  %369 = vmatpush1.msra.mxu0 %v271
  %370 = vmatprep.subr.mxu0 %v274
  %371 = vmatpush1.msra.mxu0 %v273
  %372 = vmatprep.subr.mxu0 %v276
  %373 = vmatpush1.msra.mxu0 %v275
  %374 = vmatprep.subr.mxu0 %v278
  %375 = vmatpush1.msra.mxu0 %v277
  %376 = vmatprep.subr.mxu0 %v280
  %377 = vmatpush1.msra.mxu0 %v279
  %378 = vmatprep.subr.mxu0 %v282
  %379 = vmatpush1.msra.mxu0 %v281
  %380 = vmatprep.subr.mxu0 %v284
  %381 = vmatpush1.msra.mxu0 %v283
  %382 = vmatprep.subr.mxu0 %v286
  %383 = vmatpush1.msra.mxu0 %v285
  %384 = vmatprep.subr.mxu0 %v288
  %385 = vmatpush1.msra.mxu0 %v287
  %386 = vmatprep.subr.mxu0 %v290
  %387 = vmatpush1.msra.mxu0 %v289
  %388 = vmatprep.subr.mxu0 %v292
  %389 = vmatpush1.msra.mxu0 %v291
  %390 = vmatprep.subr.mxu0 0.0
  %391 = vmatpush1.msra.mxu0 0.0
  %392 = vmatprep.subr.mxu0 0.0
  %393 = vmatpush1.msra.mxu0 0.0
  %394 = vmatprep.subr.mxu0 0.0
  %395 = vmatpush1.msra.mxu0 0.0
  %396 = vmatprep.subr.mxu0 0.0
  %397 = vmatpush1.msra.mxu0 0.0
  %398 = vmatprep.subr.mxu0 0.0
  %399 = vmatpush1.msra.mxu0 0.0
  %400 = vmatprep.subr.mxu0 0.0
  %401 = vmatpush1.msra.mxu0 0.0
  %402 = vmatprep.subr.mxu0 0.0
  %403 = vmatpush1.msra.mxu0 0.0
  %404 = vmatprep.subr.mxu0 0.0
  %405 = vmatpush1.msra.mxu0 0.0
  %406 = vmatprep.subr.mxu0 0.0
  %407 = vmatpush1.msra.mxu0 0.0
  %408 = vmatprep.subr.mxu0 0.0
  %409 = vmatpush1.msra.mxu0 0.0
  %410 = vmatprep.subr.mxu0 0.0
  %411 = vmatpush1.msra.mxu0 0.0
  %412 = vmatprep.subr.mxu0 0.0
  %413 = vmatpush1.msra.mxu0 0.0
  %414 = vmatprep.subr.mxu0 0.0
  %415 = vmatpush1.msra.mxu0 0.0
  %416 = vmatprep.subr.mxu0 0.0
  %417 = vmatpush1.msra.mxu0 0.0
  %418 = vmatprep.subr.mxu0 0.0
  %419 = vmatpush1.msra.mxu0 0.0
  %420 = vmatprep.subr.mxu0 0.0
  %421 = vmatpush1.msra.mxu0 0.0
  %422 = vmatprep.mubr.f32.mxu0 0.0
  %423 = vmatmul.mubr.f32.gmra.mrb[0].mxu0 %v342
  %v424 = vpop.f32.mrb[0].mxu0
  %v425 = vadd.f32 0.0, %v424
  %v426 = vpop.f32.mrb[0].mxu0
  %v427 = vadd.f32 0.0, %v426
  %428 = vmatprep.mubr.f32.mxu0 0.0
  %429 = vmatmul.mubr.f32.gmra.mrb[0].mxu0 %v343
  %v430 = vpop.f32.mrb[0].mxu0
  %v431 = vadd.f32 0.0, %v430
  %v432 = vpop.f32.mrb[0].mxu0
  %v433 = vadd.f32 0.0, %v432
  %434 = vmatprep.mubr.f32.mxu0 0.0
  %435 = vmatmul.mubr.f32.gmra.mrb[0].mxu0 %v344
  %v436 = vpop.f32.mrb[0].mxu0
  %v437 = vadd.f32 0.0, %v436
  %v438 = vpop.f32.mrb[0].mxu0
  %v439 = vadd.f32 0.0, %v438
  %440 = vmatprep.mubr.f32.mxu0 0.0
  %441 = vmatmul.mubr.f32.gmra.mrb[0].mxu0 %v345
  %v442 = vpop.f32.mrb[0].mxu0
  %v443 = vadd.f32 0.0, %v442
  %v444 = vpop.f32.mrb[0].mxu0
  %v445 = vadd.f32 0.0, %v444
  %446 = vmatprep.mubr.f32.mxu0 0.0
  %447 = vmatmul.mubr.f32.gmra.mrb[0].mxu0 %v346
  %v448 = vpop.f32.mrb[0].mxu0
  %v449 = vadd.f32 0.0, %v448
  %v450 = vpop.f32.mrb[0].mxu0
  %v451 = vadd.f32 0.0, %v450
  %452 = vmatprep.mubr.f32.mxu0 0.0
  %453 = vmatmul.mubr.f32.gmra.mrb[0].mxu0 %v347
  %v454 = vpop.f32.mrb[0].mxu0
  %v455 = vadd.f32 0.0, %v454
  %v456 = vpop.f32.mrb[0].mxu0
  %v457 = vadd.f32 0.0, %v456
  %458 = vmatprep.mubr.f32.mxu0 0.0
  %459 = vmatmul.mubr.f32.gmra.mrb[0].mxu0 %v348
  %v460 = vpop.f32.mrb[0].mxu0
  %v461 = vadd.f32 0.0, %v460
  %v462 = vpop.f32.mrb[0].mxu0
  %v463 = vadd.f32 0.0, %v462
  %464 = vmatprep.mubr.f32.mxu0 0.0
  %465 = vmatmul.mubr.f32.gmra.mrb[0].mxu0 %v349
  %v466 = vpop.f32.mrb[0].mxu0
  %v467 = vadd.f32 0.0, %v466
  %v468 = vpop.f32.mrb[0].mxu0
  %v469 = vadd.f32 0.0, %v468
  %470 = vdwg.mxu0
  %471 = vmatprep.subr.mxu0 %v229
  %472 = vmatpush1.msra.mxu0 %v228
  %473 = vmatprep.subr.mxu0 %v231
  %474 = vmatpush1.msra.mxu0 %v230
  %475 = vmatprep.subr.mxu0 %v233
  %476 = vmatpush1.msra.mxu0 %v232
  %477 = vmatprep.subr.mxu0 %v235
  %478 = vmatpush1.msra.mxu0 %v234
  %479 = vmatprep.subr.mxu0 %v237
  %480 = vmatpush1.msra.mxu0 %v236
  %481 = vmatprep.subr.mxu0 %v239
  %482 = vmatpush1.msra.mxu0 %v238
  %483 = vmatprep.subr.mxu0 %v241
  %484 = vmatpush1.msra.mxu0 %v240
  %485 = vmatprep.subr.mxu0 %v243
  %486 = vmatpush1.msra.mxu0 %v242
  %487 = vmatprep.subr.mxu0 %v245
  %488 = vmatpush1.msra.mxu0 %v244
  %489 = vmatprep.subr.mxu0 %v247
  %490 = vmatpush1.msra.mxu0 %v246
  %491 = vmatprep.subr.mxu0 %v249
  %492 = vmatpush1.msra.mxu0 %v248
  %493 = vmatprep.subr.mxu0 %v251
  %494 = vmatpush1.msra.mxu0 %v250
  %495 = vmatprep.subr.mxu0 %v253
  %496 = vmatpush1.msra.mxu0 %v252
  %497 = vmatprep.subr.mxu0 %v255
  %498 = vmatpush1.msra.mxu0 %v254
  %499 = vmatprep.subr.mxu0 %v257
  %500 = vmatpush1.msra.mxu0 %v256
  %501 = vmatprep.subr.mxu0 %v259
  %502 = vmatpush1.msra.mxu0 %v258
  %503 = vmatprep.subr.mxu0 0.0
  %504 = vmatpush1.msra.mxu0 0.0
  %505 = vmatprep.subr.mxu0 0.0
  %506 = vmatpush1.msra.mxu0 0.0
  %507 = vmatprep.subr.mxu0 0.0
  %508 = vmatpush1.msra.mxu0 0.0
  %509 = vmatprep.subr.mxu0 0.0
  %510 = vmatpush1.msra.mxu0 0.0
  %511 = vmatprep.subr.mxu0 0.0
  %512 = vmatpush1.msra.mxu0 0.0
  %513 = vmatprep.subr.mxu0 0.0
  %514 = vmatpush1.msra.mxu0 0.0
  %515 = vmatprep.subr.mxu0 0.0
  %516 = vmatpush1.msra.mxu0 0.0
  %517 = vmatprep.subr.mxu0 0.0
  %518 = vmatpush1.msra.mxu0 0.0
  %519 = vmatprep.subr.mxu0 0.0
  %520 = vmatpush1.msra.mxu0 0.0
  %521 = vmatprep.subr.mxu0 0.0
  %522 = vmatpush1.msra.mxu0 0.0
  %523 = vmatprep.subr.mxu0 0.0
  %524 = vmatpush1.msra.mxu0 0.0
  %525 = vmatprep.subr.mxu0 0.0
  %526 = vmatpush1.msra.mxu0 0.0
  %527 = vmatprep.subr.mxu0 0.0
  %528 = vmatpush1.msra.mxu0 0.0
  %529 = vmatprep.subr.mxu0 0.0
  %530 = vmatpush1.msra.mxu0 0.0
  %531 = vmatprep.subr.mxu0 0.0
  %532 = vmatpush1.msra.mxu0 0.0
  %533 = vmatprep.subr.mxu0 0.0
  %534 = vmatpush1.msra.mxu0 0.0
  %535 = vmatprep.mubr.f32.mxu0 0.0
  %536 = vmatmul.mubr.f32.gmra.mrb[0].mxu0 %v182
  %v537 = vpop.f32.mrb[0].mxu0
  %v538 = vadd.f32 %v425, %v537
  %v539 = vpop.f32.mrb[0].mxu0
  %v540 = vadd.f32 %v427, %v539
  %541 = vmatprep.mubr.f32.mxu0 0.0
  %542 = vmatmul.mubr.f32.gmra.mrb[0].mxu0 %v188
  %v543 = vpop.f32.mrb[0].mxu0
  %v544 = vadd.f32 %v431, %v543
  %v545 = vpop.f32.mrb[0].mxu0
  %v546 = vadd.f32 %v433, %v545
  %547 = vmatprep.mubr.f32.mxu0 0.0
  %548 = vmatmul.mubr.f32.gmra.mrb[0].mxu0 %v194
  %v549 = vpop.f32.mrb[0].mxu0
  %v550 = vadd.f32 %v437, %v549
  %v551 = vpop.f32.mrb[0].mxu0
  %v552 = vadd.f32 %v439, %v551
  %553 = vmatprep.mubr.f32.mxu0 0.0
  %554 = vmatmul.mubr.f32.gmra.mrb[0].mxu0 %v200
  %v555 = vpop.f32.mrb[0].mxu0
  %v556 = vadd.f32 %v443, %v555
  %v557 = vpop.f32.mrb[0].mxu0
  %v558 = vadd.f32 %v445, %v557
  %559 = vmatprep.mubr.f32.mxu0 0.0
  %560 = vmatmul.mubr.f32.gmra.mrb[0].mxu0 %v206
  %v561 = vpop.f32.mrb[0].mxu0
  %v562 = vadd.f32 %v449, %v561
  %v563 = vpop.f32.mrb[0].mxu0
  %v564 = vadd.f32 %v451, %v563
  %565 = vmatprep.mubr.f32.mxu0 0.0
  %566 = vmatmul.mubr.f32.gmra.mrb[0].mxu0 %v212
  %v567 = vpop.f32.mrb[0].mxu0
  %v568 = vadd.f32 %v455, %v567
  %v569 = vpop.f32.mrb[0].mxu0
  %v570 = vadd.f32 %v457, %v569
  %571 = vmatprep.mubr.f32.mxu0 0.0
  %572 = vmatmul.mubr.f32.gmra.mrb[0].mxu0 %v218
  %v573 = vpop.f32.mrb[0].mxu0
  %v574 = vadd.f32 %v461, %v573
  %v575 = vpop.f32.mrb[0].mxu0
  %v576 = vadd.f32 %v463, %v575
  %577 = vmatprep.mubr.f32.mxu0 0.0
  %578 = vmatmul.mubr.f32.gmra.mrb[0].mxu0 %v224
  %v579 = vpop.f32.mrb[0].mxu0
  %v580 = vadd.f32 %v467, %v579
  %v581 = vpop.f32.mrb[0].mxu0
  %v582 = vadd.f32 %v469, %v581
  %583 = vdwg.mxu0
  %s584 = scalar_lea.vmem %s9, 512
  %v585 = vld [vmem:[%s584] sm:$0xff]
  %v586 = vld [vmem:[%s584 + $0x8] sm:$0xff]
  %v587 = vld [vmem:[%s584 + $0x10] sm:$0xff]
  %v588 = vld [vmem:[%s584 + $0x18] sm:$0xff]
  %v589 = vld [vmem:[%s584 + $0x20] sm:$0xff]
  %v590 = vld [vmem:[%s584 + $0x28] sm:$0xff]
  %v591 = vld [vmem:[%s584 + $0x30] sm:$0xff]
  %v592 = vld [vmem:[%s584 + $0x38] sm:$0xff]
  %v593 = vld [vmem:[%s584 + $0x40] sm:$0xff]
  %v594 = vld [vmem:[%s584 + $0x48] sm:$0xff]
  %v595 = vld [vmem:[%s584 + $0x50] sm:$0xff]
  %v596 = vld [vmem:[%s584 + $0x58] sm:$0xff]
  %v597 = vld [vmem:[%s584 + $0x60] sm:$0xff]
  %v598 = vld [vmem:[%s584 + $0x68] sm:$0xff]
  %v599 = vld [vmem:[%s584 + $0x70] sm:$0xff]
  %v600 = vld [vmem:[%s584 + $0x78] sm:$0xff]
  %v601 = vld [vmem:[%s584 + $0x80] sm:$0xff]
  %v602 = vld [vmem:[%s584 + $0x88] sm:$0xff]
  %v603 = vld [vmem:[%s584 + $0x90] sm:$0xff]
  %v604 = vld [vmem:[%s584 + $0x98] sm:$0xff]
  %v605 = vld [vmem:[%s584 + $0xa0] sm:$0xff]
  %v606 = vld [vmem:[%s584 + $0xa8] sm:$0xff]
  %v607 = vld [vmem:[%s584 + $0xb0] sm:$0xff]
  %v608 = vld [vmem:[%s584 + $0xb8] sm:$0xff]
  %v609 = vld [vmem:[%s584 + $0xc0] sm:$0xff]
  %v610 = vld [vmem:[%s584 + $0xc8] sm:$0xff]
  %v611 = vld [vmem:[%s584 + $0xd0] sm:$0xff]
  %v612 = vld [vmem:[%s584 + $0xd8] sm:$0xff]
  %v613 = vld [vmem:[%s584 + $0xe0] sm:$0xff]
  %v614 = vld [vmem:[%s584 + $0xe8] sm:$0xff]
  %v615 = vld [vmem:[%s584 + $0xf0] sm:$0xff]
  %v616 = vld [vmem:[%s584 + $0xf8] sm:$0xff]
  %617 = vrot.lane.b32.xlu0 %v182, 120
  %v618 = vpop.permute.xlu0 %617
  %619 = vrot.lane.b32.xlu0 %v184, 120
  %v620 = vpop.permute.xlu0 %619
  %621 = vrot.lane.b32.xlu0 %v188, 120
  %v622 = vpop.permute.xlu0 %621
  %623 = vrot.lane.b32.xlu0 %v190, 120
  %v624 = vpop.permute.xlu0 %623
  %625 = vrot.lane.b32.xlu0 %v194, 120
  %v626 = vpop.permute.xlu0 %625
  %627 = vrot.lane.b32.xlu0 %v196, 120
  %v628 = vpop.permute.xlu0 %627
  %629 = vrot.lane.b32.xlu0 %v200, 120
  %v630 = vpop.permute.xlu0 %629
  %631 = vrot.lane.b32.xlu0 %v202, 120
  %v632 = vpop.permute.xlu0 %631
  %633 = vrot.lane.b32.xlu0 %v206, 120
  %v634 = vpop.permute.xlu0 %633
  %635 = vrot.lane.b32.xlu0 %v208, 120
  %v636 = vpop.permute.xlu0 %635
  %637 = vrot.lane.b32.xlu0 %v212, 120
  %v638 = vpop.permute.xlu0 %637
  %639 = vrot.lane.b32.xlu0 %v214, 120
  %v640 = vpop.permute.xlu0 %639
  %641 = vrot.lane.b32.xlu0 %v218, 120
  %v642 = vpop.permute.xlu0 %641
  %643 = vrot.lane.b32.xlu0 %v220, 120
  %v644 = vpop.permute.xlu0 %643
  %645 = vrot.lane.b32.xlu0 %v224, 120
  %v646 = vpop.permute.xlu0 %645
  %647 = vrot.lane.b32.xlu0 %v226, 120
  %v648 = vpop.permute.xlu0 %647
  %vm649 = vcmask 982016
  %v650 = vsel %vm649, %v618, %v620
  %v651 = vsel %vm649, %v622, %v624
  %v652 = vsel %vm649, %v626, %v628
  %v653 = vsel %vm649, %v630, %v632
  %v654 = vsel %vm649, %v634, %v636
  %v655 = vsel %vm649, %v638, %v640
  %v656 = vsel %vm649, %v642, %v644
  %v657 = vsel %vm649, %v646, %v648
  %666 = vmatprep.subr.mxu0 %v586
  %667 = vmatpush1.msra.mxu0 %v585
  %668 = vmatprep.subr.mxu0 %v588
  %669 = vmatpush1.msra.mxu0 %v587
  %670 = vmatprep.subr.mxu0 %v590
  %671 = vmatpush1.msra.mxu0 %v589
  %672 = vmatprep.subr.mxu0 %v592
  %673 = vmatpush1.msra.mxu0 %v591
  %674 = vmatprep.subr.mxu0 %v594
  %675 = vmatpush1.msra.mxu0 %v593
  %676 = vmatprep.subr.mxu0 %v596
  %677 = vmatpush1.msra.mxu0 %v595
  %678 = vmatprep.subr.mxu0 %v598
  %679 = vmatpush1.msra.mxu0 %v597
  %680 = vmatprep.subr.mxu0 %v600
  %681 = vmatpush1.msra.mxu0 %v599
  %682 = vmatprep.subr.mxu0 %v602
  %683 = vmatpush1.msra.mxu0 %v601
  %684 = vmatprep.subr.mxu0 %v604
  %685 = vmatpush1.msra.mxu0 %v603
  %686 = vmatprep.subr.mxu0 %v606
  %687 = vmatpush1.msra.mxu0 %v605
  %688 = vmatprep.subr.mxu0 %v608
  %689 = vmatpush1.msra.mxu0 %v607
  %690 = vmatprep.subr.mxu0 %v610
  %691 = vmatpush1.msra.mxu0 %v609
  %692 = vmatprep.subr.mxu0 %v612
  %693 = vmatpush1.msra.mxu0 %v611
  %694 = vmatprep.subr.mxu0 %v614
  %695 = vmatpush1.msra.mxu0 %v613
  %696 = vmatprep.subr.mxu0 %v616
  %697 = vmatpush1.msra.mxu0 %v615
  %698 = vmatprep.subr.mxu0 0.0
  %699 = vmatpush1.msra.mxu0 0.0
  %700 = vmatprep.subr.mxu0 0.0
  %701 = vmatpush1.msra.mxu0 0.0
  %702 = vmatprep.subr.mxu0 0.0
  %703 = vmatpush1.msra.mxu0 0.0
  %704 = vmatprep.subr.mxu0 0.0
  %705 = vmatpush1.msra.mxu0 0.0
  %706 = vmatprep.subr.mxu0 0.0
  %707 = vmatpush1.msra.mxu0 0.0
  %708 = vmatprep.subr.mxu0 0.0
  %709 = vmatpush1.msra.mxu0 0.0
  %710 = vmatprep.subr.mxu0 0.0
  %711 = vmatpush1.msra.mxu0 0.0
  %712 = vmatprep.subr.mxu0 0.0
  %713 = vmatpush1.msra.mxu0 0.0
  %714 = vmatprep.subr.mxu0 0.0
  %715 = vmatpush1.msra.mxu0 0.0
  %716 = vmatprep.subr.mxu0 0.0
  %717 = vmatpush1.msra.mxu0 0.0
  %718 = vmatprep.subr.mxu0 0.0
  %719 = vmatpush1.msra.mxu0 0.0
  %720 = vmatprep.subr.mxu0 0.0
  %721 = vmatpush1.msra.mxu0 0.0
  %722 = vmatprep.subr.mxu0 0.0
  %723 = vmatpush1.msra.mxu0 0.0
  %724 = vmatprep.subr.mxu0 0.0
  %725 = vmatpush1.msra.mxu0 0.0
  %726 = vmatprep.subr.mxu0 0.0
  %727 = vmatpush1.msra.mxu0 0.0
  %728 = vmatprep.subr.mxu0 0.0
  %729 = vmatpush1.msra.mxu0 0.0
  %730 = vmatprep.mubr.f32.mxu0 0.0
  %731 = vmatmul.mubr.f32.gmra.mrb[0].mxu0 %v650
  %v732 = vpop.f32.mrb[0].mxu0
  %v733 = vadd.f32 0.0, %v732
  %v734 = vpop.f32.mrb[0].mxu0
  %v735 = vadd.f32 0.0, %v734
  %736 = vmatprep.mubr.f32.mxu0 0.0
  %737 = vmatmul.mubr.f32.gmra.mrb[0].mxu0 %v651
  %v738 = vpop.f32.mrb[0].mxu0
  %v739 = vadd.f32 0.0, %v738
  %v740 = vpop.f32.mrb[0].mxu0
  %v741 = vadd.f32 0.0, %v740
  %742 = vmatprep.mubr.f32.mxu0 0.0
  %743 = vmatmul.mubr.f32.gmra.mrb[0].mxu0 %v652
  %v744 = vpop.f32.mrb[0].mxu0
  %v745 = vadd.f32 0.0, %v744
  %v746 = vpop.f32.mrb[0].mxu0
  %v747 = vadd.f32 0.0, %v746
  %748 = vmatprep.mubr.f32.mxu0 0.0
  %749 = vmatmul.mubr.f32.gmra.mrb[0].mxu0 %v653
  %v750 = vpop.f32.mrb[0].mxu0
  %v751 = vadd.f32 0.0, %v750
  %v752 = vpop.f32.mrb[0].mxu0
  %v753 = vadd.f32 0.0, %v752
  %754 = vmatprep.mubr.f32.mxu0 0.0
  %755 = vmatmul.mubr.f32.gmra.mrb[0].mxu0 %v654
  %v756 = vpop.f32.mrb[0].mxu0
  %v757 = vadd.f32 0.0, %v756
  %v758 = vpop.f32.mrb[0].mxu0
  %v759 = vadd.f32 0.0, %v758
  %760 = vmatprep.mubr.f32.mxu0 0.0
  %761 = vmatmul.mubr.f32.gmra.mrb[0].mxu0 %v655
  %v762 = vpop.f32.mrb[0].mxu0
  %v763 = vadd.f32 0.0, %v762
  %v764 = vpop.f32.mrb[0].mxu0
  %v765 = vadd.f32 0.0, %v764
  %766 = vmatprep.mubr.f32.mxu0 0.0
  %767 = vmatmul.mubr.f32.gmra.mrb[0].mxu0 %v656
  %v768 = vpop.f32.mrb[0].mxu0
  %v769 = vadd.f32 0.0, %v768
  %v770 = vpop.f32.mrb[0].mxu0
  %v771 = vadd.f32 0.0, %v770
  %772 = vmatprep.mubr.f32.mxu0 0.0
  %773 = vmatmul.mubr.f32.gmra.mrb[0].mxu0 %v657
  %v774 = vpop.f32.mrb[0].mxu0
  %v775 = vadd.f32 0.0, %v774
  %v776 = vpop.f32.mrb[0].mxu0
  %v777 = vadd.f32 0.0, %v776
  %778 = vdwg.mxu0
  %v779 = vadd.f32 %v538, %v733
  %v780 = vadd.f32 %v540, %v735
  %v781 = vadd.f32 %v544, %v739
  %v782 = vadd.f32 %v546, %v741
  %v783 = vadd.f32 %v550, %v745
  %v784 = vadd.f32 %v552, %v747
  %v785 = vadd.f32 %v556, %v751
  %v786 = vadd.f32 %v558, %v753
  %v787 = vadd.f32 %v562, %v757
  %v788 = vadd.f32 %v564, %v759
  %v789 = vadd.f32 %v568, %v763
  %v790 = vadd.f32 %v570, %v765
  %v791 = vadd.f32 %v574, %v769
  %v792 = vadd.f32 %v576, %v771
  %v793 = vadd.f32 %v580, %v775
  %v794 = vadd.f32 %v582, %v777
  %s795 = scalar_lea.vmem %s1, 64
  %v796 = vld [vmem:[%s795] sm:$0xff]
  %v797 = vld [vmem:[%s795 + $0x8] sm:$0xff]
  %v798 = vld [vmem:[%s795 + $0x10] sm:$0xff]
  %v799 = vld [vmem:[%s795 + $0x18] sm:$0xff]
  %v800 = vld [vmem:[%s795 + $0x20] sm:$0xff]
  %v801 = vld [vmem:[%s795 + $0x28] sm:$0xff]
  %v802 = vld [vmem:[%s795 + $0x30] sm:$0xff]
  %v803 = vld [vmem:[%s795 + $0x38] sm:$0xff]
  %v805 = vsel %vm90, %v796, 0
  %v808 = vsel %vm90, %v797, 0
  %v811 = vsel %vm90, %v798, 0
  %v814 = vsel %vm90, %v799, 0
  %v817 = vsel %vm90, %v800, 0
  %v820 = vsel %vm90, %v801, 0
  %v823 = vsel %vm90, %v802, 0
  %v826 = vsel %vm90, %v803, 0
  %828 = vmatprep.subr.mxu0 %v63
  %829 = vmatpush1.msra.mxu0 %v62
  %830 = vmatprep.subr.mxu0 %v65
  %831 = vmatpush1.msra.mxu0 %v64
  %832 = vmatprep.subr.mxu0 %v67
  %833 = vmatpush1.msra.mxu0 %v66
  %834 = vmatprep.subr.mxu0 %v69
  %835 = vmatpush1.msra.mxu0 %v68
  %836 = vmatprep.subr.mxu0 %v71
  %837 = vmatpush1.msra.mxu0 %v70
  %838 = vmatprep.subr.mxu0 %v73
  %839 = vmatpush1.msra.mxu0 %v72
  %840 = vmatprep.subr.mxu0 %v75
  %841 = vmatpush1.msra.mxu0 %v74
  %842 = vmatprep.subr.mxu0 %v77
  %843 = vmatpush1.msra.mxu0 %v76
  %844 = vmatprep.subr.mxu0 %v79
  %845 = vmatpush1.msra.mxu0 %v78
  %846 = vmatprep.subr.mxu0 %v81
  %847 = vmatpush1.msra.mxu0 %v80
  %848 = vmatprep.subr.mxu0 0.0
  %849 = vmatpush1.msra.mxu0 0.0
  %850 = vmatprep.subr.mxu0 0.0
  %851 = vmatpush1.msra.mxu0 0.0
  %852 = vmatprep.subr.mxu0 0.0
  %853 = vmatpush1.msra.mxu0 0.0
  %854 = vmatprep.subr.mxu0 0.0
  %855 = vmatpush1.msra.mxu0 0.0
  %856 = vmatprep.subr.mxu0 0.0
  %857 = vmatpush1.msra.mxu0 0.0
  %858 = vmatprep.subr.mxu0 0.0
  %859 = vmatpush1.msra.mxu0 0.0
  %860 = vmatprep.subr.mxu0 0.0
  %861 = vmatpush1.msra.mxu0 0.0
  %862 = vmatprep.subr.mxu0 0.0
  %863 = vmatpush1.msra.mxu0 0.0
  %864 = vmatprep.subr.mxu0 0.0
  %865 = vmatpush1.msra.mxu0 0.0
  %866 = vmatprep.subr.mxu0 0.0
  %867 = vmatpush1.msra.mxu0 0.0
  %868 = vmatprep.subr.mxu0 0.0
  %869 = vmatpush1.msra.mxu0 0.0
  %870 = vmatprep.subr.mxu0 0.0
  %871 = vmatpush1.msra.mxu0 0.0
  %872 = vmatprep.subr.mxu0 0.0
  %873 = vmatpush1.msra.mxu0 0.0
  %874 = vmatprep.subr.mxu0 0.0
  %875 = vmatpush1.msra.mxu0 0.0
  %876 = vmatprep.subr.mxu0 0.0
  %877 = vmatpush1.msra.mxu0 0.0
  %878 = vmatprep.subr.mxu0 0.0
  %879 = vmatpush1.msra.mxu0 0.0
  %880 = vmatprep.subr.mxu0 0.0
  %881 = vmatpush1.msra.mxu0 0.0
  %882 = vmatprep.subr.mxu0 0.0
  %883 = vmatpush1.msra.mxu0 0.0
  %884 = vmatprep.subr.mxu0 0.0
  %885 = vmatpush1.msra.mxu0 0.0
  %886 = vmatprep.subr.mxu0 0.0
  %887 = vmatpush1.msra.mxu0 0.0
  %888 = vmatprep.subr.mxu0 0.0
  %889 = vmatpush1.msra.mxu0 0.0
  %890 = vmatprep.subr.mxu0 0.0
  %891 = vmatpush1.msra.mxu0 0.0
  %892 = vmatprep.mubr.f32.mxu0 0.0
  %893 = vmatmul.mubr.f32.gmra.mrb[0].mxu0 %v805
  %v894 = vpop.f32.mrb[0].mxu0
  %v895 = vadd.f32 0.0, %v894
  %v896 = vpop.f32.mrb[0].mxu0
  %v897 = vadd.f32 0.0, %v896
  %898 = vmatprep.mubr.f32.mxu0 0.0
  %899 = vmatmul.mubr.f32.gmra.mrb[0].mxu0 %v808
  %v900 = vpop.f32.mrb[0].mxu0
  %v901 = vadd.f32 0.0, %v900
  %v902 = vpop.f32.mrb[0].mxu0
  %v903 = vadd.f32 0.0, %v902
  %904 = vmatprep.mubr.f32.mxu0 0.0
  %905 = vmatmul.mubr.f32.gmra.mrb[0].mxu0 %v811
  %v906 = vpop.f32.mrb[0].mxu0
  %v907 = vadd.f32 0.0, %v906
  %v908 = vpop.f32.mrb[0].mxu0
  %v909 = vadd.f32 0.0, %v908
  %910 = vmatprep.mubr.f32.mxu0 0.0
  %911 = vmatmul.mubr.f32.gmra.mrb[0].mxu0 %v814
  %v912 = vpop.f32.mrb[0].mxu0
  %v913 = vadd.f32 0.0, %v912
  %v914 = vpop.f32.mrb[0].mxu0
  %v915 = vadd.f32 0.0, %v914
  %916 = vmatprep.mubr.f32.mxu0 0.0
  %917 = vmatmul.mubr.f32.gmra.mrb[0].mxu0 %v817
  %v918 = vpop.f32.mrb[0].mxu0
  %v919 = vadd.f32 0.0, %v918
  %v920 = vpop.f32.mrb[0].mxu0
  %v921 = vadd.f32 0.0, %v920
  %922 = vmatprep.mubr.f32.mxu0 0.0
  %923 = vmatmul.mubr.f32.gmra.mrb[0].mxu0 %v820
  %v924 = vpop.f32.mrb[0].mxu0
  %v925 = vadd.f32 0.0, %v924
  %v926 = vpop.f32.mrb[0].mxu0
  %v927 = vadd.f32 0.0, %v926
  %928 = vmatprep.mubr.f32.mxu0 0.0
  %929 = vmatmul.mubr.f32.gmra.mrb[0].mxu0 %v823
  %v930 = vpop.f32.mrb[0].mxu0
  %v931 = vadd.f32 0.0, %v930
  %v932 = vpop.f32.mrb[0].mxu0
  %v933 = vadd.f32 0.0, %v932
  %934 = vmatprep.mubr.f32.mxu0 0.0
  %935 = vmatmul.mubr.f32.gmra.mrb[0].mxu0 %v826
  %v936 = vpop.f32.mrb[0].mxu0
  %v937 = vadd.f32 0.0, %v936
  %v938 = vpop.f32.mrb[0].mxu0
  %v939 = vadd.f32 0.0, %v938
  %940 = vdwg.mxu0
  %s941 = scalar_lea.vmem %s9, 768
  %v942 = vld [vmem:[%s941] sm:$0xff]
  %v943 = vld [vmem:[%s941 + $0x8] sm:$0xff]
  %v944 = vld [vmem:[%s941 + $0x10] sm:$0xff]
  %v945 = vld [vmem:[%s941 + $0x18] sm:$0xff]
  %v946 = vld [vmem:[%s941 + $0x20] sm:$0xff]
  %v947 = vld [vmem:[%s941 + $0x28] sm:$0xff]
  %v948 = vld [vmem:[%s941 + $0x30] sm:$0xff]
  %v949 = vld [vmem:[%s941 + $0x38] sm:$0xff]
  %v950 = vld [vmem:[%s941 + $0x40] sm:$0xff]
  %v951 = vld [vmem:[%s941 + $0x48] sm:$0xff]
  %v952 = vld [vmem:[%s941 + $0x50] sm:$0xff]
  %v953 = vld [vmem:[%s941 + $0x58] sm:$0xff]
  %v954 = vld [vmem:[%s941 + $0x60] sm:$0xff]
  %v955 = vld [vmem:[%s941 + $0x68] sm:$0xff]
  %v956 = vld [vmem:[%s941 + $0x70] sm:$0xff]
  %v957 = vld [vmem:[%s941 + $0x78] sm:$0xff]
  %v958 = vld [vmem:[%s941 + $0x80] sm:$0xff]
  %v959 = vld [vmem:[%s941 + $0x88] sm:$0xff]
  %v960 = vld [vmem:[%s941 + $0x90] sm:$0xff]
  %v961 = vld [vmem:[%s941 + $0x98] sm:$0xff]
  %v962 = vld [vmem:[%s941 + $0xa0] sm:$0xff]
  %v963 = vld [vmem:[%s941 + $0xa8] sm:$0xff]
  %v964 = vld [vmem:[%s941 + $0xb0] sm:$0xff]
  %v965 = vld [vmem:[%s941 + $0xb8] sm:$0xff]
  %v966 = vld [vmem:[%s941 + $0xc0] sm:$0xff]
  %v967 = vld [vmem:[%s941 + $0xc8] sm:$0xff]
  %v968 = vld [vmem:[%s941 + $0xd0] sm:$0xff]
  %v969 = vld [vmem:[%s941 + $0xd8] sm:$0xff]
  %v970 = vld [vmem:[%s941 + $0xe0] sm:$0xff]
  %v971 = vld [vmem:[%s941 + $0xe8] sm:$0xff]
  %v972 = vld [vmem:[%s941 + $0xf0] sm:$0xff]
  %v973 = vld [vmem:[%s941 + $0xf8] sm:$0xff]
  %974 = vmatprep.subr.mxu0 %v943
  %975 = vmatpush1.msra.mxu0 %v942
  %976 = vmatprep.subr.mxu0 %v945
  %977 = vmatpush1.msra.mxu0 %v944
  %978 = vmatprep.subr.mxu0 %v947
  %979 = vmatpush1.msra.mxu0 %v946
  %980 = vmatprep.subr.mxu0 %v949
  %981 = vmatpush1.msra.mxu0 %v948
  %982 = vmatprep.subr.mxu0 %v951
  %983 = vmatpush1.msra.mxu0 %v950
  %984 = vmatprep.subr.mxu0 %v953
  %985 = vmatpush1.msra.mxu0 %v952
  %986 = vmatprep.subr.mxu0 %v955
  %987 = vmatpush1.msra.mxu0 %v954
  %988 = vmatprep.subr.mxu0 %v957
  %989 = vmatpush1.msra.mxu0 %v956
  %990 = vmatprep.subr.mxu0 %v959
  %991 = vmatpush1.msra.mxu0 %v958
  %992 = vmatprep.subr.mxu0 %v961
  %993 = vmatpush1.msra.mxu0 %v960
  %994 = vmatprep.subr.mxu0 %v963
  %995 = vmatpush1.msra.mxu0 %v962
  %996 = vmatprep.subr.mxu0 %v965
  %997 = vmatpush1.msra.mxu0 %v964
  %998 = vmatprep.subr.mxu0 %v967
  %999 = vmatpush1.msra.mxu0 %v966
  %1000 = vmatprep.subr.mxu0 %v969
  %1001 = vmatpush1.msra.mxu0 %v968
  %1002 = vmatprep.subr.mxu0 %v971
  %1003 = vmatpush1.msra.mxu0 %v970
  %1004 = vmatprep.subr.mxu0 %v973
  %1005 = vmatpush1.msra.mxu0 %v972
  %1006 = vmatprep.subr.mxu0 0.0
  %1007 = vmatpush1.msra.mxu0 0.0
  %1008 = vmatprep.subr.mxu0 0.0
  %1009 = vmatpush1.msra.mxu0 0.0
  %1010 = vmatprep.subr.mxu0 0.0
  %1011 = vmatpush1.msra.mxu0 0.0
  %1012 = vmatprep.subr.mxu0 0.0
  %1013 = vmatpush1.msra.mxu0 0.0
  %1014 = vmatprep.subr.mxu0 0.0
  %1015 = vmatpush1.msra.mxu0 0.0
  %1016 = vmatprep.subr.mxu0 0.0
  %1017 = vmatpush1.msra.mxu0 0.0
  %1018 = vmatprep.subr.mxu0 0.0
  %1019 = vmatpush1.msra.mxu0 0.0
  %1020 = vmatprep.subr.mxu0 0.0
  %1021 = vmatpush1.msra.mxu0 0.0
  %1022 = vmatprep.subr.mxu0 0.0
  %1023 = vmatpush1.msra.mxu0 0.0
  %1024 = vmatprep.subr.mxu0 0.0
  %1025 = vmatpush1.msra.mxu0 0.0
  %1026 = vmatprep.subr.mxu0 0.0
  %1027 = vmatpush1.msra.mxu0 0.0
  %1028 = vmatprep.subr.mxu0 0.0
  %1029 = vmatpush1.msra.mxu0 0.0
  %1030 = vmatprep.subr.mxu0 0.0
  %1031 = vmatpush1.msra.mxu0 0.0
  %1032 = vmatprep.subr.mxu0 0.0
  %1033 = vmatpush1.msra.mxu0 0.0
  %1034 = vmatprep.subr.mxu0 0.0
  %1035 = vmatpush1.msra.mxu0 0.0
  %1036 = vmatprep.subr.mxu0 0.0
  %1037 = vmatpush1.msra.mxu0 0.0
  %1038 = vmatprep.mubr.f32.mxu0 0.0
  %1039 = vmatmul.mubr.f32.gmra.mrb[0].mxu0 %v895
  %v1040 = vpop.f32.mrb[0].mxu0
  %v1041 = vadd.f32 0.0, %v1040
  %v1042 = vpop.f32.mrb[0].mxu0
  %v1043 = vadd.f32 0.0, %v1042
  %1044 = vmatprep.mubr.f32.mxu0 0.0
  %1045 = vmatmul.mubr.f32.gmra.mrb[0].mxu0 %v901
  %v1046 = vpop.f32.mrb[0].mxu0
  %v1047 = vadd.f32 0.0, %v1046
  %v1048 = vpop.f32.mrb[0].mxu0
  %v1049 = vadd.f32 0.0, %v1048
  %1050 = vmatprep.mubr.f32.mxu0 0.0
  %1051 = vmatmul.mubr.f32.gmra.mrb[0].mxu0 %v907
  %v1052 = vpop.f32.mrb[0].mxu0
  %v1053 = vadd.f32 0.0, %v1052
  %v1054 = vpop.f32.mrb[0].mxu0
  %v1055 = vadd.f32 0.0, %v1054
  %1056 = vmatprep.mubr.f32.mxu0 0.0
  %1057 = vmatmul.mubr.f32.gmra.mrb[0].mxu0 %v913
  %v1058 = vpop.f32.mrb[0].mxu0
  %v1059 = vadd.f32 0.0, %v1058
  %v1060 = vpop.f32.mrb[0].mxu0
  %v1061 = vadd.f32 0.0, %v1060
  %1062 = vmatprep.mubr.f32.mxu0 0.0
  %1063 = vmatmul.mubr.f32.gmra.mrb[0].mxu0 %v919
  %v1064 = vpop.f32.mrb[0].mxu0
  %v1065 = vadd.f32 0.0, %v1064
  %v1066 = vpop.f32.mrb[0].mxu0
  %v1067 = vadd.f32 0.0, %v1066
  %1068 = vmatprep.mubr.f32.mxu0 0.0
  %1069 = vmatmul.mubr.f32.gmra.mrb[0].mxu0 %v925
  %v1070 = vpop.f32.mrb[0].mxu0
  %v1071 = vadd.f32 0.0, %v1070
  %v1072 = vpop.f32.mrb[0].mxu0
  %v1073 = vadd.f32 0.0, %v1072
  %1074 = vmatprep.mubr.f32.mxu0 0.0
  %1075 = vmatmul.mubr.f32.gmra.mrb[0].mxu0 %v931
  %v1076 = vpop.f32.mrb[0].mxu0
  %v1077 = vadd.f32 0.0, %v1076
  %v1078 = vpop.f32.mrb[0].mxu0
  %v1079 = vadd.f32 0.0, %v1078
  %1080 = vmatprep.mubr.f32.mxu0 0.0
  %1081 = vmatmul.mubr.f32.gmra.mrb[0].mxu0 %v937
  %v1082 = vpop.f32.mrb[0].mxu0
  %v1083 = vadd.f32 0.0, %v1082
  %v1084 = vpop.f32.mrb[0].mxu0
  %v1085 = vadd.f32 0.0, %v1084
  %1086 = vdwg.mxu0
  %v1087 = vadd.f32 %v779, %v1041
  %v1088 = vadd.f32 %v780, %v1043
  %v1089 = vadd.f32 %v781, %v1047
  %v1090 = vadd.f32 %v782, %v1049
  %v1091 = vadd.f32 %v783, %v1053
  %v1092 = vadd.f32 %v784, %v1055
  %v1093 = vadd.f32 %v785, %v1059
  %v1094 = vadd.f32 %v786, %v1061
  %v1095 = vadd.f32 %v787, %v1065
  %v1096 = vadd.f32 %v788, %v1067
  %v1097 = vadd.f32 %v789, %v1071
  %v1098 = vadd.f32 %v790, %v1073
  %v1099 = vadd.f32 %v791, %v1077
  %v1100 = vadd.f32 %v792, %v1079
  %v1101 = vadd.f32 %v793, %v1083
  %v1102 = vadd.f32 %v794, %v1085
  %s1103 = scalar_lea.vmem %s9, 1024
  %v1104 = vld [vmem:[%s1103] sm:$0xff]
  %v1105 = vld [vmem:[%s1103 + $0x8] sm:$0xff]
  %v1106 = vld [vmem:[%s1103 + $0x10] sm:$0xff]
  %v1107 = vld [vmem:[%s1103 + $0x18] sm:$0xff]
  %v1108 = vld [vmem:[%s1103 + $0x20] sm:$0xff]
  %v1109 = vld [vmem:[%s1103 + $0x28] sm:$0xff]
  %v1110 = vld [vmem:[%s1103 + $0x30] sm:$0xff]
  %v1111 = vld [vmem:[%s1103 + $0x38] sm:$0xff]
  %v1112 = vld [vmem:[%s1103 + $0x40] sm:$0xff]
  %v1113 = vld [vmem:[%s1103 + $0x48] sm:$0xff]
  %v1114 = vld [vmem:[%s1103 + $0x50] sm:$0xff]
  %v1115 = vld [vmem:[%s1103 + $0x58] sm:$0xff]
  %v1116 = vld [vmem:[%s1103 + $0x60] sm:$0xff]
  %v1117 = vld [vmem:[%s1103 + $0x68] sm:$0xff]
  %v1118 = vld [vmem:[%s1103 + $0x70] sm:$0xff]
  %v1119 = vld [vmem:[%s1103 + $0x78] sm:$0xff]
  %v1120 = vld [vmem:[%s1103 + $0x80] sm:$0xff]
  %v1121 = vld [vmem:[%s1103 + $0x88] sm:$0xff]
  %v1122 = vld [vmem:[%s1103 + $0x90] sm:$0xff]
  %v1123 = vld [vmem:[%s1103 + $0x98] sm:$0xff]
  %v1124 = vld [vmem:[%s1103 + $0xa0] sm:$0xff]
  %v1125 = vld [vmem:[%s1103 + $0xa8] sm:$0xff]
  %v1126 = vld [vmem:[%s1103 + $0xb0] sm:$0xff]
  %v1127 = vld [vmem:[%s1103 + $0xb8] sm:$0xff]
  %v1128 = vld [vmem:[%s1103 + $0xc0] sm:$0xff]
  %v1129 = vld [vmem:[%s1103 + $0xc8] sm:$0xff]
  %v1130 = vld [vmem:[%s1103 + $0xd0] sm:$0xff]
  %v1131 = vld [vmem:[%s1103 + $0xd8] sm:$0xff]
  %v1132 = vld [vmem:[%s1103 + $0xe0] sm:$0xff]
  %v1133 = vld [vmem:[%s1103 + $0xe8] sm:$0xff]
  %v1134 = vld [vmem:[%s1103 + $0xf0] sm:$0xff]
  %v1135 = vld [vmem:[%s1103 + $0xf8] sm:$0xff]
  %1152 = vrot.lane.b32.xlu0 %v895, 124
  %v1153 = vpop.permute.xlu0 %1152
  %1154 = vrot.lane.b32.xlu0 %v897, 124
  %v1155 = vpop.permute.xlu0 %1154
  %1156 = vrot.lane.b32.xlu0 %v901, 124
  %v1157 = vpop.permute.xlu0 %1156
  %1158 = vrot.lane.b32.xlu0 %v903, 124
  %v1159 = vpop.permute.xlu0 %1158
  %1160 = vrot.lane.b32.xlu0 %v907, 124
  %v1161 = vpop.permute.xlu0 %1160
  %1162 = vrot.lane.b32.xlu0 %v909, 124
  %v1163 = vpop.permute.xlu0 %1162
  %1164 = vrot.lane.b32.xlu0 %v913, 124
  %v1165 = vpop.permute.xlu0 %1164
  %1166 = vrot.lane.b32.xlu0 %v915, 124
  %v1167 = vpop.permute.xlu0 %1166
  %1168 = vrot.lane.b32.xlu0 %v919, 124
  %v1169 = vpop.permute.xlu0 %1168
  %1170 = vrot.lane.b32.xlu0 %v921, 124
  %v1171 = vpop.permute.xlu0 %1170
  %1172 = vrot.lane.b32.xlu0 %v925, 124
  %v1173 = vpop.permute.xlu0 %1172
  %1174 = vrot.lane.b32.xlu0 %v927, 124
  %v1175 = vpop.permute.xlu0 %1174
  %1176 = vrot.lane.b32.xlu0 %v931, 124
  %v1177 = vpop.permute.xlu0 %1176
  %1178 = vrot.lane.b32.xlu0 %v933, 124
  %v1179 = vpop.permute.xlu0 %1178
  %1180 = vrot.lane.b32.xlu0 %v937, 124
  %v1181 = vpop.permute.xlu0 %1180
  %1182 = vrot.lane.b32.xlu0 %v939, 124
  %v1183 = vpop.permute.xlu0 %1182
  %v1184 = vsel %vm341, %v1153, %v1155
  %v1185 = vsel %vm341, %v1157, %v1159
  %v1186 = vsel %vm341, %v1161, %v1163
  %v1187 = vsel %vm341, %v1165, %v1167
  %v1188 = vsel %vm341, %v1169, %v1171
  %v1189 = vsel %vm341, %v1173, %v1175
  %v1190 = vsel %vm341, %v1177, %v1179
  %v1191 = vsel %vm341, %v1181, %v1183
  %1200 = vmatprep.subr.mxu0 %v1105
  %1201 = vmatpush1.msra.mxu0 %v1104
  %1202 = vmatprep.subr.mxu0 %v1107
  %1203 = vmatpush1.msra.mxu0 %v1106
  %1204 = vmatprep.subr.mxu0 %v1109
  %1205 = vmatpush1.msra.mxu0 %v1108
  %1206 = vmatprep.subr.mxu0 %v1111
  %1207 = vmatpush1.msra.mxu0 %v1110
  %1208 = vmatprep.subr.mxu0 %v1113
  %1209 = vmatpush1.msra.mxu0 %v1112
  %1210 = vmatprep.subr.mxu0 %v1115
  %1211 = vmatpush1.msra.mxu0 %v1114
  %1212 = vmatprep.subr.mxu0 %v1117
  %1213 = vmatpush1.msra.mxu0 %v1116
  %1214 = vmatprep.subr.mxu0 %v1119
  %1215 = vmatpush1.msra.mxu0 %v1118
  %1216 = vmatprep.subr.mxu0 %v1121
  %1217 = vmatpush1.msra.mxu0 %v1120
  %1218 = vmatprep.subr.mxu0 %v1123
  %1219 = vmatpush1.msra.mxu0 %v1122
  %1220 = vmatprep.subr.mxu0 %v1125
  %1221 = vmatpush1.msra.mxu0 %v1124
  %1222 = vmatprep.subr.mxu0 %v1127
  %1223 = vmatpush1.msra.mxu0 %v1126
  %1224 = vmatprep.subr.mxu0 %v1129
  %1225 = vmatpush1.msra.mxu0 %v1128
  %1226 = vmatprep.subr.mxu0 %v1131
  %1227 = vmatpush1.msra.mxu0 %v1130
  %1228 = vmatprep.subr.mxu0 %v1133
  %1229 = vmatpush1.msra.mxu0 %v1132
  %1230 = vmatprep.subr.mxu0 %v1135
  %1231 = vmatpush1.msra.mxu0 %v1134
  %1232 = vmatprep.subr.mxu0 0.0
  %1233 = vmatpush1.msra.mxu0 0.0
  %1234 = vmatprep.subr.mxu0 0.0
  %1235 = vmatpush1.msra.mxu0 0.0
  %1236 = vmatprep.subr.mxu0 0.0
  %1237 = vmatpush1.msra.mxu0 0.0
  %1238 = vmatprep.subr.mxu0 0.0
  %1239 = vmatpush1.msra.mxu0 0.0
  %1240 = vmatprep.subr.mxu0 0.0
  %1241 = vmatpush1.msra.mxu0 0.0
  %1242 = vmatprep.subr.mxu0 0.0
  %1243 = vmatpush1.msra.mxu0 0.0
  %1244 = vmatprep.subr.mxu0 0.0
  %1245 = vmatpush1.msra.mxu0 0.0
  %1246 = vmatprep.subr.mxu0 0.0
  %1247 = vmatpush1.msra.mxu0 0.0
  %1248 = vmatprep.subr.mxu0 0.0
  %1249 = vmatpush1.msra.mxu0 0.0
  %1250 = vmatprep.subr.mxu0 0.0
  %1251 = vmatpush1.msra.mxu0 0.0
  %1252 = vmatprep.subr.mxu0 0.0
  %1253 = vmatpush1.msra.mxu0 0.0
  %1254 = vmatprep.subr.mxu0 0.0
  %1255 = vmatpush1.msra.mxu0 0.0
  %1256 = vmatprep.subr.mxu0 0.0
  %1257 = vmatpush1.msra.mxu0 0.0
  %1258 = vmatprep.subr.mxu0 0.0
  %1259 = vmatpush1.msra.mxu0 0.0
  %1260 = vmatprep.subr.mxu0 0.0
  %1261 = vmatpush1.msra.mxu0 0.0
  %1262 = vmatprep.subr.mxu0 0.0
  %1263 = vmatpush1.msra.mxu0 0.0
  %1264 = vmatprep.mubr.f32.mxu0 0.0
  %1265 = vmatmul.mubr.f32.gmra.mrb[0].mxu0 %v1184
  %v1266 = vpop.f32.mrb[0].mxu0
  %v1267 = vadd.f32 0.0, %v1266
  %v1268 = vpop.f32.mrb[0].mxu0
  %v1269 = vadd.f32 0.0, %v1268
  %1270 = vmatprep.mubr.f32.mxu0 0.0
  %1271 = vmatmul.mubr.f32.gmra.mrb[0].mxu0 %v1185
  %v1272 = vpop.f32.mrb[0].mxu0
  %v1273 = vadd.f32 0.0, %v1272
  %v1274 = vpop.f32.mrb[0].mxu0
  %v1275 = vadd.f32 0.0, %v1274
  %1276 = vmatprep.mubr.f32.mxu0 0.0
  %1277 = vmatmul.mubr.f32.gmra.mrb[0].mxu0 %v1186
  %v1278 = vpop.f32.mrb[0].mxu0
  %v1279 = vadd.f32 0.0, %v1278
  %v1280 = vpop.f32.mrb[0].mxu0
  %v1281 = vadd.f32 0.0, %v1280
  %1282 = vmatprep.mubr.f32.mxu0 0.0
  %1283 = vmatmul.mubr.f32.gmra.mrb[0].mxu0 %v1187
  %v1284 = vpop.f32.mrb[0].mxu0
  %v1285 = vadd.f32 0.0, %v1284
  %v1286 = vpop.f32.mrb[0].mxu0
  %v1287 = vadd.f32 0.0, %v1286
  %1288 = vmatprep.mubr.f32.mxu0 0.0
  %1289 = vmatmul.mubr.f32.gmra.mrb[0].mxu0 %v1188
  %v1290 = vpop.f32.mrb[0].mxu0
  %v1291 = vadd.f32 0.0, %v1290
  %v1292 = vpop.f32.mrb[0].mxu0
  %v1293 = vadd.f32 0.0, %v1292
  %1294 = vmatprep.mubr.f32.mxu0 0.0
  %1295 = vmatmul.mubr.f32.gmra.mrb[0].mxu0 %v1189
  %v1296 = vpop.f32.mrb[0].mxu0
  %v1297 = vadd.f32 0.0, %v1296
  %v1298 = vpop.f32.mrb[0].mxu0
  %v1299 = vadd.f32 0.0, %v1298
  %1300 = vmatprep.mubr.f32.mxu0 0.0
  %1301 = vmatmul.mubr.f32.gmra.mrb[0].mxu0 %v1190
  %v1302 = vpop.f32.mrb[0].mxu0
  %v1303 = vadd.f32 0.0, %v1302
  %v1304 = vpop.f32.mrb[0].mxu0
  %v1305 = vadd.f32 0.0, %v1304
  %1306 = vmatprep.mubr.f32.mxu0 0.0
  %1307 = vmatmul.mubr.f32.gmra.mrb[0].mxu0 %v1191
  %v1308 = vpop.f32.mrb[0].mxu0
  %v1309 = vadd.f32 0.0, %v1308
  %v1310 = vpop.f32.mrb[0].mxu0
  %v1311 = vadd.f32 0.0, %v1310
  %1312 = vdwg.mxu0
  %v1313 = vadd.f32 %v1087, %v1267
  %v1314 = vadd.f32 %v1088, %v1269
  %v1315 = vadd.f32 %v1089, %v1273
  %v1316 = vadd.f32 %v1090, %v1275
  %v1317 = vadd.f32 %v1091, %v1279
  %v1318 = vadd.f32 %v1092, %v1281
  %v1319 = vadd.f32 %v1093, %v1285
  %v1320 = vadd.f32 %v1094, %v1287
  %v1321 = vadd.f32 %v1095, %v1291
  %v1322 = vadd.f32 %v1096, %v1293
  %v1323 = vadd.f32 %v1097, %v1297
  %v1324 = vadd.f32 %v1098, %v1299
  %v1325 = vadd.f32 %v1099, %v1303
  %v1326 = vadd.f32 %v1100, %v1305
  %v1327 = vadd.f32 %v1101, %v1309
  %v1328 = vadd.f32 %v1102, %v1311
  %s1329 = scalar_lea.vmem %s9, 1280
  %v1330 = vld [vmem:[%s1329] sm:$0xff]
  %v1331 = vld [vmem:[%s1329 + $0x8] sm:$0xff]
  %v1332 = vld [vmem:[%s1329 + $0x10] sm:$0xff]
  %v1333 = vld [vmem:[%s1329 + $0x18] sm:$0xff]
  %v1334 = vld [vmem:[%s1329 + $0x20] sm:$0xff]
  %v1335 = vld [vmem:[%s1329 + $0x28] sm:$0xff]
  %v1336 = vld [vmem:[%s1329 + $0x30] sm:$0xff]
  %v1337 = vld [vmem:[%s1329 + $0x38] sm:$0xff]
  %v1338 = vld [vmem:[%s1329 + $0x40] sm:$0xff]
  %v1339 = vld [vmem:[%s1329 + $0x48] sm:$0xff]
  %v1340 = vld [vmem:[%s1329 + $0x50] sm:$0xff]
  %v1341 = vld [vmem:[%s1329 + $0x58] sm:$0xff]
  %v1342 = vld [vmem:[%s1329 + $0x60] sm:$0xff]
  %v1343 = vld [vmem:[%s1329 + $0x68] sm:$0xff]
  %v1344 = vld [vmem:[%s1329 + $0x70] sm:$0xff]
  %v1345 = vld [vmem:[%s1329 + $0x78] sm:$0xff]
  %v1346 = vld [vmem:[%s1329 + $0x80] sm:$0xff]
  %v1347 = vld [vmem:[%s1329 + $0x88] sm:$0xff]
  %v1348 = vld [vmem:[%s1329 + $0x90] sm:$0xff]
  %v1349 = vld [vmem:[%s1329 + $0x98] sm:$0xff]
  %v1350 = vld [vmem:[%s1329 + $0xa0] sm:$0xff]
  %v1351 = vld [vmem:[%s1329 + $0xa8] sm:$0xff]
  %v1352 = vld [vmem:[%s1329 + $0xb0] sm:$0xff]
  %v1353 = vld [vmem:[%s1329 + $0xb8] sm:$0xff]
  %v1354 = vld [vmem:[%s1329 + $0xc0] sm:$0xff]
  %v1355 = vld [vmem:[%s1329 + $0xc8] sm:$0xff]
  %v1356 = vld [vmem:[%s1329 + $0xd0] sm:$0xff]
  %v1357 = vld [vmem:[%s1329 + $0xd8] sm:$0xff]
  %v1358 = vld [vmem:[%s1329 + $0xe0] sm:$0xff]
  %v1359 = vld [vmem:[%s1329 + $0xe8] sm:$0xff]
  %v1360 = vld [vmem:[%s1329 + $0xf0] sm:$0xff]
  %v1361 = vld [vmem:[%s1329 + $0xf8] sm:$0xff]
  %1362 = vrot.lane.b32.xlu0 %v895, 120
  %v1363 = vpop.permute.xlu0 %1362
  %1364 = vrot.lane.b32.xlu0 %v897, 120
  %v1365 = vpop.permute.xlu0 %1364
  %1366 = vrot.lane.b32.xlu0 %v901, 120
  %v1367 = vpop.permute.xlu0 %1366
  %1368 = vrot.lane.b32.xlu0 %v903, 120
  %v1369 = vpop.permute.xlu0 %1368
  %1370 = vrot.lane.b32.xlu0 %v907, 120
  %v1371 = vpop.permute.xlu0 %1370
  %1372 = vrot.lane.b32.xlu0 %v909, 120
  %v1373 = vpop.permute.xlu0 %1372
  %1374 = vrot.lane.b32.xlu0 %v913, 120
  %v1375 = vpop.permute.xlu0 %1374
  %1376 = vrot.lane.b32.xlu0 %v915, 120
  %v1377 = vpop.permute.xlu0 %1376
  %1378 = vrot.lane.b32.xlu0 %v919, 120
  %v1379 = vpop.permute.xlu0 %1378
  %1380 = vrot.lane.b32.xlu0 %v921, 120
  %v1381 = vpop.permute.xlu0 %1380
  %1382 = vrot.lane.b32.xlu0 %v925, 120
  %v1383 = vpop.permute.xlu0 %1382
  %1384 = vrot.lane.b32.xlu0 %v927, 120
  %v1385 = vpop.permute.xlu0 %1384
  %1386 = vrot.lane.b32.xlu0 %v931, 120
  %v1387 = vpop.permute.xlu0 %1386
  %1388 = vrot.lane.b32.xlu0 %v933, 120
  %v1389 = vpop.permute.xlu0 %1388
  %1390 = vrot.lane.b32.xlu0 %v937, 120
  %v1391 = vpop.permute.xlu0 %1390
  %1392 = vrot.lane.b32.xlu0 %v939, 120
  %v1393 = vpop.permute.xlu0 %1392
  %v1394 = vsel %vm649, %v1363, %v1365
  %v1395 = vsel %vm649, %v1367, %v1369
  %v1396 = vsel %vm649, %v1371, %v1373
  %v1397 = vsel %vm649, %v1375, %v1377
  %v1398 = vsel %vm649, %v1379, %v1381
  %v1399 = vsel %vm649, %v1383, %v1385
  %v1400 = vsel %vm649, %v1387, %v1389
  %v1401 = vsel %vm649, %v1391, %v1393
  %1410 = vmatprep.subr.mxu0 %v1331
  %1411 = vmatpush1.msra.mxu0 %v1330
  %1412 = vmatprep.subr.mxu0 %v1333
  %1413 = vmatpush1.msra.mxu0 %v1332
  %1414 = vmatprep.subr.mxu0 %v1335
  %1415 = vmatpush1.msra.mxu0 %v1334
  %1416 = vmatprep.subr.mxu0 %v1337
  %1417 = vmatpush1.msra.mxu0 %v1336
  %1418 = vmatprep.subr.mxu0 %v1339
  %1419 = vmatpush1.msra.mxu0 %v1338
  %1420 = vmatprep.subr.mxu0 %v1341
  %1421 = vmatpush1.msra.mxu0 %v1340
  %1422 = vmatprep.subr.mxu0 %v1343
  %1423 = vmatpush1.msra.mxu0 %v1342
  %1424 = vmatprep.subr.mxu0 %v1345
  %1425 = vmatpush1.msra.mxu0 %v1344
  %1426 = vmatprep.subr.mxu0 %v1347
  %1427 = vmatpush1.msra.mxu0 %v1346
  %1428 = vmatprep.subr.mxu0 %v1349
  %1429 = vmatpush1.msra.mxu0 %v1348
  %1430 = vmatprep.subr.mxu0 %v1351
  %1431 = vmatpush1.msra.mxu0 %v1350
  %1432 = vmatprep.subr.mxu0 %v1353
  %1433 = vmatpush1.msra.mxu0 %v1352
  %1434 = vmatprep.subr.mxu0 %v1355
  %1435 = vmatpush1.msra.mxu0 %v1354
  %1436 = vmatprep.subr.mxu0 %v1357
  %1437 = vmatpush1.msra.mxu0 %v1356
  %1438 = vmatprep.subr.mxu0 %v1359
  %1439 = vmatpush1.msra.mxu0 %v1358
  %1440 = vmatprep.subr.mxu0 %v1361
  %1441 = vmatpush1.msra.mxu0 %v1360
  %1442 = vmatprep.subr.mxu0 0.0
  %1443 = vmatpush1.msra.mxu0 0.0
  %1444 = vmatprep.subr.mxu0 0.0
  %1445 = vmatpush1.msra.mxu0 0.0
  %1446 = vmatprep.subr.mxu0 0.0
  %1447 = vmatpush1.msra.mxu0 0.0
  %1448 = vmatprep.subr.mxu0 0.0
  %1449 = vmatpush1.msra.mxu0 0.0
  %1450 = vmatprep.subr.mxu0 0.0
  %1451 = vmatpush1.msra.mxu0 0.0
  %1452 = vmatprep.subr.mxu0 0.0
  %1453 = vmatpush1.msra.mxu0 0.0
  %1454 = vmatprep.subr.mxu0 0.0
  %1455 = vmatpush1.msra.mxu0 0.0
  %1456 = vmatprep.subr.mxu0 0.0
  %1457 = vmatpush1.msra.mxu0 0.0
  %1458 = vmatprep.subr.mxu0 0.0
  %1459 = vmatpush1.msra.mxu0 0.0
  %1460 = vmatprep.subr.mxu0 0.0
  %1461 = vmatpush1.msra.mxu0 0.0
  %1462 = vmatprep.subr.mxu0 0.0
  %1463 = vmatpush1.msra.mxu0 0.0
  %1464 = vmatprep.subr.mxu0 0.0
  %1465 = vmatpush1.msra.mxu0 0.0
  %1466 = vmatprep.subr.mxu0 0.0
  %1467 = vmatpush1.msra.mxu0 0.0
  %1468 = vmatprep.subr.mxu0 0.0
  %1469 = vmatpush1.msra.mxu0 0.0
  %1470 = vmatprep.subr.mxu0 0.0
  %1471 = vmatpush1.msra.mxu0 0.0
  %1472 = vmatprep.subr.mxu0 0.0
  %1473 = vmatpush1.msra.mxu0 0.0
  %1474 = vmatprep.mubr.f32.mxu0 0.0
  %1475 = vmatmul.mubr.f32.gmra.mrb[0].mxu0 %v1394
  %v1476 = vpop.f32.mrb[0].mxu0
  %v1477 = vadd.f32 0.0, %v1476
  %v1478 = vpop.f32.mrb[0].mxu0
  %v1479 = vadd.f32 0.0, %v1478
  %1480 = vmatprep.mubr.f32.mxu0 0.0
  %1481 = vmatmul.mubr.f32.gmra.mrb[0].mxu0 %v1395
  %v1482 = vpop.f32.mrb[0].mxu0
  %v1483 = vadd.f32 0.0, %v1482
  %v1484 = vpop.f32.mrb[0].mxu0
  %v1485 = vadd.f32 0.0, %v1484
  %1486 = vmatprep.mubr.f32.mxu0 0.0
  %1487 = vmatmul.mubr.f32.gmra.mrb[0].mxu0 %v1396
  %v1488 = vpop.f32.mrb[0].mxu0
  %v1489 = vadd.f32 0.0, %v1488
  %v1490 = vpop.f32.mrb[0].mxu0
  %v1491 = vadd.f32 0.0, %v1490
  %1492 = vmatprep.mubr.f32.mxu0 0.0
  %1493 = vmatmul.mubr.f32.gmra.mrb[0].mxu0 %v1397
  %v1494 = vpop.f32.mrb[0].mxu0
  %v1495 = vadd.f32 0.0, %v1494
  %v1496 = vpop.f32.mrb[0].mxu0
  %v1497 = vadd.f32 0.0, %v1496
  %1498 = vmatprep.mubr.f32.mxu0 0.0
  %1499 = vmatmul.mubr.f32.gmra.mrb[0].mxu0 %v1398
  %v1500 = vpop.f32.mrb[0].mxu0
  %v1501 = vadd.f32 0.0, %v1500
  %v1502 = vpop.f32.mrb[0].mxu0
  %v1503 = vadd.f32 0.0, %v1502
  %1504 = vmatprep.mubr.f32.mxu0 0.0
  %1505 = vmatmul.mubr.f32.gmra.mrb[0].mxu0 %v1399
  %v1506 = vpop.f32.mrb[0].mxu0
  %v1507 = vadd.f32 0.0, %v1506
  %v1508 = vpop.f32.mrb[0].mxu0
  %v1509 = vadd.f32 0.0, %v1508
  %1510 = vmatprep.mubr.f32.mxu0 0.0
  %1511 = vmatmul.mubr.f32.gmra.mrb[0].mxu0 %v1400
  %v1512 = vpop.f32.mrb[0].mxu0
  %v1513 = vadd.f32 0.0, %v1512
  %v1514 = vpop.f32.mrb[0].mxu0
  %v1515 = vadd.f32 0.0, %v1514
  %1516 = vmatprep.mubr.f32.mxu0 0.0
  %1517 = vmatmul.mubr.f32.gmra.mrb[0].mxu0 %v1401
  %v1518 = vpop.f32.mrb[0].mxu0
  %v1519 = vadd.f32 0.0, %v1518
  %v1520 = vpop.f32.mrb[0].mxu0
  %v1521 = vadd.f32 0.0, %v1520
  %1522 = vdwg.mxu0
  %v1523 = vadd.f32 %v1313, %v1477
  %v1524 = vadd.f32 %v1314, %v1479
  %v1525 = vadd.f32 %v1315, %v1483
  %v1526 = vadd.f32 %v1316, %v1485
  %v1527 = vadd.f32 %v1317, %v1489
  %v1528 = vadd.f32 %v1318, %v1491
  %v1529 = vadd.f32 %v1319, %v1495
  %v1530 = vadd.f32 %v1320, %v1497
  %v1531 = vadd.f32 %v1321, %v1501
  %v1532 = vadd.f32 %v1322, %v1503
  %v1533 = vadd.f32 %v1323, %v1507
  %v1534 = vadd.f32 %v1324, %v1509
  %v1535 = vadd.f32 %v1325, %v1513
  %v1536 = vadd.f32 %v1326, %v1515
  %v1537 = vadd.f32 %v1327, %v1519
  %v1538 = vadd.f32 %v1328, %v1521
  %s1539 = scalar_lea.vmem %s1, 128
  %v1540 = vld [vmem:[%s1539] sm:$0xff]
  %v1541 = vld [vmem:[%s1539 + $0x8] sm:$0xff]
  %v1542 = vld [vmem:[%s1539 + $0x10] sm:$0xff]
  %v1543 = vld [vmem:[%s1539 + $0x18] sm:$0xff]
  %v1544 = vld [vmem:[%s1539 + $0x20] sm:$0xff]
  %v1545 = vld [vmem:[%s1539 + $0x28] sm:$0xff]
  %v1546 = vld [vmem:[%s1539 + $0x30] sm:$0xff]
  %v1547 = vld [vmem:[%s1539 + $0x38] sm:$0xff]
  %v1549 = vsel %vm90, %v1540, 0
  %v1552 = vsel %vm90, %v1541, 0
  %v1555 = vsel %vm90, %v1542, 0
  %v1558 = vsel %vm90, %v1543, 0
  %v1561 = vsel %vm90, %v1544, 0
  %v1564 = vsel %vm90, %v1545, 0
  %v1567 = vsel %vm90, %v1546, 0
  %v1570 = vsel %vm90, %v1547, 0
  %1572 = vmatprep.subr.mxu0 %v63
  %1573 = vmatpush1.msra.mxu0 %v62
  %1574 = vmatprep.subr.mxu0 %v65
  %1575 = vmatpush1.msra.mxu0 %v64
  %1576 = vmatprep.subr.mxu0 %v67
  %1577 = vmatpush1.msra.mxu0 %v66
  %1578 = vmatprep.subr.mxu0 %v69
  %1579 = vmatpush1.msra.mxu0 %v68
  %1580 = vmatprep.subr.mxu0 %v71
  %1581 = vmatpush1.msra.mxu0 %v70
  %1582 = vmatprep.subr.mxu0 %v73
  %1583 = vmatpush1.msra.mxu0 %v72
  %1584 = vmatprep.subr.mxu0 %v75
  %1585 = vmatpush1.msra.mxu0 %v74
  %1586 = vmatprep.subr.mxu0 %v77
  %1587 = vmatpush1.msra.mxu0 %v76
  %1588 = vmatprep.subr.mxu0 %v79
  %1589 = vmatpush1.msra.mxu0 %v78
  %1590 = vmatprep.subr.mxu0 %v81
  %1591 = vmatpush1.msra.mxu0 %v80
  %1592 = vmatprep.subr.mxu0 0.0
  %1593 = vmatpush1.msra.mxu0 0.0
  %1594 = vmatprep.subr.mxu0 0.0
  %1595 = vmatpush1.msra.mxu0 0.0
  %1596 = vmatprep.subr.mxu0 0.0
  %1597 = vmatpush1.msra.mxu0 0.0
  %1598 = vmatprep.subr.mxu0 0.0
  %1599 = vmatpush1.msra.mxu0 0.0
  %1600 = vmatprep.subr.mxu0 0.0
  %1601 = vmatpush1.msra.mxu0 0.0
  %1602 = vmatprep.subr.mxu0 0.0
  %1603 = vmatpush1.msra.mxu0 0.0
  %1604 = vmatprep.subr.mxu0 0.0
  %1605 = vmatpush1.msra.mxu0 0.0
  %1606 = vmatprep.subr.mxu0 0.0
  %1607 = vmatpush1.msra.mxu0 0.0
  %1608 = vmatprep.subr.mxu0 0.0
  %1609 = vmatpush1.msra.mxu0 0.0
  %1610 = vmatprep.subr.mxu0 0.0
  %1611 = vmatpush1.msra.mxu0 0.0
  %1612 = vmatprep.subr.mxu0 0.0
  %1613 = vmatpush1.msra.mxu0 0.0
  %1614 = vmatprep.subr.mxu0 0.0
  %1615 = vmatpush1.msra.mxu0 0.0
  %1616 = vmatprep.subr.mxu0 0.0
  %1617 = vmatpush1.msra.mxu0 0.0
  %1618 = vmatprep.subr.mxu0 0.0
  %1619 = vmatpush1.msra.mxu0 0.0
  %1620 = vmatprep.subr.mxu0 0.0
  %1621 = vmatpush1.msra.mxu0 0.0
  %1622 = vmatprep.subr.mxu0 0.0
  %1623 = vmatpush1.msra.mxu0 0.0
  %1624 = vmatprep.subr.mxu0 0.0
  %1625 = vmatpush1.msra.mxu0 0.0
  %1626 = vmatprep.subr.mxu0 0.0
  %1627 = vmatpush1.msra.mxu0 0.0
  %1628 = vmatprep.subr.mxu0 0.0
  %1629 = vmatpush1.msra.mxu0 0.0
  %1630 = vmatprep.subr.mxu0 0.0
  %1631 = vmatpush1.msra.mxu0 0.0
  %1632 = vmatprep.subr.mxu0 0.0
  %1633 = vmatpush1.msra.mxu0 0.0
  %1634 = vmatprep.subr.mxu0 0.0
  %1635 = vmatpush1.msra.mxu0 0.0
  %1636 = vmatprep.mubr.f32.mxu0 0.0
  %1637 = vmatmul.mubr.f32.gmra.mrb[0].mxu0 %v1549
  %v1638 = vpop.f32.mrb[0].mxu0
  %v1639 = vadd.f32 0.0, %v1638
  %v1640 = vpop.f32.mrb[0].mxu0
  %v1641 = vadd.f32 0.0, %v1640
  %1642 = vmatprep.mubr.f32.mxu0 0.0
  %1643 = vmatmul.mubr.f32.gmra.mrb[0].mxu0 %v1552
  %v1644 = vpop.f32.mrb[0].mxu0
  %v1645 = vadd.f32 0.0, %v1644
  %v1646 = vpop.f32.mrb[0].mxu0
  %v1647 = vadd.f32 0.0, %v1646
  %1648 = vmatprep.mubr.f32.mxu0 0.0
  %1649 = vmatmul.mubr.f32.gmra.mrb[0].mxu0 %v1555
  %v1650 = vpop.f32.mrb[0].mxu0
  %v1651 = vadd.f32 0.0, %v1650
  %v1652 = vpop.f32.mrb[0].mxu0
  %v1653 = vadd.f32 0.0, %v1652
  %1654 = vmatprep.mubr.f32.mxu0 0.0
  %1655 = vmatmul.mubr.f32.gmra.mrb[0].mxu0 %v1558
  %v1656 = vpop.f32.mrb[0].mxu0
  %v1657 = vadd.f32 0.0, %v1656
  %v1658 = vpop.f32.mrb[0].mxu0
  %v1659 = vadd.f32 0.0, %v1658
  %1660 = vmatprep.mubr.f32.mxu0 0.0
  %1661 = vmatmul.mubr.f32.gmra.mrb[0].mxu0 %v1561
  %v1662 = vpop.f32.mrb[0].mxu0
  %v1663 = vadd.f32 0.0, %v1662
  %v1664 = vpop.f32.mrb[0].mxu0
  %v1665 = vadd.f32 0.0, %v1664
  %1666 = vmatprep.mubr.f32.mxu0 0.0
  %1667 = vmatmul.mubr.f32.gmra.mrb[0].mxu0 %v1564
  %v1668 = vpop.f32.mrb[0].mxu0
  %v1669 = vadd.f32 0.0, %v1668
  %v1670 = vpop.f32.mrb[0].mxu0
  %v1671 = vadd.f32 0.0, %v1670
  %1672 = vmatprep.mubr.f32.mxu0 0.0
  %1673 = vmatmul.mubr.f32.gmra.mrb[0].mxu0 %v1567
  %v1674 = vpop.f32.mrb[0].mxu0
  %v1675 = vadd.f32 0.0, %v1674
  %v1676 = vpop.f32.mrb[0].mxu0
  %v1677 = vadd.f32 0.0, %v1676
  %1678 = vmatprep.mubr.f32.mxu0 0.0
  %1679 = vmatmul.mubr.f32.gmra.mrb[0].mxu0 %v1570
  %v1680 = vpop.f32.mrb[0].mxu0
  %v1681 = vadd.f32 0.0, %v1680
  %v1682 = vpop.f32.mrb[0].mxu0
  %v1683 = vadd.f32 0.0, %v1682
  %1684 = vdwg.mxu0
  %s1685 = scalar_lea.vmem %s9, 1536
  %v1686 = vld [vmem:[%s1685] sm:$0xff]
  %v1687 = vld [vmem:[%s1685 + $0x8] sm:$0xff]
  %v1688 = vld [vmem:[%s1685 + $0x10] sm:$0xff]
  %v1689 = vld [vmem:[%s1685 + $0x18] sm:$0xff]
  %v1690 = vld [vmem:[%s1685 + $0x20] sm:$0xff]
  %v1691 = vld [vmem:[%s1685 + $0x28] sm:$0xff]
  %v1692 = vld [vmem:[%s1685 + $0x30] sm:$0xff]
  %v1693 = vld [vmem:[%s1685 + $0x38] sm:$0xff]
  %v1694 = vld [vmem:[%s1685 + $0x40] sm:$0xff]
  %v1695 = vld [vmem:[%s1685 + $0x48] sm:$0xff]
  %v1696 = vld [vmem:[%s1685 + $0x50] sm:$0xff]
  %v1697 = vld [vmem:[%s1685 + $0x58] sm:$0xff]
  %v1698 = vld [vmem:[%s1685 + $0x60] sm:$0xff]
  %v1699 = vld [vmem:[%s1685 + $0x68] sm:$0xff]
  %v1700 = vld [vmem:[%s1685 + $0x70] sm:$0xff]
  %v1701 = vld [vmem:[%s1685 + $0x78] sm:$0xff]
  %v1702 = vld [vmem:[%s1685 + $0x80] sm:$0xff]
  %v1703 = vld [vmem:[%s1685 + $0x88] sm:$0xff]
  %v1704 = vld [vmem:[%s1685 + $0x90] sm:$0xff]
  %v1705 = vld [vmem:[%s1685 + $0x98] sm:$0xff]
  %v1706 = vld [vmem:[%s1685 + $0xa0] sm:$0xff]
  %v1707 = vld [vmem:[%s1685 + $0xa8] sm:$0xff]
  %v1708 = vld [vmem:[%s1685 + $0xb0] sm:$0xff]
  %v1709 = vld [vmem:[%s1685 + $0xb8] sm:$0xff]
  %v1710 = vld [vmem:[%s1685 + $0xc0] sm:$0xff]
  %v1711 = vld [vmem:[%s1685 + $0xc8] sm:$0xff]
  %v1712 = vld [vmem:[%s1685 + $0xd0] sm:$0xff]
  %v1713 = vld [vmem:[%s1685 + $0xd8] sm:$0xff]
  %v1714 = vld [vmem:[%s1685 + $0xe0] sm:$0xff]
  %v1715 = vld [vmem:[%s1685 + $0xe8] sm:$0xff]
  %v1716 = vld [vmem:[%s1685 + $0xf0] sm:$0xff]
  %v1717 = vld [vmem:[%s1685 + $0xf8] sm:$0xff]
  %1718 = vmatprep.subr.mxu0 %v1687
  %1719 = vmatpush1.msra.mxu0 %v1686
  %1720 = vmatprep.subr.mxu0 %v1689
  %1721 = vmatpush1.msra.mxu0 %v1688
  %1722 = vmatprep.subr.mxu0 %v1691
  %1723 = vmatpush1.msra.mxu0 %v1690
  %1724 = vmatprep.subr.mxu0 %v1693
  %1725 = vmatpush1.msra.mxu0 %v1692
  %1726 = vmatprep.subr.mxu0 %v1695
  %1727 = vmatpush1.msra.mxu0 %v1694
  %1728 = vmatprep.subr.mxu0 %v1697
  %1729 = vmatpush1.msra.mxu0 %v1696
  %1730 = vmatprep.subr.mxu0 %v1699
  %1731 = vmatpush1.msra.mxu0 %v1698
  %1732 = vmatprep.subr.mxu0 %v1701
  %1733 = vmatpush1.msra.mxu0 %v1700
  %1734 = vmatprep.subr.mxu0 %v1703
  %1735 = vmatpush1.msra.mxu0 %v1702
  %1736 = vmatprep.subr.mxu0 %v1705
  %1737 = vmatpush1.msra.mxu0 %v1704
  %1738 = vmatprep.subr.mxu0 %v1707
  %1739 = vmatpush1.msra.mxu0 %v1706
  %1740 = vmatprep.subr.mxu0 %v1709
  %1741 = vmatpush1.msra.mxu0 %v1708
  %1742 = vmatprep.subr.mxu0 %v1711
  %1743 = vmatpush1.msra.mxu0 %v1710
  %1744 = vmatprep.subr.mxu0 %v1713
  %1745 = vmatpush1.msra.mxu0 %v1712
  %1746 = vmatprep.subr.mxu0 %v1715
  %1747 = vmatpush1.msra.mxu0 %v1714
  %1748 = vmatprep.subr.mxu0 %v1717
  %1749 = vmatpush1.msra.mxu0 %v1716
  %1750 = vmatprep.subr.mxu0 0.0
  %1751 = vmatpush1.msra.mxu0 0.0
  %1752 = vmatprep.subr.mxu0 0.0
  %1753 = vmatpush1.msra.mxu0 0.0
  %1754 = vmatprep.subr.mxu0 0.0
  %1755 = vmatpush1.msra.mxu0 0.0
  %1756 = vmatprep.subr.mxu0 0.0
  %1757 = vmatpush1.msra.mxu0 0.0
  %1758 = vmatprep.subr.mxu0 0.0
  %1759 = vmatpush1.msra.mxu0 0.0
  %1760 = vmatprep.subr.mxu0 0.0
  %1761 = vmatpush1.msra.mxu0 0.0
  %1762 = vmatprep.subr.mxu0 0.0
  %1763 = vmatpush1.msra.mxu0 0.0
  %1764 = vmatprep.subr.mxu0 0.0
  %1765 = vmatpush1.msra.mxu0 0.0
  %1766 = vmatprep.subr.mxu0 0.0
  %1767 = vmatpush1.msra.mxu0 0.0
  %1768 = vmatprep.subr.mxu0 0.0
  %1769 = vmatpush1.msra.mxu0 0.0
  %1770 = vmatprep.subr.mxu0 0.0
  %1771 = vmatpush1.msra.mxu0 0.0
  %1772 = vmatprep.subr.mxu0 0.0
  %1773 = vmatpush1.msra.mxu0 0.0
  %1774 = vmatprep.subr.mxu0 0.0
  %1775 = vmatpush1.msra.mxu0 0.0
  %1776 = vmatprep.subr.mxu0 0.0
  %1777 = vmatpush1.msra.mxu0 0.0
  %1778 = vmatprep.subr.mxu0 0.0
  %1779 = vmatpush1.msra.mxu0 0.0
  %1780 = vmatprep.subr.mxu0 0.0
  %1781 = vmatpush1.msra.mxu0 0.0
  %1782 = vmatprep.mubr.f32.mxu0 0.0
  %1783 = vmatmul.mubr.f32.gmra.mrb[0].mxu0 %v1639
  %v1784 = vpop.f32.mrb[0].mxu0
  %v1785 = vadd.f32 0.0, %v1784
  %v1786 = vpop.f32.mrb[0].mxu0
  %v1787 = vadd.f32 0.0, %v1786
  %1788 = vmatprep.mubr.f32.mxu0 0.0
  %1789 = vmatmul.mubr.f32.gmra.mrb[0].mxu0 %v1645
  %v1790 = vpop.f32.mrb[0].mxu0
  %v1791 = vadd.f32 0.0, %v1790
  %v1792 = vpop.f32.mrb[0].mxu0
  %v1793 = vadd.f32 0.0, %v1792
  %1794 = vmatprep.mubr.f32.mxu0 0.0
  %1795 = vmatmul.mubr.f32.gmra.mrb[0].mxu0 %v1651
  %v1796 = vpop.f32.mrb[0].mxu0
  %v1797 = vadd.f32 0.0, %v1796
  %v1798 = vpop.f32.mrb[0].mxu0
  %v1799 = vadd.f32 0.0, %v1798
  %1800 = vmatprep.mubr.f32.mxu0 0.0
  %1801 = vmatmul.mubr.f32.gmra.mrb[0].mxu0 %v1657
  %v1802 = vpop.f32.mrb[0].mxu0
  %v1803 = vadd.f32 0.0, %v1802
  %v1804 = vpop.f32.mrb[0].mxu0
  %v1805 = vadd.f32 0.0, %v1804
  %1806 = vmatprep.mubr.f32.mxu0 0.0
  %1807 = vmatmul.mubr.f32.gmra.mrb[0].mxu0 %v1663
  %v1808 = vpop.f32.mrb[0].mxu0
  %v1809 = vadd.f32 0.0, %v1808
  %v1810 = vpop.f32.mrb[0].mxu0
  %v1811 = vadd.f32 0.0, %v1810
  %1812 = vmatprep.mubr.f32.mxu0 0.0
  %1813 = vmatmul.mubr.f32.gmra.mrb[0].mxu0 %v1669
  %v1814 = vpop.f32.mrb[0].mxu0
  %v1815 = vadd.f32 0.0, %v1814
  %v1816 = vpop.f32.mrb[0].mxu0
  %v1817 = vadd.f32 0.0, %v1816
  %1818 = vmatprep.mubr.f32.mxu0 0.0
  %1819 = vmatmul.mubr.f32.gmra.mrb[0].mxu0 %v1675
  %v1820 = vpop.f32.mrb[0].mxu0
  %v1821 = vadd.f32 0.0, %v1820
  %v1822 = vpop.f32.mrb[0].mxu0
  %v1823 = vadd.f32 0.0, %v1822
  %1824 = vmatprep.mubr.f32.mxu0 0.0
  %1825 = vmatmul.mubr.f32.gmra.mrb[0].mxu0 %v1681
  %v1826 = vpop.f32.mrb[0].mxu0
  %v1827 = vadd.f32 0.0, %v1826
  %v1828 = vpop.f32.mrb[0].mxu0
  %v1829 = vadd.f32 0.0, %v1828
  %1830 = vdwg.mxu0
  %v1831 = vadd.f32 %v1523, %v1785
  %v1832 = vadd.f32 %v1524, %v1787
  %v1833 = vadd.f32 %v1525, %v1791
  %v1834 = vadd.f32 %v1526, %v1793
  %v1835 = vadd.f32 %v1527, %v1797
  %v1836 = vadd.f32 %v1528, %v1799
  %v1837 = vadd.f32 %v1529, %v1803
  %v1838 = vadd.f32 %v1530, %v1805
  %v1839 = vadd.f32 %v1531, %v1809
  %v1840 = vadd.f32 %v1532, %v1811
  %v1841 = vadd.f32 %v1533, %v1815
  %v1842 = vadd.f32 %v1534, %v1817
  %v1843 = vadd.f32 %v1535, %v1821
  %v1844 = vadd.f32 %v1536, %v1823
  %v1845 = vadd.f32 %v1537, %v1827
  %v1846 = vadd.f32 %v1538, %v1829
  %s1847 = scalar_lea.vmem %s9, 1792
  %v1848 = vld [vmem:[%s1847] sm:$0xff]
  %v1849 = vld [vmem:[%s1847 + $0x8] sm:$0xff]
  %v1850 = vld [vmem:[%s1847 + $0x10] sm:$0xff]
  %v1851 = vld [vmem:[%s1847 + $0x18] sm:$0xff]
  %v1852 = vld [vmem:[%s1847 + $0x20] sm:$0xff]
  %v1853 = vld [vmem:[%s1847 + $0x28] sm:$0xff]
  %v1854 = vld [vmem:[%s1847 + $0x30] sm:$0xff]
  %v1855 = vld [vmem:[%s1847 + $0x38] sm:$0xff]
  %v1856 = vld [vmem:[%s1847 + $0x40] sm:$0xff]
  %v1857 = vld [vmem:[%s1847 + $0x48] sm:$0xff]
  %v1858 = vld [vmem:[%s1847 + $0x50] sm:$0xff]
  %v1859 = vld [vmem:[%s1847 + $0x58] sm:$0xff]
  %v1860 = vld [vmem:[%s1847 + $0x60] sm:$0xff]
  %v1861 = vld [vmem:[%s1847 + $0x68] sm:$0xff]
  %v1862 = vld [vmem:[%s1847 + $0x70] sm:$0xff]
  %v1863 = vld [vmem:[%s1847 + $0x78] sm:$0xff]
  %v1864 = vld [vmem:[%s1847 + $0x80] sm:$0xff]
  %v1865 = vld [vmem:[%s1847 + $0x88] sm:$0xff]
  %v1866 = vld [vmem:[%s1847 + $0x90] sm:$0xff]
  %v1867 = vld [vmem:[%s1847 + $0x98] sm:$0xff]
  %v1868 = vld [vmem:[%s1847 + $0xa0] sm:$0xff]
  %v1869 = vld [vmem:[%s1847 + $0xa8] sm:$0xff]
  %v1870 = vld [vmem:[%s1847 + $0xb0] sm:$0xff]
  %v1871 = vld [vmem:[%s1847 + $0xb8] sm:$0xff]
  %v1872 = vld [vmem:[%s1847 + $0xc0] sm:$0xff]
  %v1873 = vld [vmem:[%s1847 + $0xc8] sm:$0xff]
  %v1874 = vld [vmem:[%s1847 + $0xd0] sm:$0xff]
  %v1875 = vld [vmem:[%s1847 + $0xd8] sm:$0xff]
  %v1876 = vld [vmem:[%s1847 + $0xe0] sm:$0xff]
  %v1877 = vld [vmem:[%s1847 + $0xe8] sm:$0xff]
  %v1878 = vld [vmem:[%s1847 + $0xf0] sm:$0xff]
  %v1879 = vld [vmem:[%s1847 + $0xf8] sm:$0xff]
  %1896 = vrot.lane.b32.xlu0 %v1639, 124
  %v1897 = vpop.permute.xlu0 %1896
  %1898 = vrot.lane.b32.xlu0 %v1641, 124
  %v1899 = vpop.permute.xlu0 %1898
  %1900 = vrot.lane.b32.xlu0 %v1645, 124
  %v1901 = vpop.permute.xlu0 %1900
  %1902 = vrot.lane.b32.xlu0 %v1647, 124
  %v1903 = vpop.permute.xlu0 %1902
  %1904 = vrot.lane.b32.xlu0 %v1651, 124
  %v1905 = vpop.permute.xlu0 %1904
  %1906 = vrot.lane.b32.xlu0 %v1653, 124
  %v1907 = vpop.permute.xlu0 %1906
  %1908 = vrot.lane.b32.xlu0 %v1657, 124
  %v1909 = vpop.permute.xlu0 %1908
  %1910 = vrot.lane.b32.xlu0 %v1659, 124
  %v1911 = vpop.permute.xlu0 %1910
  %1912 = vrot.lane.b32.xlu0 %v1663, 124
  %v1913 = vpop.permute.xlu0 %1912
  %1914 = vrot.lane.b32.xlu0 %v1665, 124
  %v1915 = vpop.permute.xlu0 %1914
  %1916 = vrot.lane.b32.xlu0 %v1669, 124
  %v1917 = vpop.permute.xlu0 %1916
  %1918 = vrot.lane.b32.xlu0 %v1671, 124
  %v1919 = vpop.permute.xlu0 %1918
  %1920 = vrot.lane.b32.xlu0 %v1675, 124
  %v1921 = vpop.permute.xlu0 %1920
  %1922 = vrot.lane.b32.xlu0 %v1677, 124
  %v1923 = vpop.permute.xlu0 %1922
  %1924 = vrot.lane.b32.xlu0 %v1681, 124
  %v1925 = vpop.permute.xlu0 %1924
  %1926 = vrot.lane.b32.xlu0 %v1683, 124
  %v1927 = vpop.permute.xlu0 %1926
  %v1928 = vsel %vm341, %v1897, %v1899
  %v1929 = vsel %vm341, %v1901, %v1903
  %v1930 = vsel %vm341, %v1905, %v1907
  %v1931 = vsel %vm341, %v1909, %v1911
  %v1932 = vsel %vm341, %v1913, %v1915
  %v1933 = vsel %vm341, %v1917, %v1919
  %v1934 = vsel %vm341, %v1921, %v1923
  %v1935 = vsel %vm341, %v1925, %v1927
  %1944 = vmatprep.subr.mxu0 %v1849
  %1945 = vmatpush1.msra.mxu0 %v1848
  %1946 = vmatprep.subr.mxu0 %v1851
  %1947 = vmatpush1.msra.mxu0 %v1850
  %1948 = vmatprep.subr.mxu0 %v1853
  %1949 = vmatpush1.msra.mxu0 %v1852
  %1950 = vmatprep.subr.mxu0 %v1855
  %1951 = vmatpush1.msra.mxu0 %v1854
  %1952 = vmatprep.subr.mxu0 %v1857
  %1953 = vmatpush1.msra.mxu0 %v1856
  %1954 = vmatprep.subr.mxu0 %v1859
  %1955 = vmatpush1.msra.mxu0 %v1858
  %1956 = vmatprep.subr.mxu0 %v1861
  %1957 = vmatpush1.msra.mxu0 %v1860
  %1958 = vmatprep.subr.mxu0 %v1863
  %1959 = vmatpush1.msra.mxu0 %v1862
  %1960 = vmatprep.subr.mxu0 %v1865
  %1961 = vmatpush1.msra.mxu0 %v1864
  %1962 = vmatprep.subr.mxu0 %v1867
  %1963 = vmatpush1.msra.mxu0 %v1866
  %1964 = vmatprep.subr.mxu0 %v1869
  %1965 = vmatpush1.msra.mxu0 %v1868
  %1966 = vmatprep.subr.mxu0 %v1871
  %1967 = vmatpush1.msra.mxu0 %v1870
  %1968 = vmatprep.subr.mxu0 %v1873
  %1969 = vmatpush1.msra.mxu0 %v1872
  %1970 = vmatprep.subr.mxu0 %v1875
  %1971 = vmatpush1.msra.mxu0 %v1874
  %1972 = vmatprep.subr.mxu0 %v1877
  %1973 = vmatpush1.msra.mxu0 %v1876
  %1974 = vmatprep.subr.mxu0 %v1879
  %1975 = vmatpush1.msra.mxu0 %v1878
  %1976 = vmatprep.subr.mxu0 0.0
  %1977 = vmatpush1.msra.mxu0 0.0
  %1978 = vmatprep.subr.mxu0 0.0
  %1979 = vmatpush1.msra.mxu0 0.0
  %1980 = vmatprep.subr.mxu0 0.0
  %1981 = vmatpush1.msra.mxu0 0.0
  %1982 = vmatprep.subr.mxu0 0.0
  %1983 = vmatpush1.msra.mxu0 0.0
  %1984 = vmatprep.subr.mxu0 0.0
  %1985 = vmatpush1.msra.mxu0 0.0
  %1986 = vmatprep.subr.mxu0 0.0
  %1987 = vmatpush1.msra.mxu0 0.0
  %1988 = vmatprep.subr.mxu0 0.0
  %1989 = vmatpush1.msra.mxu0 0.0
  %1990 = vmatprep.subr.mxu0 0.0
  %1991 = vmatpush1.msra.mxu0 0.0
  %1992 = vmatprep.subr.mxu0 0.0
  %1993 = vmatpush1.msra.mxu0 0.0
  %1994 = vmatprep.subr.mxu0 0.0
  %1995 = vmatpush1.msra.mxu0 0.0
  %1996 = vmatprep.subr.mxu0 0.0
  %1997 = vmatpush1.msra.mxu0 0.0
  %1998 = vmatprep.subr.mxu0 0.0
  %1999 = vmatpush1.msra.mxu0 0.0
  %2000 = vmatprep.subr.mxu0 0.0
  %2001 = vmatpush1.msra.mxu0 0.0
  %2002 = vmatprep.subr.mxu0 0.0
  %2003 = vmatpush1.msra.mxu0 0.0
  %2004 = vmatprep.subr.mxu0 0.0
  %2005 = vmatpush1.msra.mxu0 0.0
  %2006 = vmatprep.subr.mxu0 0.0
  %2007 = vmatpush1.msra.mxu0 0.0
  %2008 = vmatprep.mubr.f32.mxu0 0.0
  %2009 = vmatmul.mubr.f32.gmra.mrb[0].mxu0 %v1928
  %v2010 = vpop.f32.mrb[0].mxu0
  %v2011 = vadd.f32 0.0, %v2010
  %v2012 = vpop.f32.mrb[0].mxu0
  %v2013 = vadd.f32 0.0, %v2012
  %2014 = vmatprep.mubr.f32.mxu0 0.0
  %2015 = vmatmul.mubr.f32.gmra.mrb[0].mxu0 %v1929
  %v2016 = vpop.f32.mrb[0].mxu0
  %v2017 = vadd.f32 0.0, %v2016
  %v2018 = vpop.f32.mrb[0].mxu0
  %v2019 = vadd.f32 0.0, %v2018
  %2020 = vmatprep.mubr.f32.mxu0 0.0
  %2021 = vmatmul.mubr.f32.gmra.mrb[0].mxu0 %v1930
  %v2022 = vpop.f32.mrb[0].mxu0
  %v2023 = vadd.f32 0.0, %v2022
  %v2024 = vpop.f32.mrb[0].mxu0
  %v2025 = vadd.f32 0.0, %v2024
  %2026 = vmatprep.mubr.f32.mxu0 0.0
  %2027 = vmatmul.mubr.f32.gmra.mrb[0].mxu0 %v1931
  %v2028 = vpop.f32.mrb[0].mxu0
  %v2029 = vadd.f32 0.0, %v2028
  %v2030 = vpop.f32.mrb[0].mxu0
  %v2031 = vadd.f32 0.0, %v2030
  %2032 = vmatprep.mubr.f32.mxu0 0.0
  %2033 = vmatmul.mubr.f32.gmra.mrb[0].mxu0 %v1932
  %v2034 = vpop.f32.mrb[0].mxu0
  %v2035 = vadd.f32 0.0, %v2034
  %v2036 = vpop.f32.mrb[0].mxu0
  %v2037 = vadd.f32 0.0, %v2036
  %2038 = vmatprep.mubr.f32.mxu0 0.0
  %2039 = vmatmul.mubr.f32.gmra.mrb[0].mxu0 %v1933
  %v2040 = vpop.f32.mrb[0].mxu0
  %v2041 = vadd.f32 0.0, %v2040
  %v2042 = vpop.f32.mrb[0].mxu0
  %v2043 = vadd.f32 0.0, %v2042
  %2044 = vmatprep.mubr.f32.mxu0 0.0
  %2045 = vmatmul.mubr.f32.gmra.mrb[0].mxu0 %v1934
  %v2046 = vpop.f32.mrb[0].mxu0
  %v2047 = vadd.f32 0.0, %v2046
  %v2048 = vpop.f32.mrb[0].mxu0
  %v2049 = vadd.f32 0.0, %v2048
  %2050 = vmatprep.mubr.f32.mxu0 0.0
  %2051 = vmatmul.mubr.f32.gmra.mrb[0].mxu0 %v1935
  %v2052 = vpop.f32.mrb[0].mxu0
  %v2053 = vadd.f32 0.0, %v2052
  %v2054 = vpop.f32.mrb[0].mxu0
  %v2055 = vadd.f32 0.0, %v2054
  %2056 = vdwg.mxu0
  %v2057 = vadd.f32 %v1831, %v2011
  %v2058 = vadd.f32 %v1832, %v2013
  %v2059 = vadd.f32 %v1833, %v2017
  %v2060 = vadd.f32 %v1834, %v2019
  %v2061 = vadd.f32 %v1835, %v2023
  %v2062 = vadd.f32 %v1836, %v2025
  %v2063 = vadd.f32 %v1837, %v2029
  %v2064 = vadd.f32 %v1838, %v2031
  %v2065 = vadd.f32 %v1839, %v2035
  %v2066 = vadd.f32 %v1840, %v2037
  %v2067 = vadd.f32 %v1841, %v2041
  %v2068 = vadd.f32 %v1842, %v2043
  %v2069 = vadd.f32 %v1843, %v2047
  %v2070 = vadd.f32 %v1844, %v2049
  %v2071 = vadd.f32 %v1845, %v2053
  %v2072 = vadd.f32 %v1846, %v2055
  %s2073 = scalar_lea.vmem %s9, 2048
  %v2074 = vld [vmem:[%s2073] sm:$0xff]
  %v2075 = vld [vmem:[%s2073 + $0x8] sm:$0xff]
  %v2076 = vld [vmem:[%s2073 + $0x10] sm:$0xff]
  %v2077 = vld [vmem:[%s2073 + $0x18] sm:$0xff]
  %v2078 = vld [vmem:[%s2073 + $0x20] sm:$0xff]
  %v2079 = vld [vmem:[%s2073 + $0x28] sm:$0xff]
  %v2080 = vld [vmem:[%s2073 + $0x30] sm:$0xff]
  %v2081 = vld [vmem:[%s2073 + $0x38] sm:$0xff]
  %v2082 = vld [vmem:[%s2073 + $0x40] sm:$0xff]
  %v2083 = vld [vmem:[%s2073 + $0x48] sm:$0xff]
  %v2084 = vld [vmem:[%s2073 + $0x50] sm:$0xff]
  %v2085 = vld [vmem:[%s2073 + $0x58] sm:$0xff]
  %v2086 = vld [vmem:[%s2073 + $0x60] sm:$0xff]
  %v2087 = vld [vmem:[%s2073 + $0x68] sm:$0xff]
  %v2088 = vld [vmem:[%s2073 + $0x70] sm:$0xff]
  %v2089 = vld [vmem:[%s2073 + $0x78] sm:$0xff]
  %v2090 = vld [vmem:[%s2073 + $0x80] sm:$0xff]
  %v2091 = vld [vmem:[%s2073 + $0x88] sm:$0xff]
  %v2092 = vld [vmem:[%s2073 + $0x90] sm:$0xff]
  %v2093 = vld [vmem:[%s2073 + $0x98] sm:$0xff]
  %v2094 = vld [vmem:[%s2073 + $0xa0] sm:$0xff]
  %v2095 = vld [vmem:[%s2073 + $0xa8] sm:$0xff]
  %v2096 = vld [vmem:[%s2073 + $0xb0] sm:$0xff]
  %v2097 = vld [vmem:[%s2073 + $0xb8] sm:$0xff]
  %v2098 = vld [vmem:[%s2073 + $0xc0] sm:$0xff]
  %v2099 = vld [vmem:[%s2073 + $0xc8] sm:$0xff]
  %v2100 = vld [vmem:[%s2073 + $0xd0] sm:$0xff]
  %v2101 = vld [vmem:[%s2073 + $0xd8] sm:$0xff]
  %v2102 = vld [vmem:[%s2073 + $0xe0] sm:$0xff]
  %v2103 = vld [vmem:[%s2073 + $0xe8] sm:$0xff]
  %v2104 = vld [vmem:[%s2073 + $0xf0] sm:$0xff]
  %v2105 = vld [vmem:[%s2073 + $0xf8] sm:$0xff]
  %2106 = vrot.lane.b32.xlu0 %v1639, 120
  %v2107 = vpop.permute.xlu0 %2106
  %2108 = vrot.lane.b32.xlu0 %v1641, 120
  %v2109 = vpop.permute.xlu0 %2108
  %2110 = vrot.lane.b32.xlu0 %v1645, 120
  %v2111 = vpop.permute.xlu0 %2110
  %2112 = vrot.lane.b32.xlu0 %v1647, 120
  %v2113 = vpop.permute.xlu0 %2112
  %2114 = vrot.lane.b32.xlu0 %v1651, 120
  %v2115 = vpop.permute.xlu0 %2114
  %2116 = vrot.lane.b32.xlu0 %v1653, 120
  %v2117 = vpop.permute.xlu0 %2116
  %2118 = vrot.lane.b32.xlu0 %v1657, 120
  %v2119 = vpop.permute.xlu0 %2118
  %2120 = vrot.lane.b32.xlu0 %v1659, 120
  %v2121 = vpop.permute.xlu0 %2120
  %2122 = vrot.lane.b32.xlu0 %v1663, 120
  %v2123 = vpop.permute.xlu0 %2122
  %2124 = vrot.lane.b32.xlu0 %v1665, 120
  %v2125 = vpop.permute.xlu0 %2124
  %2126 = vrot.lane.b32.xlu0 %v1669, 120
  %v2127 = vpop.permute.xlu0 %2126
  %2128 = vrot.lane.b32.xlu0 %v1671, 120
  %v2129 = vpop.permute.xlu0 %2128
  %2130 = vrot.lane.b32.xlu0 %v1675, 120
  %v2131 = vpop.permute.xlu0 %2130
  %2132 = vrot.lane.b32.xlu0 %v1677, 120
  %v2133 = vpop.permute.xlu0 %2132
  %2134 = vrot.lane.b32.xlu0 %v1681, 120
  %v2135 = vpop.permute.xlu0 %2134
  %2136 = vrot.lane.b32.xlu0 %v1683, 120
  %v2137 = vpop.permute.xlu0 %2136
  %v2138 = vsel %vm649, %v2107, %v2109
  %v2139 = vsel %vm649, %v2111, %v2113
  %v2140 = vsel %vm649, %v2115, %v2117
  %v2141 = vsel %vm649, %v2119, %v2121
  %v2142 = vsel %vm649, %v2123, %v2125
  %v2143 = vsel %vm649, %v2127, %v2129
  %v2144 = vsel %vm649, %v2131, %v2133
  %v2145 = vsel %vm649, %v2135, %v2137
  %2154 = vmatprep.subr.mxu0 %v2075
  %2155 = vmatpush1.msra.mxu0 %v2074
  %2156 = vmatprep.subr.mxu0 %v2077
  %2157 = vmatpush1.msra.mxu0 %v2076
  %2158 = vmatprep.subr.mxu0 %v2079
  %2159 = vmatpush1.msra.mxu0 %v2078
  %2160 = vmatprep.subr.mxu0 %v2081
  %2161 = vmatpush1.msra.mxu0 %v2080
  %2162 = vmatprep.subr.mxu0 %v2083
  %2163 = vmatpush1.msra.mxu0 %v2082
  %2164 = vmatprep.subr.mxu0 %v2085
  %2165 = vmatpush1.msra.mxu0 %v2084
  %2166 = vmatprep.subr.mxu0 %v2087
  %2167 = vmatpush1.msra.mxu0 %v2086
  %2168 = vmatprep.subr.mxu0 %v2089
  %2169 = vmatpush1.msra.mxu0 %v2088
  %2170 = vmatprep.subr.mxu0 %v2091
  %2171 = vmatpush1.msra.mxu0 %v2090
  %2172 = vmatprep.subr.mxu0 %v2093
  %2173 = vmatpush1.msra.mxu0 %v2092
  %2174 = vmatprep.subr.mxu0 %v2095
  %2175 = vmatpush1.msra.mxu0 %v2094
  %2176 = vmatprep.subr.mxu0 %v2097
  %2177 = vmatpush1.msra.mxu0 %v2096
  %2178 = vmatprep.subr.mxu0 %v2099
  %2179 = vmatpush1.msra.mxu0 %v2098
  %2180 = vmatprep.subr.mxu0 %v2101
  %2181 = vmatpush1.msra.mxu0 %v2100
  %2182 = vmatprep.subr.mxu0 %v2103
  %2183 = vmatpush1.msra.mxu0 %v2102
  %2184 = vmatprep.subr.mxu0 %v2105
  %2185 = vmatpush1.msra.mxu0 %v2104
  %2186 = vmatprep.subr.mxu0 0.0
  %2187 = vmatpush1.msra.mxu0 0.0
  %2188 = vmatprep.subr.mxu0 0.0
  %2189 = vmatpush1.msra.mxu0 0.0
  %2190 = vmatprep.subr.mxu0 0.0
  %2191 = vmatpush1.msra.mxu0 0.0
  %2192 = vmatprep.subr.mxu0 0.0
  %2193 = vmatpush1.msra.mxu0 0.0
  %2194 = vmatprep.subr.mxu0 0.0
  %2195 = vmatpush1.msra.mxu0 0.0
  %2196 = vmatprep.subr.mxu0 0.0
  %2197 = vmatpush1.msra.mxu0 0.0
  %2198 = vmatprep.subr.mxu0 0.0
  %2199 = vmatpush1.msra.mxu0 0.0
  %2200 = vmatprep.subr.mxu0 0.0
  %2201 = vmatpush1.msra.mxu0 0.0
  %2202 = vmatprep.subr.mxu0 0.0
  %2203 = vmatpush1.msra.mxu0 0.0
  %2204 = vmatprep.subr.mxu0 0.0
  %2205 = vmatpush1.msra.mxu0 0.0
  %2206 = vmatprep.subr.mxu0 0.0
  %2207 = vmatpush1.msra.mxu0 0.0
  %2208 = vmatprep.subr.mxu0 0.0
  %2209 = vmatpush1.msra.mxu0 0.0
  %2210 = vmatprep.subr.mxu0 0.0
  %2211 = vmatpush1.msra.mxu0 0.0
  %2212 = vmatprep.subr.mxu0 0.0
  %2213 = vmatpush1.msra.mxu0 0.0
  %2214 = vmatprep.subr.mxu0 0.0
  %2215 = vmatpush1.msra.mxu0 0.0
  %2216 = vmatprep.subr.mxu0 0.0
  %2217 = vmatpush1.msra.mxu0 0.0
  %2218 = vmatprep.mubr.f32.mxu0 0.0
  %2219 = vmatmul.mubr.f32.gmra.mrb[0].mxu0 %v2138
  %v2220 = vpop.f32.mrb[0].mxu0
  %v2221 = vadd.f32 0.0, %v2220
  %v2222 = vpop.f32.mrb[0].mxu0
  %v2223 = vadd.f32 0.0, %v2222
  %2224 = vmatprep.mubr.f32.mxu0 0.0
  %2225 = vmatmul.mubr.f32.gmra.mrb[0].mxu0 %v2139
  %v2226 = vpop.f32.mrb[0].mxu0
  %v2227 = vadd.f32 0.0, %v2226
  %v2228 = vpop.f32.mrb[0].mxu0
  %v2229 = vadd.f32 0.0, %v2228
  %2230 = vmatprep.mubr.f32.mxu0 0.0
  %2231 = vmatmul.mubr.f32.gmra.mrb[0].mxu0 %v2140
  %v2232 = vpop.f32.mrb[0].mxu0
  %v2233 = vadd.f32 0.0, %v2232
  %v2234 = vpop.f32.mrb[0].mxu0
  %v2235 = vadd.f32 0.0, %v2234
  %2236 = vmatprep.mubr.f32.mxu0 0.0
  %2237 = vmatmul.mubr.f32.gmra.mrb[0].mxu0 %v2141
  %v2238 = vpop.f32.mrb[0].mxu0
  %v2239 = vadd.f32 0.0, %v2238
  %v2240 = vpop.f32.mrb[0].mxu0
  %v2241 = vadd.f32 0.0, %v2240
  %2242 = vmatprep.mubr.f32.mxu0 0.0
  %2243 = vmatmul.mubr.f32.gmra.mrb[0].mxu0 %v2142
  %v2244 = vpop.f32.mrb[0].mxu0
  %v2245 = vadd.f32 0.0, %v2244
  %v2246 = vpop.f32.mrb[0].mxu0
  %v2247 = vadd.f32 0.0, %v2246
  %2248 = vmatprep.mubr.f32.mxu0 0.0
  %2249 = vmatmul.mubr.f32.gmra.mrb[0].mxu0 %v2143
  %v2250 = vpop.f32.mrb[0].mxu0
  %v2251 = vadd.f32 0.0, %v2250
  %v2252 = vpop.f32.mrb[0].mxu0
  %v2253 = vadd.f32 0.0, %v2252
  %2254 = vmatprep.mubr.f32.mxu0 0.0
  %2255 = vmatmul.mubr.f32.gmra.mrb[0].mxu0 %v2144
  %v2256 = vpop.f32.mrb[0].mxu0
  %v2257 = vadd.f32 0.0, %v2256
  %v2258 = vpop.f32.mrb[0].mxu0
  %v2259 = vadd.f32 0.0, %v2258
  %2260 = vmatprep.mubr.f32.mxu0 0.0
  %2261 = vmatmul.mubr.f32.gmra.mrb[0].mxu0 %v2145
  %v2262 = vpop.f32.mrb[0].mxu0
  %v2263 = vadd.f32 0.0, %v2262
  %v2264 = vpop.f32.mrb[0].mxu0
  %v2265 = vadd.f32 0.0, %v2264
  %2266 = vdwg.mxu0
  %v2267 = vadd.f32 %v2057, %v2221
  %v2268 = vadd.f32 %v2058, %v2223
  %v2269 = vadd.f32 %v2059, %v2227
  %v2270 = vadd.f32 %v2060, %v2229
  %v2271 = vadd.f32 %v2061, %v2233
  %v2272 = vadd.f32 %v2062, %v2235
  %v2273 = vadd.f32 %v2063, %v2239
  %v2274 = vadd.f32 %v2064, %v2241
  %v2275 = vadd.f32 %v2065, %v2245
  %v2276 = vadd.f32 %v2066, %v2247
  %v2277 = vadd.f32 %v2067, %v2251
  %v2278 = vadd.f32 %v2068, %v2253
  %v2279 = vadd.f32 %v2069, %v2257
  %v2280 = vadd.f32 %v2070, %v2259
  %v2281 = vadd.f32 %v2071, %v2263
  %v2282 = vadd.f32 %v2072, %v2265
  %v2283 = vld [vmem:[%s10] sm:$0x3]
  %v2285 = vlaneseq
  %v2286 = vshrl.u32 %v2285, 7
  %v2287 = vsub.s32 0, %v2286
  %v2288 = vrot.slane %v2283, %v2287
  %v2289 = vlaneseq
  %v2290 = vshrl.u32 %v2289, 7
  %v2291 = vsub.s32 1, %v2290
  %v2292 = vrot.slane %v2283, %v2291
  %v2295 = vadd.f32 %v2267, %v2288
  %v2296 = vadd.f32 %v2268, %v2292
  %v2297 = vadd.f32 %v2269, %v2288
  %v2298 = vadd.f32 %v2270, %v2292
  %v2299 = vadd.f32 %v2271, %v2288
  %v2300 = vadd.f32 %v2272, %v2292
  %v2301 = vadd.f32 %v2273, %v2288
  %v2302 = vadd.f32 %v2274, %v2292
  %v2303 = vadd.f32 %v2275, %v2288
  %v2304 = vadd.f32 %v2276, %v2292
  %v2305 = vadd.f32 %v2277, %v2288
  %v2306 = vadd.f32 %v2278, %v2292
  %v2307 = vadd.f32 %v2279, %v2288
  %v2308 = vadd.f32 %v2280, %v2292
  %v2309 = vadd.f32 %v2281, %v2288
  %v2310 = vadd.f32 %v2282, %v2292
  %v2311 = vmax.f32 %v2295, 0.0
  %v2312 = vmax.f32 %v2296, 0.0
  %v2313 = vmax.f32 %v2297, 0.0
  %v2314 = vmax.f32 %v2298, 0.0
  %v2315 = vmax.f32 %v2299, 0.0
  %v2316 = vmax.f32 %v2300, 0.0
  %v2317 = vmax.f32 %v2301, 0.0
  %v2318 = vmax.f32 %v2302, 0.0
  %v2319 = vmax.f32 %v2303, 0.0
  %v2320 = vmax.f32 %v2304, 0.0
  %v2321 = vmax.f32 %v2305, 0.0
  %v2322 = vmax.f32 %v2306, 0.0
  %v2323 = vmax.f32 %v2307, 0.0
  %v2324 = vmax.f32 %v2308, 0.0
  %v2325 = vmax.f32 %v2309, 0.0
  %v2326 = vmax.f32 %v2310, 0.0
  %v2327 = vld [vmem:[%s2] sm:$0xff]
  %v2328 = vld [vmem:[%s2 + $0x8] sm:$0xff]
  %v2329 = vld [vmem:[%s2 + $0x10] sm:$0xff]
  %v2330 = vld [vmem:[%s2 + $0x18] sm:$0xff]
  %v2331 = vld [vmem:[%s2 + $0x20] sm:$0xff]
  %v2332 = vld [vmem:[%s2 + $0x28] sm:$0xff]
  %vm2333 = vcmask 523264
  %v2335 = vsel %vm2333, %v2327, 0
  %v2338 = vsel %vm2333, %v2328, 0
  %v2341 = vsel %vm2333, %v2329, 0
  %v2344 = vsel %vm2333, %v2330, 0
  %v2347 = vsel %vm2333, %v2331, 0
  %v2350 = vsel %vm2333, %v2332, 0
  %2352 = vmatprep.subr.mxu0 %v2312
  %2353 = vmatpush1.msra.mxu0 %v2311
  %2354 = vmatprep.subr.mxu0 %v2314
  %2355 = vmatpush1.msra.mxu0 %v2313
  %2356 = vmatprep.subr.mxu0 %v2316
  %2357 = vmatpush1.msra.mxu0 %v2315
  %2358 = vmatprep.subr.mxu0 %v2318
  %2359 = vmatpush1.msra.mxu0 %v2317
  %2360 = vmatprep.subr.mxu0 %v2320
  %2361 = vmatpush1.msra.mxu0 %v2319
  %2362 = vmatprep.subr.mxu0 %v2322
  %2363 = vmatpush1.msra.mxu0 %v2321
  %2364 = vmatprep.subr.mxu0 %v2324
  %2365 = vmatpush1.msra.mxu0 %v2323
  %2366 = vmatprep.subr.mxu0 %v2326
  %2367 = vmatpush1.msra.mxu0 %v2325
  %2368 = vmatprep.subr.mxu0 0.0
  %2369 = vmatpush1.msra.mxu0 0.0
  %2370 = vmatprep.subr.mxu0 0.0
  %2371 = vmatpush1.msra.mxu0 0.0
  %2372 = vmatprep.subr.mxu0 0.0
  %2373 = vmatpush1.msra.mxu0 0.0
  %2374 = vmatprep.subr.mxu0 0.0
  %2375 = vmatpush1.msra.mxu0 0.0
  %2376 = vmatprep.subr.mxu0 0.0
  %2377 = vmatpush1.msra.mxu0 0.0
  %2378 = vmatprep.subr.mxu0 0.0
  %2379 = vmatpush1.msra.mxu0 0.0
  %2380 = vmatprep.subr.mxu0 0.0
  %2381 = vmatpush1.msra.mxu0 0.0
  %2382 = vmatprep.subr.mxu0 0.0
  %2383 = vmatpush1.msra.mxu0 0.0
  %2384 = vmatprep.subr.mxu0 0.0
  %2385 = vmatpush1.msra.mxu0 0.0
  %2386 = vmatprep.subr.mxu0 0.0
  %2387 = vmatpush1.msra.mxu0 0.0
  %2388 = vmatprep.subr.mxu0 0.0
  %2389 = vmatpush1.msra.mxu0 0.0
  %2390 = vmatprep.subr.mxu0 0.0
  %2391 = vmatpush1.msra.mxu0 0.0
  %2392 = vmatprep.subr.mxu0 0.0
  %2393 = vmatpush1.msra.mxu0 0.0
  %2394 = vmatprep.subr.mxu0 0.0
  %2395 = vmatpush1.msra.mxu0 0.0
  %2396 = vmatprep.subr.mxu0 0.0
  %2397 = vmatpush1.msra.mxu0 0.0
  %2398 = vmatprep.subr.mxu0 0.0
  %2399 = vmatpush1.msra.mxu0 0.0
  %2400 = vmatprep.subr.mxu0 0.0
  %2401 = vmatpush1.msra.mxu0 0.0
  %2402 = vmatprep.subr.mxu0 0.0
  %2403 = vmatpush1.msra.mxu0 0.0
  %2404 = vmatprep.subr.mxu0 0.0
  %2405 = vmatpush1.msra.mxu0 0.0
  %2406 = vmatprep.subr.mxu0 0.0
  %2407 = vmatpush1.msra.mxu0 0.0
  %2408 = vmatprep.subr.mxu0 0.0
  %2409 = vmatpush1.msra.mxu0 0.0
  %2410 = vmatprep.subr.mxu0 0.0
  %2411 = vmatpush1.msra.mxu0 0.0
  %2412 = vmatprep.subr.mxu0 0.0
  %2413 = vmatpush1.msra.mxu0 0.0
  %2414 = vmatprep.subr.mxu0 0.0
  %2415 = vmatpush1.msra.mxu0 0.0
  %2416 = vmatprep.mubr.f32.mxu0 0.0
  %2417 = vmatmul.mubr.f32.gmra.mrb[0].mxu0 %v2335
  %v2418 = vpop.f32.mrb[0].mxu0
  %v2419 = vadd.f32 0.0, %v2418
  %v2420 = vpop.f32.mrb[0].mxu0
  %v2421 = vadd.f32 0.0, %v2420
  %2422 = vmatprep.mubr.f32.mxu0 0.0
  %2423 = vmatmul.mubr.f32.gmra.mrb[0].mxu0 %v2338
  %v2424 = vpop.f32.mrb[0].mxu0
  %v2425 = vadd.f32 0.0, %v2424
  %v2426 = vpop.f32.mrb[0].mxu0
  %v2427 = vadd.f32 0.0, %v2426
  %2428 = vmatprep.mubr.f32.mxu0 0.0
  %2429 = vmatmul.mubr.f32.gmra.mrb[0].mxu0 %v2341
  %v2430 = vpop.f32.mrb[0].mxu0
  %v2431 = vadd.f32 0.0, %v2430
  %v2432 = vpop.f32.mrb[0].mxu0
  %v2433 = vadd.f32 0.0, %v2432
  %2434 = vmatprep.mubr.f32.mxu0 0.0
  %2435 = vmatmul.mubr.f32.gmra.mrb[0].mxu0 %v2344
  %v2436 = vpop.f32.mrb[0].mxu0
  %v2437 = vadd.f32 0.0, %v2436
  %v2438 = vpop.f32.mrb[0].mxu0
  %v2439 = vadd.f32 0.0, %v2438
  %2440 = vmatprep.mubr.f32.mxu0 0.0
  %2441 = vmatmul.mubr.f32.gmra.mrb[0].mxu0 %v2347
  %v2442 = vpop.f32.mrb[0].mxu0
  %v2443 = vadd.f32 0.0, %v2442
  %v2444 = vpop.f32.mrb[0].mxu0
  %v2445 = vadd.f32 0.0, %v2444
  %2446 = vmatprep.mubr.f32.mxu0 0.0
  %2447 = vmatmul.mubr.f32.gmra.mrb[0].mxu0 %v2350
  %v2448 = vpop.f32.mrb[0].mxu0
  %v2449 = vadd.f32 0.0, %v2448
  %v2450 = vpop.f32.mrb[0].mxu0
  %v2451 = vadd.f32 0.0, %v2450
  %2452 = vdwg.mxu0
  %v2453 = vld [vmem:[%s3] sm:$0xff]
  %v2454 = vld [vmem:[%s3 + $0x8] sm:$0xff]
  %v2455 = vld [vmem:[%s3 + $0x10] sm:$0xff]
  %v2456 = vld [vmem:[%s3 + $0x18] sm:$0xff]
  %v2457 = vld [vmem:[%s3 + $0x20] sm:$0xff]
  %v2458 = vld [vmem:[%s3 + $0x28] sm:$0xff]
  %v2460 = vsel %vm2333, %v2453, 0
  %v2463 = vsel %vm2333, %v2454, 0
  %v2466 = vsel %vm2333, %v2455, 0
  %v2469 = vsel %vm2333, %v2456, 0
  %v2472 = vsel %vm2333, %v2457, 0
  %v2475 = vsel %vm2333, %v2458, 0
  %2477 = vmatprep.subr.mxu0 %v2312
  %2478 = vmatpush1.msra.mxu0 %v2311
  %2479 = vmatprep.subr.mxu0 %v2314
  %2480 = vmatpush1.msra.mxu0 %v2313
  %2481 = vmatprep.subr.mxu0 %v2316
  %2482 = vmatpush1.msra.mxu0 %v2315
  %2483 = vmatprep.subr.mxu0 %v2318
  %2484 = vmatpush1.msra.mxu0 %v2317
  %2485 = vmatprep.subr.mxu0 %v2320
  %2486 = vmatpush1.msra.mxu0 %v2319
  %2487 = vmatprep.subr.mxu0 %v2322
  %2488 = vmatpush1.msra.mxu0 %v2321
  %2489 = vmatprep.subr.mxu0 %v2324
  %2490 = vmatpush1.msra.mxu0 %v2323
  %2491 = vmatprep.subr.mxu0 %v2326
  %2492 = vmatpush1.msra.mxu0 %v2325
  %2493 = vmatprep.subr.mxu0 0.0
  %2494 = vmatpush1.msra.mxu0 0.0
  %2495 = vmatprep.subr.mxu0 0.0
  %2496 = vmatpush1.msra.mxu0 0.0
  %2497 = vmatprep.subr.mxu0 0.0
  %2498 = vmatpush1.msra.mxu0 0.0
  %2499 = vmatprep.subr.mxu0 0.0
  %2500 = vmatpush1.msra.mxu0 0.0
  %2501 = vmatprep.subr.mxu0 0.0
  %2502 = vmatpush1.msra.mxu0 0.0
  %2503 = vmatprep.subr.mxu0 0.0
  %2504 = vmatpush1.msra.mxu0 0.0
  %2505 = vmatprep.subr.mxu0 0.0
  %2506 = vmatpush1.msra.mxu0 0.0
  %2507 = vmatprep.subr.mxu0 0.0
  %2508 = vmatpush1.msra.mxu0 0.0
  %2509 = vmatprep.subr.mxu0 0.0
  %2510 = vmatpush1.msra.mxu0 0.0
  %2511 = vmatprep.subr.mxu0 0.0
  %2512 = vmatpush1.msra.mxu0 0.0
  %2513 = vmatprep.subr.mxu0 0.0
  %2514 = vmatpush1.msra.mxu0 0.0
  %2515 = vmatprep.subr.mxu0 0.0
  %2516 = vmatpush1.msra.mxu0 0.0
  %2517 = vmatprep.subr.mxu0 0.0
  %2518 = vmatpush1.msra.mxu0 0.0
  %2519 = vmatprep.subr.mxu0 0.0
  %2520 = vmatpush1.msra.mxu0 0.0
  %2521 = vmatprep.subr.mxu0 0.0
  %2522 = vmatpush1.msra.mxu0 0.0
  %2523 = vmatprep.subr.mxu0 0.0
  %2524 = vmatpush1.msra.mxu0 0.0
  %2525 = vmatprep.subr.mxu0 0.0
  %2526 = vmatpush1.msra.mxu0 0.0
  %2527 = vmatprep.subr.mxu0 0.0
  %2528 = vmatpush1.msra.mxu0 0.0
  %2529 = vmatprep.subr.mxu0 0.0
  %2530 = vmatpush1.msra.mxu0 0.0
  %2531 = vmatprep.subr.mxu0 0.0
  %2532 = vmatpush1.msra.mxu0 0.0
  %2533 = vmatprep.subr.mxu0 0.0
  %2534 = vmatpush1.msra.mxu0 0.0
  %2535 = vmatprep.subr.mxu0 0.0
  %2536 = vmatpush1.msra.mxu0 0.0
  %2537 = vmatprep.subr.mxu0 0.0
  %2538 = vmatpush1.msra.mxu0 0.0
  %2539 = vmatprep.subr.mxu0 0.0
  %2540 = vmatpush1.msra.mxu0 0.0
  %2541 = vmatprep.mubr.f32.mxu0 0.0
  %2542 = vmatmul.mubr.f32.gmra.mrb[0].mxu0 %v2460
  %v2543 = vpop.f32.mrb[0].mxu0
  %v2544 = vadd.f32 0.0, %v2543
  %v2545 = vpop.f32.mrb[0].mxu0
  %v2546 = vadd.f32 0.0, %v2545
  %2547 = vmatprep.mubr.f32.mxu0 0.0
  %2548 = vmatmul.mubr.f32.gmra.mrb[0].mxu0 %v2463
  %v2549 = vpop.f32.mrb[0].mxu0
  %v2550 = vadd.f32 0.0, %v2549
  %v2551 = vpop.f32.mrb[0].mxu0
  %v2552 = vadd.f32 0.0, %v2551
  %2553 = vmatprep.mubr.f32.mxu0 0.0
  %2554 = vmatmul.mubr.f32.gmra.mrb[0].mxu0 %v2466
  %v2555 = vpop.f32.mrb[0].mxu0
  %v2556 = vadd.f32 0.0, %v2555
  %v2557 = vpop.f32.mrb[0].mxu0
  %v2558 = vadd.f32 0.0, %v2557
  %2559 = vmatprep.mubr.f32.mxu0 0.0
  %2560 = vmatmul.mubr.f32.gmra.mrb[0].mxu0 %v2469
  %v2561 = vpop.f32.mrb[0].mxu0
  %v2562 = vadd.f32 0.0, %v2561
  %v2563 = vpop.f32.mrb[0].mxu0
  %v2564 = vadd.f32 0.0, %v2563
  %2565 = vmatprep.mubr.f32.mxu0 0.0
  %2566 = vmatmul.mubr.f32.gmra.mrb[0].mxu0 %v2472
  %v2567 = vpop.f32.mrb[0].mxu0
  %v2568 = vadd.f32 0.0, %v2567
  %v2569 = vpop.f32.mrb[0].mxu0
  %v2570 = vadd.f32 0.0, %v2569
  %2571 = vmatprep.mubr.f32.mxu0 0.0
  %2572 = vmatmul.mubr.f32.gmra.mrb[0].mxu0 %v2475
  %v2573 = vpop.f32.mrb[0].mxu0
  %v2574 = vadd.f32 0.0, %v2573
  %v2575 = vpop.f32.mrb[0].mxu0
  %v2576 = vadd.f32 0.0, %v2575
  %2577 = vdwg.mxu0
  %v2578 = vmax.f32 %v2419, %v2544
  %v2579 = vmax.f32 %v2421, %v2546
  %v2580 = vmax.f32 %v2425, %v2550
  %v2581 = vmax.f32 %v2427, %v2552
  %v2582 = vmax.f32 %v2431, %v2556
  %v2583 = vmax.f32 %v2433, %v2558
  %v2584 = vmax.f32 %v2437, %v2562
  %v2585 = vmax.f32 %v2439, %v2564
  %v2586 = vmax.f32 %v2443, %v2568
  %v2587 = vmax.f32 %v2445, %v2570
  %v2588 = vmax.f32 %v2449, %v2574
  %v2589 = vmax.f32 %v2451, %v2576
  %2602 = vrot.lane.b32.xlu0 %v2578, 120
  %v2603 = vpop.permute.xlu0 %2602
  %2604 = vrot.lane.b32.xlu0 %v2579, 120
  %v2605 = vpop.permute.xlu0 %2604
  %2606 = vrot.lane.b32.xlu0 %v2580, 120
  %v2607 = vpop.permute.xlu0 %2606
  %2608 = vrot.lane.b32.xlu0 %v2581, 120
  %v2609 = vpop.permute.xlu0 %2608
  %2610 = vrot.lane.b32.xlu0 %v2582, 120
  %v2611 = vpop.permute.xlu0 %2610
  %2612 = vrot.lane.b32.xlu0 %v2583, 120
  %v2613 = vpop.permute.xlu0 %2612
  %2614 = vrot.lane.b32.xlu0 %v2584, 120
  %v2615 = vpop.permute.xlu0 %2614
  %2616 = vrot.lane.b32.xlu0 %v2585, 120
  %v2617 = vpop.permute.xlu0 %2616
  %2618 = vrot.lane.b32.xlu0 %v2586, 120
  %v2619 = vpop.permute.xlu0 %2618
  %2620 = vrot.lane.b32.xlu0 %v2587, 120
  %v2621 = vpop.permute.xlu0 %2620
  %2622 = vrot.lane.b32.xlu0 %v2588, 120
  %v2623 = vpop.permute.xlu0 %2622
  %2624 = vrot.lane.b32.xlu0 %v2589, 120
  %v2625 = vpop.permute.xlu0 %2624
  %v2626 = vsel %vm649, %v2603, %v2605
  %v2627 = vsel %vm649, %v2607, %v2609
  %v2628 = vsel %vm649, %v2611, %v2613
  %v2629 = vsel %vm649, %v2615, %v2617
  %v2630 = vsel %vm649, %v2619, %v2621
  %v2631 = vsel %vm649, %v2623, %v2625
  %v2644 = vmax.f32 %v2578, %v2626
  %v2645 = vmax.f32 %v2579, %v2605
  %v2646 = vmax.f32 %v2580, %v2627
  %v2647 = vmax.f32 %v2581, %v2609
  %v2648 = vmax.f32 %v2582, %v2628
  %v2649 = vmax.f32 %v2583, %v2613
  %v2650 = vmax.f32 %v2584, %v2629
  %v2651 = vmax.f32 %v2585, %v2617
  %v2652 = vmax.f32 %v2586, %v2630
  %v2653 = vmax.f32 %v2587, %v2621
  %v2654 = vmax.f32 %v2588, %v2631
  %v2655 = vmax.f32 %v2589, %v2625
  %v2656 = vld [vmem:[%s4] sm:$0xff]
  %v2657 = vld [vmem:[%s4 + $0x8] sm:$0xff]
  %v2658 = vld [vmem:[%s4 + $0x10] sm:$0xff]
  %v2659 = vld [vmem:[%s4 + $0x18] sm:$0xff]
  %v2660 = vld [vmem:[%s4 + $0x20] sm:$0xff]
  %v2661 = vld [vmem:[%s4 + $0x28] sm:$0xff]
  %v2662 = vld [vmem:[%s4 + $0x30] sm:$0xff]
  %v2663 = vld [vmem:[%s4 + $0x38] sm:$0xff]
  %v2664 = vld [vmem:[%s4 + $0x40] sm:$0xff]
  %v2665 = vld [vmem:[%s4 + $0x48] sm:$0xff]
  %v2666 = vld [vmem:[%s4 + $0x50] sm:$0xff]
  %v2667 = vld [vmem:[%s4 + $0x58] sm:$0xff]
  %v2668 = vld [vmem:[%s4 + $0x60] sm:$0xff]
  %v2669 = vld [vmem:[%s4 + $0x68] sm:$0xff]
  %v2670 = vld [vmem:[%s4 + $0x70] sm:$0xff]
  %v2671 = vld [vmem:[%s4 + $0x78] sm:$0xff]
  %v2672 = vld [vmem:[%s4 + $0x80] sm:$0xff]
  %v2673 = vld [vmem:[%s4 + $0x88] sm:$0xff]
  %v2674 = vld [vmem:[%s4 + $0x90] sm:$0xff]
  %v2675 = vld [vmem:[%s4 + $0x98] sm:$0xff]
  %v2676 = vld [vmem:[%s4 + $0xa0] sm:$0xff]
  %v2677 = vld [vmem:[%s4 + $0xa8] sm:$0xff]
  %v2678 = vld [vmem:[%s4 + $0xb0] sm:$0xff]
  %v2679 = vld [vmem:[%s4 + $0xb8] sm:$0xff]
  %v2680 = vld [vmem:[%s4 + $0xc0] sm:$0xff]
  %v2681 = vld [vmem:[%s4 + $0xc8] sm:$0xff]
  %v2682 = vld [vmem:[%s4 + $0xd0] sm:$0xff]
  %v2683 = vld [vmem:[%s4 + $0xd8] sm:$0xff]
  %v2684 = vld [vmem:[%s4 + $0xe0] sm:$0xff]
  %v2685 = vld [vmem:[%s4 + $0xe8] sm:$0xff]
  %v2686 = vld [vmem:[%s4 + $0xf0] sm:$0xff]
  %v2687 = vld [vmem:[%s4 + $0xf8] sm:$0xff]
  %v2688 = vld [vmem:[%s4 + $0x100] sm:$0xff]
  %v2689 = vld [vmem:[%s4 + $0x108] sm:$0xff]
  %v2690 = vld [vmem:[%s4 + $0x110] sm:$0xff]
  %v2691 = vld [vmem:[%s4 + $0x118] sm:$0xff]
  %v2692 = vld [vmem:[%s4 + $0x120] sm:$0xff]
  %v2693 = vld [vmem:[%s4 + $0x128] sm:$0xff]
  %v2694 = vld [vmem:[%s4 + $0x130] sm:$0xff]
  %v2695 = vld [vmem:[%s4 + $0x138] sm:$0xff]
  %v2696 = vld [vmem:[%s4 + $0x140] sm:$0xff]
  %v2697 = vld [vmem:[%s4 + $0x148] sm:$0xff]
  %v2698 = vld [vmem:[%s4 + $0x150] sm:$0xff]
  %v2699 = vld [vmem:[%s4 + $0x158] sm:$0xff]
  %v2700 = vld [vmem:[%s4 + $0x160] sm:$0xff]
  %v2701 = vld [vmem:[%s4 + $0x168] sm:$0xff]
  %v2702 = vld [vmem:[%s4 + $0x170] sm:$0xff]
  %v2703 = vld [vmem:[%s4 + $0x178] sm:$0xff]
  %v2704 = vld [vmem:[%s4 + $0x180] sm:$0xff]
  %v2705 = vld [vmem:[%s4 + $0x188] sm:$0xff]
  %v2706 = vld [vmem:[%s4 + $0x190] sm:$0xff]
  %v2707 = vld [vmem:[%s4 + $0x198] sm:$0xff]
  %v2708 = vld [vmem:[%s4 + $0x1a0] sm:$0xff]
  %v2709 = vld [vmem:[%s4 + $0x1a8] sm:$0xff]
  %v2710 = vld [vmem:[%s4 + $0x1b0] sm:$0xff]
  %v2711 = vld [vmem:[%s4 + $0x1b8] sm:$0xff]
  %v2712 = vld [vmem:[%s4 + $0x1c0] sm:$0xff]
  %v2713 = vld [vmem:[%s4 + $0x1c8] sm:$0xff]
  %v2714 = vld [vmem:[%s4 + $0x1d0] sm:$0xff]
  %v2715 = vld [vmem:[%s4 + $0x1d8] sm:$0xff]
  %v2716 = vld [vmem:[%s4 + $0x1e0] sm:$0xff]
  %v2717 = vld [vmem:[%s4 + $0x1e8] sm:$0xff]
  %v2719 = vsel %vm649, %v2645, 0
  %v2722 = vsel %vm649, %v2647, 0
  %v2725 = vsel %vm649, %v2649, 0
  %v2728 = vsel %vm649, %v2651, 0
  %v2731 = vsel %vm649, %v2653, 0
  %v2734 = vsel %vm649, %v2655, 0
  %2736 = vmatprep.subr.mxu0 %v2657
  %2737 = vmatpush1.msra.mxu0 %v2656
  %2738 = vmatprep.subr.mxu0 %v2659
  %2739 = vmatpush1.msra.mxu0 %v2658
  %2740 = vmatprep.subr.mxu0 %v2661
  %2741 = vmatpush1.msra.mxu0 %v2660
  %2742 = vmatprep.subr.mxu0 %v2663
  %2743 = vmatpush1.msra.mxu0 %v2662
  %2744 = vmatprep.subr.mxu0 %v2665
  %2745 = vmatpush1.msra.mxu0 %v2664
  %2746 = vmatprep.subr.mxu0 %v2667
  %2747 = vmatpush1.msra.mxu0 %v2666
  %2748 = vmatprep.subr.mxu0 %v2669
  %2749 = vmatpush1.msra.mxu0 %v2668
  %2750 = vmatprep.subr.mxu0 %v2671
  %2751 = vmatpush1.msra.mxu0 %v2670
  %2752 = vmatprep.subr.mxu0 %v2673
  %2753 = vmatpush1.msra.mxu0 %v2672
  %2754 = vmatprep.subr.mxu0 %v2675
  %2755 = vmatpush1.msra.mxu0 %v2674
  %2756 = vmatprep.subr.mxu0 %v2677
  %2757 = vmatpush1.msra.mxu0 %v2676
  %2758 = vmatprep.subr.mxu0 %v2679
  %2759 = vmatpush1.msra.mxu0 %v2678
  %2760 = vmatprep.subr.mxu0 %v2681
  %2761 = vmatpush1.msra.mxu0 %v2680
  %2762 = vmatprep.subr.mxu0 %v2683
  %2763 = vmatpush1.msra.mxu0 %v2682
  %2764 = vmatprep.subr.mxu0 %v2685
  %2765 = vmatpush1.msra.mxu0 %v2684
  %2766 = vmatprep.subr.mxu0 %v2687
  %2767 = vmatpush1.msra.mxu0 %v2686
  %2768 = vmatprep.subr.mxu0 %v2689
  %2769 = vmatpush1.msra.mxu0 %v2688
  %2770 = vmatprep.subr.mxu0 %v2691
  %2771 = vmatpush1.msra.mxu0 %v2690
  %2772 = vmatprep.subr.mxu0 %v2693
  %2773 = vmatpush1.msra.mxu0 %v2692
  %2774 = vmatprep.subr.mxu0 %v2695
  %2775 = vmatpush1.msra.mxu0 %v2694
  %2776 = vmatprep.subr.mxu0 %v2697
  %2777 = vmatpush1.msra.mxu0 %v2696
  %2778 = vmatprep.subr.mxu0 %v2699
  %2779 = vmatpush1.msra.mxu0 %v2698
  %2780 = vmatprep.subr.mxu0 %v2701
  %2781 = vmatpush1.msra.mxu0 %v2700
  %2782 = vmatprep.subr.mxu0 %v2703
  %2783 = vmatpush1.msra.mxu0 %v2702
  %2784 = vmatprep.subr.mxu0 %v2705
  %2785 = vmatpush1.msra.mxu0 %v2704
  %2786 = vmatprep.subr.mxu0 %v2707
  %2787 = vmatpush1.msra.mxu0 %v2706
  %2788 = vmatprep.subr.mxu0 %v2709
  %2789 = vmatpush1.msra.mxu0 %v2708
  %2790 = vmatprep.subr.mxu0 %v2711
  %2791 = vmatpush1.msra.mxu0 %v2710
  %2792 = vmatprep.subr.mxu0 %v2713
  %2793 = vmatpush1.msra.mxu0 %v2712
  %2794 = vmatprep.subr.mxu0 %v2715
  %2795 = vmatpush1.msra.mxu0 %v2714
  %2796 = vmatprep.subr.mxu0 %v2717
  %2797 = vmatpush1.msra.mxu0 %v2716
  %2798 = vmatprep.subr.mxu0 0.0
  %2799 = vmatpush1.msra.mxu0 0.0
  %2800 = vmatprep.mubr.f32.mxu0 %v2719
  %2801 = vmatmul.mubr.f32.gmra.mrb[0].mxu0 %v2644
  %v2802 = vpop.f32.mrb[0].mxu0
  %v2803 = vadd.f32 0.0, %v2802
  %v2804 = vpop.f32.mrb[0].mxu0
  %v2805 = vadd.f32 0.0, %v2804
  %2806 = vmatprep.mubr.f32.mxu0 %v2722
  %2807 = vmatmul.mubr.f32.gmra.mrb[0].mxu0 %v2646
  %v2808 = vpop.f32.mrb[0].mxu0
  %v2809 = vadd.f32 0.0, %v2808
  %v2810 = vpop.f32.mrb[0].mxu0
  %v2811 = vadd.f32 0.0, %v2810
  %2812 = vmatprep.mubr.f32.mxu0 %v2725
  %2813 = vmatmul.mubr.f32.gmra.mrb[0].mxu0 %v2648
  %v2814 = vpop.f32.mrb[0].mxu0
  %v2815 = vadd.f32 0.0, %v2814
  %v2816 = vpop.f32.mrb[0].mxu0
  %v2817 = vadd.f32 0.0, %v2816
  %2818 = vmatprep.mubr.f32.mxu0 %v2728
  %2819 = vmatmul.mubr.f32.gmra.mrb[0].mxu0 %v2650
  %v2820 = vpop.f32.mrb[0].mxu0
  %v2821 = vadd.f32 0.0, %v2820
  %v2822 = vpop.f32.mrb[0].mxu0
  %v2823 = vadd.f32 0.0, %v2822
  %2824 = vmatprep.mubr.f32.mxu0 %v2731
  %2825 = vmatmul.mubr.f32.gmra.mrb[0].mxu0 %v2652
  %v2826 = vpop.f32.mrb[0].mxu0
  %v2827 = vadd.f32 0.0, %v2826
  %v2828 = vpop.f32.mrb[0].mxu0
  %v2829 = vadd.f32 0.0, %v2828
  %2830 = vmatprep.mubr.f32.mxu0 %v2734
  %2831 = vmatmul.mubr.f32.gmra.mrb[0].mxu0 %v2654
  %v2832 = vpop.f32.mrb[0].mxu0
  %v2833 = vadd.f32 0.0, %v2832
  %v2834 = vpop.f32.mrb[0].mxu0
  %v2835 = vadd.f32 0.0, %v2834
  %2836 = vdwg.mxu0
  %v2837 = vld [vmem:[%s5] sm:$0xff]
  %v2838 = vld [vmem:[%s5 + $0x8] sm:$0xff]
  %v2839 = vld [vmem:[%s5 + $0x10] sm:$0xff]
  %v2840 = vld [vmem:[%s5 + $0x18] sm:$0xff]
  %vm2841 = vcmask 392192
  %v2843 = vsel %vm2841, %v2837, 0
  %v2846 = vsel %vm2841, %v2838, 0
  %v2849 = vsel %vm2841, %v2839, 0
  %v2852 = vsel %vm2841, %v2840, 0
  %2854 = vmatprep.subr.mxu0 %v2805
  %2855 = vmatpush1.msra.mxu0 %v2803
  %2856 = vmatprep.subr.mxu0 %v2811
  %2857 = vmatpush1.msra.mxu0 %v2809
  %2858 = vmatprep.subr.mxu0 %v2817
  %2859 = vmatpush1.msra.mxu0 %v2815
  %2860 = vmatprep.subr.mxu0 %v2823
  %2861 = vmatpush1.msra.mxu0 %v2821
  %2862 = vmatprep.subr.mxu0 %v2829
  %2863 = vmatpush1.msra.mxu0 %v2827
  %2864 = vmatprep.subr.mxu0 %v2835
  %2865 = vmatpush1.msra.mxu0 %v2833
  %2866 = vmatprep.subr.mxu0 0.0
  %2867 = vmatpush1.msra.mxu0 0.0
  %2868 = vmatprep.subr.mxu0 0.0
  %2869 = vmatpush1.msra.mxu0 0.0
  %2870 = vmatprep.subr.mxu0 0.0
  %2871 = vmatpush1.msra.mxu0 0.0
  %2872 = vmatprep.subr.mxu0 0.0
  %2873 = vmatpush1.msra.mxu0 0.0
  %2874 = vmatprep.subr.mxu0 0.0
  %2875 = vmatpush1.msra.mxu0 0.0
  %2876 = vmatprep.subr.mxu0 0.0
  %2877 = vmatpush1.msra.mxu0 0.0
  %2878 = vmatprep.subr.mxu0 0.0
  %2879 = vmatpush1.msra.mxu0 0.0
  %2880 = vmatprep.subr.mxu0 0.0
  %2881 = vmatpush1.msra.mxu0 0.0
  %2882 = vmatprep.subr.mxu0 0.0
  %2883 = vmatpush1.msra.mxu0 0.0
  %2884 = vmatprep.subr.mxu0 0.0
  %2885 = vmatpush1.msra.mxu0 0.0
  %2886 = vmatprep.subr.mxu0 0.0
  %2887 = vmatpush1.msra.mxu0 0.0
  %2888 = vmatprep.subr.mxu0 0.0
  %2889 = vmatpush1.msra.mxu0 0.0
  %2890 = vmatprep.subr.mxu0 0.0
  %2891 = vmatpush1.msra.mxu0 0.0
  %2892 = vmatprep.subr.mxu0 0.0
  %2893 = vmatpush1.msra.mxu0 0.0
  %2894 = vmatprep.subr.mxu0 0.0
  %2895 = vmatpush1.msra.mxu0 0.0
  %2896 = vmatprep.subr.mxu0 0.0
  %2897 = vmatpush1.msra.mxu0 0.0
  %2898 = vmatprep.subr.mxu0 0.0
  %2899 = vmatpush1.msra.mxu0 0.0
  %2900 = vmatprep.subr.mxu0 0.0
  %2901 = vmatpush1.msra.mxu0 0.0
  %2902 = vmatprep.subr.mxu0 0.0
  %2903 = vmatpush1.msra.mxu0 0.0
  %2904 = vmatprep.subr.mxu0 0.0
  %2905 = vmatpush1.msra.mxu0 0.0
  %2906 = vmatprep.subr.mxu0 0.0
  %2907 = vmatpush1.msra.mxu0 0.0
  %2908 = vmatprep.subr.mxu0 0.0
  %2909 = vmatpush1.msra.mxu0 0.0
  %2910 = vmatprep.subr.mxu0 0.0
  %2911 = vmatpush1.msra.mxu0 0.0
  %2912 = vmatprep.subr.mxu0 0.0
  %2913 = vmatpush1.msra.mxu0 0.0
  %2914 = vmatprep.subr.mxu0 0.0
  %2915 = vmatpush1.msra.mxu0 0.0
  %2916 = vmatprep.subr.mxu0 0.0
  %2917 = vmatpush1.msra.mxu0 0.0
  %2918 = vmatprep.mubr.f32.mxu0 0.0
  %2919 = vmatmul.mubr.f32.gmra.mrb[0].mxu0 %v2843
  %v2920 = vpop.f32.mrb[0].mxu0
  %v2921 = vadd.f32 0.0, %v2920
  %v2922 = vpop.f32.mrb[0].mxu0
  %v2923 = vadd.f32 0.0, %v2922
  %2924 = vmatprep.mubr.f32.mxu0 0.0
  %2925 = vmatmul.mubr.f32.gmra.mrb[0].mxu0 %v2846
  %v2926 = vpop.f32.mrb[0].mxu0
  %v2927 = vadd.f32 0.0, %v2926
  %v2928 = vpop.f32.mrb[0].mxu0
  %v2929 = vadd.f32 0.0, %v2928
  %2930 = vmatprep.mubr.f32.mxu0 0.0
  %2931 = vmatmul.mubr.f32.gmra.mrb[0].mxu0 %v2849
  %v2932 = vpop.f32.mrb[0].mxu0
  %v2933 = vadd.f32 0.0, %v2932
  %v2934 = vpop.f32.mrb[0].mxu0
  %v2935 = vadd.f32 0.0, %v2934
  %2936 = vmatprep.mubr.f32.mxu0 0.0
  %2937 = vmatmul.mubr.f32.gmra.mrb[0].mxu0 %v2852
  %v2938 = vpop.f32.mrb[0].mxu0
  %v2939 = vadd.f32 0.0, %v2938
  %v2940 = vpop.f32.mrb[0].mxu0
  %v2941 = vadd.f32 0.0, %v2940
  %2942 = vdwg.mxu0
  %v2943 = vld [vmem:[%s11] sm:$0xff]
  %v2944 = vld [vmem:[%s11 + $0x8] sm:$0xff]
  %v2945 = vld [vmem:[%s11 + $0x10] sm:$0xff]
  %v2946 = vld [vmem:[%s11 + $0x18] sm:$0xff]
  %v2947 = vld [vmem:[%s11 + $0x20] sm:$0xff]
  %v2948 = vld [vmem:[%s11 + $0x28] sm:$0xff]
  %v2949 = vld [vmem:[%s11 + $0x30] sm:$0xff]
  %v2950 = vld [vmem:[%s11 + $0x38] sm:$0xff]
  %v2951 = vld [vmem:[%s11 + $0x40] sm:$0xff]
  %v2952 = vld [vmem:[%s11 + $0x48] sm:$0xff]
  %v2953 = vld [vmem:[%s11 + $0x50] sm:$0xff]
  %v2954 = vld [vmem:[%s11 + $0x58] sm:$0xff]
  %v2955 = vld [vmem:[%s11 + $0x60] sm:$0xff]
  %v2956 = vld [vmem:[%s11 + $0x68] sm:$0xff]
  %v2957 = vld [vmem:[%s11 + $0x70] sm:$0xff]
  %v2958 = vld [vmem:[%s11 + $0x78] sm:$0xff]
  %s2959 = scalar_lea.vmem %s11, 128
  %v2960 = vld [vmem:[%s2959] sm:$0xff]
  %v2961 = vld [vmem:[%s2959 + $0x8] sm:$0xff]
  %v2962 = vld [vmem:[%s2959 + $0x10] sm:$0xff]
  %v2963 = vld [vmem:[%s2959 + $0x18] sm:$0xff]
  %v2964 = vld [vmem:[%s2959 + $0x20] sm:$0xff]
  %v2965 = vld [vmem:[%s2959 + $0x28] sm:$0xff]
  %v2966 = vld [vmem:[%s2959 + $0x30] sm:$0xff]
  %v2967 = vld [vmem:[%s2959 + $0x38] sm:$0xff]
  %v2968 = vld [vmem:[%s2959 + $0x40] sm:$0xff]
  %v2969 = vld [vmem:[%s2959 + $0x48] sm:$0xff]
  %v2970 = vld [vmem:[%s2959 + $0x50] sm:$0xff]
  %v2971 = vld [vmem:[%s2959 + $0x58] sm:$0xff]
  %v2972 = vld [vmem:[%s2959 + $0x60] sm:$0xff]
  %v2973 = vld [vmem:[%s2959 + $0x68] sm:$0xff]
  %v2974 = vld [vmem:[%s2959 + $0x70] sm:$0xff]
  %v2975 = vld [vmem:[%s2959 + $0x78] sm:$0xff]
  %2984 = vrot.lane.b32.xlu0 %v2921, 120
  %v2985 = vpop.permute.xlu0 %2984
  %2986 = vrot.lane.b32.xlu0 %v2923, 120
  %v2987 = vpop.permute.xlu0 %2986
  %2988 = vrot.lane.b32.xlu0 %v2927, 120
  %v2989 = vpop.permute.xlu0 %2988
  %2990 = vrot.lane.b32.xlu0 %v2929, 120
  %v2991 = vpop.permute.xlu0 %2990
  %2992 = vrot.lane.b32.xlu0 %v2933, 120
  %v2993 = vpop.permute.xlu0 %2992
  %2994 = vrot.lane.b32.xlu0 %v2935, 120
  %v2995 = vpop.permute.xlu0 %2994
  %2996 = vrot.lane.b32.xlu0 %v2939, 120
  %v2997 = vpop.permute.xlu0 %2996
  %2998 = vrot.lane.b32.xlu0 %v2941, 120
  %v2999 = vpop.permute.xlu0 %2998
  %v3000 = vsel %vm649, %v2985, %v2987
  %v3001 = vsel %vm649, %v2989, %v2991
  %v3002 = vsel %vm649, %v2993, %v2995
  %v3003 = vsel %vm649, %v2997, %v2999
  %3008 = vmatprep.subr.mxu0 0.0
  %3009 = vmatpush1.msra.mxu0 %v2960
  %3010 = vmatprep.subr.mxu0 0.0
  %3011 = vmatpush1.msra.mxu0 %v2961
  %3012 = vmatprep.subr.mxu0 0.0
  %3013 = vmatpush1.msra.mxu0 %v2962
  %3014 = vmatprep.subr.mxu0 0.0
  %3015 = vmatpush1.msra.mxu0 %v2963
  %3016 = vmatprep.subr.mxu0 0.0
  %3017 = vmatpush1.msra.mxu0 %v2964
  %3018 = vmatprep.subr.mxu0 0.0
  %3019 = vmatpush1.msra.mxu0 %v2965
  %3020 = vmatprep.subr.mxu0 0.0
  %3021 = vmatpush1.msra.mxu0 %v2966
  %3022 = vmatprep.subr.mxu0 0.0
  %3023 = vmatpush1.msra.mxu0 %v2967
  %3024 = vmatprep.subr.mxu0 0.0
  %3025 = vmatpush1.msra.mxu0 %v2968
  %3026 = vmatprep.subr.mxu0 0.0
  %3027 = vmatpush1.msra.mxu0 %v2969
  %3028 = vmatprep.subr.mxu0 0.0
  %3029 = vmatpush1.msra.mxu0 %v2970
  %3030 = vmatprep.subr.mxu0 0.0
  %3031 = vmatpush1.msra.mxu0 %v2971
  %3032 = vmatprep.subr.mxu0 0.0
  %3033 = vmatpush1.msra.mxu0 %v2972
  %3034 = vmatprep.subr.mxu0 0.0
  %3035 = vmatpush1.msra.mxu0 %v2973
  %3036 = vmatprep.subr.mxu0 0.0
  %3037 = vmatpush1.msra.mxu0 %v2974
  %3038 = vmatprep.subr.mxu0 0.0
  %3039 = vmatpush1.msra.mxu0 %v2975
  %3040 = vmatprep.subr.mxu0 0.0
  %3041 = vmatpush1.msra.mxu0 0.0
  %3042 = vmatprep.subr.mxu0 0.0
  %3043 = vmatpush1.msra.mxu0 0.0
  %3044 = vmatprep.subr.mxu0 0.0
  %3045 = vmatpush1.msra.mxu0 0.0
  %3046 = vmatprep.subr.mxu0 0.0
  %3047 = vmatpush1.msra.mxu0 0.0
  %3048 = vmatprep.subr.mxu0 0.0
  %3049 = vmatpush1.msra.mxu0 0.0
  %3050 = vmatprep.subr.mxu0 0.0
  %3051 = vmatpush1.msra.mxu0 0.0
  %3052 = vmatprep.subr.mxu0 0.0
  %3053 = vmatpush1.msra.mxu0 0.0
  %3054 = vmatprep.subr.mxu0 0.0
  %3055 = vmatpush1.msra.mxu0 0.0
  %3056 = vmatprep.subr.mxu0 0.0
  %3057 = vmatpush1.msra.mxu0 0.0
  %3058 = vmatprep.subr.mxu0 0.0
  %3059 = vmatpush1.msra.mxu0 0.0
  %3060 = vmatprep.subr.mxu0 0.0
  %3061 = vmatpush1.msra.mxu0 0.0
  %3062 = vmatprep.subr.mxu0 0.0
  %3063 = vmatpush1.msra.mxu0 0.0
  %3064 = vmatprep.subr.mxu0 0.0
  %3065 = vmatpush1.msra.mxu0 0.0
  %3066 = vmatprep.subr.mxu0 0.0
  %3067 = vmatpush1.msra.mxu0 0.0
  %3068 = vmatprep.subr.mxu0 0.0
  %3069 = vmatpush1.msra.mxu0 0.0
  %3070 = vmatprep.subr.mxu0 0.0
  %3071 = vmatpush1.msra.mxu0 0.0
  %3072 = vmatprep.mubr.f32.mxu0 0.0
  %3073 = vmatmul.mubr.f32.gmra.mrb[0].mxu0 %v3000
  %v3074 = vpop.f32.mrb[0].mxu0
  %v3075 = vadd.f32 0.0, %v3074
  %v3076 = vpop.f32.mrb[0].mxu0
  %3077 = vmatprep.mubr.f32.mxu0 0.0
  %3078 = vmatmul.mubr.f32.gmra.mrb[0].mxu0 %v3001
  %v3079 = vpop.f32.mrb[0].mxu0
  %v3080 = vadd.f32 0.0, %v3079
  %v3081 = vpop.f32.mrb[0].mxu0
  %3082 = vmatprep.mubr.f32.mxu0 0.0
  %3083 = vmatmul.mubr.f32.gmra.mrb[0].mxu0 %v3002
  %v3084 = vpop.f32.mrb[0].mxu0
  %v3085 = vadd.f32 0.0, %v3084
  %v3086 = vpop.f32.mrb[0].mxu0
  %3087 = vmatprep.mubr.f32.mxu0 0.0
  %3088 = vmatmul.mubr.f32.gmra.mrb[0].mxu0 %v3003
  %v3089 = vpop.f32.mrb[0].mxu0
  %v3090 = vadd.f32 0.0, %v3089
  %v3091 = vpop.f32.mrb[0].mxu0
  %3092 = vdwg.mxu0
  %3093 = vmatprep.subr.mxu0 0.0
  %3094 = vmatpush1.msra.mxu0 %v2943
  %3095 = vmatprep.subr.mxu0 0.0
  %3096 = vmatpush1.msra.mxu0 %v2944
  %3097 = vmatprep.subr.mxu0 0.0
  %3098 = vmatpush1.msra.mxu0 %v2945
  %3099 = vmatprep.subr.mxu0 0.0
  %3100 = vmatpush1.msra.mxu0 %v2946
  %3101 = vmatprep.subr.mxu0 0.0
  %3102 = vmatpush1.msra.mxu0 %v2947
  %3103 = vmatprep.subr.mxu0 0.0
  %3104 = vmatpush1.msra.mxu0 %v2948
  %3105 = vmatprep.subr.mxu0 0.0
  %3106 = vmatpush1.msra.mxu0 %v2949
  %3107 = vmatprep.subr.mxu0 0.0
  %3108 = vmatpush1.msra.mxu0 %v2950
  %3109 = vmatprep.subr.mxu0 0.0
  %3110 = vmatpush1.msra.mxu0 %v2951
  %3111 = vmatprep.subr.mxu0 0.0
  %3112 = vmatpush1.msra.mxu0 %v2952
  %3113 = vmatprep.subr.mxu0 0.0
  %3114 = vmatpush1.msra.mxu0 %v2953
  %3115 = vmatprep.subr.mxu0 0.0
  %3116 = vmatpush1.msra.mxu0 %v2954
  %3117 = vmatprep.subr.mxu0 0.0
  %3118 = vmatpush1.msra.mxu0 %v2955
  %3119 = vmatprep.subr.mxu0 0.0
  %3120 = vmatpush1.msra.mxu0 %v2956
  %3121 = vmatprep.subr.mxu0 0.0
  %3122 = vmatpush1.msra.mxu0 %v2957
  %3123 = vmatprep.subr.mxu0 0.0
  %3124 = vmatpush1.msra.mxu0 %v2958
  %3125 = vmatprep.subr.mxu0 0.0
  %3126 = vmatpush1.msra.mxu0 0.0
  %3127 = vmatprep.subr.mxu0 0.0
  %3128 = vmatpush1.msra.mxu0 0.0
  %3129 = vmatprep.subr.mxu0 0.0
  %3130 = vmatpush1.msra.mxu0 0.0
  %3131 = vmatprep.subr.mxu0 0.0
  %3132 = vmatpush1.msra.mxu0 0.0
  %3133 = vmatprep.subr.mxu0 0.0
  %3134 = vmatpush1.msra.mxu0 0.0
  %3135 = vmatprep.subr.mxu0 0.0
  %3136 = vmatpush1.msra.mxu0 0.0
  %3137 = vmatprep.subr.mxu0 0.0
  %3138 = vmatpush1.msra.mxu0 0.0
  %3139 = vmatprep.subr.mxu0 0.0
  %3140 = vmatpush1.msra.mxu0 0.0
  %3141 = vmatprep.subr.mxu0 0.0
  %3142 = vmatpush1.msra.mxu0 0.0
  %3143 = vmatprep.subr.mxu0 0.0
  %3144 = vmatpush1.msra.mxu0 0.0
  %3145 = vmatprep.subr.mxu0 0.0
  %3146 = vmatpush1.msra.mxu0 0.0
  %3147 = vmatprep.subr.mxu0 0.0
  %3148 = vmatpush1.msra.mxu0 0.0
  %3149 = vmatprep.subr.mxu0 0.0
  %3150 = vmatpush1.msra.mxu0 0.0
  %3151 = vmatprep.subr.mxu0 0.0
  %3152 = vmatpush1.msra.mxu0 0.0
  %3153 = vmatprep.subr.mxu0 0.0
  %3154 = vmatpush1.msra.mxu0 0.0
  %3155 = vmatprep.subr.mxu0 0.0
  %3156 = vmatpush1.msra.mxu0 0.0
  %3157 = vmatprep.mubr.f32.mxu0 0.0
  %3158 = vmatmul.mubr.f32.gmra.mrb[0].mxu0 %v2921
  %v3159 = vpop.f32.mrb[0].mxu0
  %v3160 = vadd.f32 %v3075, %v3159
  %v3161 = vpop.f32.mrb[0].mxu0
  %3162 = vmatprep.mubr.f32.mxu0 0.0
  %3163 = vmatmul.mubr.f32.gmra.mrb[0].mxu0 %v2927
  %v3164 = vpop.f32.mrb[0].mxu0
  %v3165 = vadd.f32 %v3080, %v3164
  %v3166 = vpop.f32.mrb[0].mxu0
  %3167 = vmatprep.mubr.f32.mxu0 0.0
  %3168 = vmatmul.mubr.f32.gmra.mrb[0].mxu0 %v2933
  %v3169 = vpop.f32.mrb[0].mxu0
  %v3170 = vadd.f32 %v3085, %v3169
  %v3171 = vpop.f32.mrb[0].mxu0
  %3172 = vmatprep.mubr.f32.mxu0 0.0
  %3173 = vmatmul.mubr.f32.gmra.mrb[0].mxu0 %v2939
  %v3174 = vpop.f32.mrb[0].mxu0
  %v3175 = vadd.f32 %v3090, %v3174
  %v3176 = vpop.f32.mrb[0].mxu0
  %3177 = vdwg.mxu0
  %s3178 = scalar_lea.vmem %s11, 256
  %v3179 = vld [vmem:[%s3178] sm:$0xff]
  %v3180 = vld [vmem:[%s3178 + $0x8] sm:$0xff]
  %v3181 = vld [vmem:[%s3178 + $0x10] sm:$0xff]
  %v3182 = vld [vmem:[%s3178 + $0x18] sm:$0xff]
  %v3183 = vld [vmem:[%s3178 + $0x20] sm:$0xff]
  %v3184 = vld [vmem:[%s3178 + $0x28] sm:$0xff]
  %v3185 = vld [vmem:[%s3178 + $0x30] sm:$0xff]
  %v3186 = vld [vmem:[%s3178 + $0x38] sm:$0xff]
  %v3187 = vld [vmem:[%s3178 + $0x40] sm:$0xff]
  %v3188 = vld [vmem:[%s3178 + $0x48] sm:$0xff]
  %v3189 = vld [vmem:[%s3178 + $0x50] sm:$0xff]
  %v3190 = vld [vmem:[%s3178 + $0x58] sm:$0xff]
  %v3191 = vld [vmem:[%s3178 + $0x60] sm:$0xff]
  %v3192 = vld [vmem:[%s3178 + $0x68] sm:$0xff]
  %v3193 = vld [vmem:[%s3178 + $0x70] sm:$0xff]
  %v3194 = vld [vmem:[%s3178 + $0x78] sm:$0xff]
  %3195 = vrot.lane.b32.xlu0 %v2921, 112
  %v3196 = vpop.permute.xlu0 %3195
  %3197 = vrot.lane.b32.xlu0 %v2923, 112
  %v3198 = vpop.permute.xlu0 %3197
  %3199 = vrot.lane.b32.xlu0 %v2927, 112
  %v3200 = vpop.permute.xlu0 %3199
  %3201 = vrot.lane.b32.xlu0 %v2929, 112
  %v3202 = vpop.permute.xlu0 %3201
  %3203 = vrot.lane.b32.xlu0 %v2933, 112
  %v3204 = vpop.permute.xlu0 %3203
  %3205 = vrot.lane.b32.xlu0 %v2935, 112
  %v3206 = vpop.permute.xlu0 %3205
  %3207 = vrot.lane.b32.xlu0 %v2939, 112
  %v3208 = vpop.permute.xlu0 %3207
  %3209 = vrot.lane.b32.xlu0 %v2941, 112
  %v3210 = vpop.permute.xlu0 %3209
  %vm3211 = vcmask 916480
  %v3212 = vsel %vm3211, %v3196, %v3198
  %v3213 = vsel %vm3211, %v3200, %v3202
  %v3214 = vsel %vm3211, %v3204, %v3206
  %v3215 = vsel %vm3211, %v3208, %v3210
  %3220 = vmatprep.subr.mxu0 0.0
  %3221 = vmatpush1.msra.mxu0 %v3179
  %3222 = vmatprep.subr.mxu0 0.0
  %3223 = vmatpush1.msra.mxu0 %v3180
  %3224 = vmatprep.subr.mxu0 0.0
  %3225 = vmatpush1.msra.mxu0 %v3181
  %3226 = vmatprep.subr.mxu0 0.0
  %3227 = vmatpush1.msra.mxu0 %v3182
  %3228 = vmatprep.subr.mxu0 0.0
  %3229 = vmatpush1.msra.mxu0 %v3183
  %3230 = vmatprep.subr.mxu0 0.0
  %3231 = vmatpush1.msra.mxu0 %v3184
  %3232 = vmatprep.subr.mxu0 0.0
  %3233 = vmatpush1.msra.mxu0 %v3185
  %3234 = vmatprep.subr.mxu0 0.0
  %3235 = vmatpush1.msra.mxu0 %v3186
  %3236 = vmatprep.subr.mxu0 0.0
  %3237 = vmatpush1.msra.mxu0 %v3187
  %3238 = vmatprep.subr.mxu0 0.0
  %3239 = vmatpush1.msra.mxu0 %v3188
  %3240 = vmatprep.subr.mxu0 0.0
  %3241 = vmatpush1.msra.mxu0 %v3189
  %3242 = vmatprep.subr.mxu0 0.0
  %3243 = vmatpush1.msra.mxu0 %v3190
  %3244 = vmatprep.subr.mxu0 0.0
  %3245 = vmatpush1.msra.mxu0 %v3191
  %3246 = vmatprep.subr.mxu0 0.0
  %3247 = vmatpush1.msra.mxu0 %v3192
  %3248 = vmatprep.subr.mxu0 0.0
  %3249 = vmatpush1.msra.mxu0 %v3193
  %3250 = vmatprep.subr.mxu0 0.0
  %3251 = vmatpush1.msra.mxu0 %v3194
  %3252 = vmatprep.subr.mxu0 0.0
  %3253 = vmatpush1.msra.mxu0 0.0
  %3254 = vmatprep.subr.mxu0 0.0
  %3255 = vmatpush1.msra.mxu0 0.0
  %3256 = vmatprep.subr.mxu0 0.0
  %3257 = vmatpush1.msra.mxu0 0.0
  %3258 = vmatprep.subr.mxu0 0.0
  %3259 = vmatpush1.msra.mxu0 0.0
  %3260 = vmatprep.subr.mxu0 0.0
  %3261 = vmatpush1.msra.mxu0 0.0
  %3262 = vmatprep.subr.mxu0 0.0
  %3263 = vmatpush1.msra.mxu0 0.0
  %3264 = vmatprep.subr.mxu0 0.0
  %3265 = vmatpush1.msra.mxu0 0.0
  %3266 = vmatprep.subr.mxu0 0.0
  %3267 = vmatpush1.msra.mxu0 0.0
  %3268 = vmatprep.subr.mxu0 0.0
  %3269 = vmatpush1.msra.mxu0 0.0
  %3270 = vmatprep.subr.mxu0 0.0
  %3271 = vmatpush1.msra.mxu0 0.0
  %3272 = vmatprep.subr.mxu0 0.0
  %3273 = vmatpush1.msra.mxu0 0.0
  %3274 = vmatprep.subr.mxu0 0.0
  %3275 = vmatpush1.msra.mxu0 0.0
  %3276 = vmatprep.subr.mxu0 0.0
  %3277 = vmatpush1.msra.mxu0 0.0
  %3278 = vmatprep.subr.mxu0 0.0
  %3279 = vmatpush1.msra.mxu0 0.0
  %3280 = vmatprep.subr.mxu0 0.0
  %3281 = vmatpush1.msra.mxu0 0.0
  %3282 = vmatprep.subr.mxu0 0.0
  %3283 = vmatpush1.msra.mxu0 0.0
  %3284 = vmatprep.mubr.f32.mxu0 0.0
  %3285 = vmatmul.mubr.f32.gmra.mrb[0].mxu0 %v3212
  %v3286 = vpop.f32.mrb[0].mxu0
  %v3287 = vadd.f32 0.0, %v3286
  %v3288 = vpop.f32.mrb[0].mxu0
  %3289 = vmatprep.mubr.f32.mxu0 0.0
  %3290 = vmatmul.mubr.f32.gmra.mrb[0].mxu0 %v3213
  %v3291 = vpop.f32.mrb[0].mxu0
  %v3292 = vadd.f32 0.0, %v3291
  %v3293 = vpop.f32.mrb[0].mxu0
  %3294 = vmatprep.mubr.f32.mxu0 0.0
  %3295 = vmatmul.mubr.f32.gmra.mrb[0].mxu0 %v3214
  %v3296 = vpop.f32.mrb[0].mxu0
  %v3297 = vadd.f32 0.0, %v3296
  %v3298 = vpop.f32.mrb[0].mxu0
  %3299 = vmatprep.mubr.f32.mxu0 0.0
  %3300 = vmatmul.mubr.f32.gmra.mrb[0].mxu0 %v3215
  %v3301 = vpop.f32.mrb[0].mxu0
  %v3302 = vadd.f32 0.0, %v3301
  %v3303 = vpop.f32.mrb[0].mxu0
  %3304 = vdwg.mxu0
  %v3305 = vadd.f32 %v3160, %v3287
  %v3306 = vadd.f32 %v3165, %v3292
  %v3307 = vadd.f32 %v3170, %v3297
  %v3308 = vadd.f32 %v3175, %v3302
  %s3309 = scalar_lea.vmem %s5, 32
  %v3310 = vld [vmem:[%s3309] sm:$0xff]
  %v3311 = vld [vmem:[%s3309 + $0x8] sm:$0xff]
  %v3312 = vld [vmem:[%s3309 + $0x10] sm:$0xff]
  %v3313 = vld [vmem:[%s3309 + $0x18] sm:$0xff]
  %v3315 = vsel %vm2841, %v3310, 0
  %v3318 = vsel %vm2841, %v3311, 0
  %v3321 = vsel %vm2841, %v3312, 0
  %v3324 = vsel %vm2841, %v3313, 0
  %3326 = vmatprep.subr.mxu0 %v2805
  %3327 = vmatpush1.msra.mxu0 %v2803
  %3328 = vmatprep.subr.mxu0 %v2811
  %3329 = vmatpush1.msra.mxu0 %v2809
  %3330 = vmatprep.subr.mxu0 %v2817
  %3331 = vmatpush1.msra.mxu0 %v2815
  %3332 = vmatprep.subr.mxu0 %v2823
  %3333 = vmatpush1.msra.mxu0 %v2821
  %3334 = vmatprep.subr.mxu0 %v2829
  %3335 = vmatpush1.msra.mxu0 %v2827
  %3336 = vmatprep.subr.mxu0 %v2835
  %3337 = vmatpush1.msra.mxu0 %v2833
  %3338 = vmatprep.subr.mxu0 0.0
  %3339 = vmatpush1.msra.mxu0 0.0
  %3340 = vmatprep.subr.mxu0 0.0
  %3341 = vmatpush1.msra.mxu0 0.0
  %3342 = vmatprep.subr.mxu0 0.0
  %3343 = vmatpush1.msra.mxu0 0.0
  %3344 = vmatprep.subr.mxu0 0.0
  %3345 = vmatpush1.msra.mxu0 0.0
  %3346 = vmatprep.subr.mxu0 0.0
  %3347 = vmatpush1.msra.mxu0 0.0
  %3348 = vmatprep.subr.mxu0 0.0
  %3349 = vmatpush1.msra.mxu0 0.0
  %3350 = vmatprep.subr.mxu0 0.0
  %3351 = vmatpush1.msra.mxu0 0.0
  %3352 = vmatprep.subr.mxu0 0.0
  %3353 = vmatpush1.msra.mxu0 0.0
  %3354 = vmatprep.subr.mxu0 0.0
  %3355 = vmatpush1.msra.mxu0 0.0
  %3356 = vmatprep.subr.mxu0 0.0
  %3357 = vmatpush1.msra.mxu0 0.0
  %3358 = vmatprep.subr.mxu0 0.0
  %3359 = vmatpush1.msra.mxu0 0.0
  %3360 = vmatprep.subr.mxu0 0.0
  %3361 = vmatpush1.msra.mxu0 0.0
  %3362 = vmatprep.subr.mxu0 0.0
  %3363 = vmatpush1.msra.mxu0 0.0
  %3364 = vmatprep.subr.mxu0 0.0
  %3365 = vmatpush1.msra.mxu0 0.0
  %3366 = vmatprep.subr.mxu0 0.0
  %3367 = vmatpush1.msra.mxu0 0.0
  %3368 = vmatprep.subr.mxu0 0.0
  %3369 = vmatpush1.msra.mxu0 0.0
  %3370 = vmatprep.subr.mxu0 0.0
  %3371 = vmatpush1.msra.mxu0 0.0
  %3372 = vmatprep.subr.mxu0 0.0
  %3373 = vmatpush1.msra.mxu0 0.0
  %3374 = vmatprep.subr.mxu0 0.0
  %3375 = vmatpush1.msra.mxu0 0.0
  %3376 = vmatprep.subr.mxu0 0.0
  %3377 = vmatpush1.msra.mxu0 0.0
  %3378 = vmatprep.subr.mxu0 0.0
  %3379 = vmatpush1.msra.mxu0 0.0
  %3380 = vmatprep.subr.mxu0 0.0
  %3381 = vmatpush1.msra.mxu0 0.0
  %3382 = vmatprep.subr.mxu0 0.0
  %3383 = vmatpush1.msra.mxu0 0.0
  %3384 = vmatprep.subr.mxu0 0.0
  %3385 = vmatpush1.msra.mxu0 0.0
  %3386 = vmatprep.subr.mxu0 0.0
  %3387 = vmatpush1.msra.mxu0 0.0
  %3388 = vmatprep.subr.mxu0 0.0
  %3389 = vmatpush1.msra.mxu0 0.0
  %3390 = vmatprep.mubr.f32.mxu0 0.0
  %3391 = vmatmul.mubr.f32.gmra.mrb[0].mxu0 %v3315
  %v3392 = vpop.f32.mrb[0].mxu0
  %v3393 = vadd.f32 0.0, %v3392
  %v3394 = vpop.f32.mrb[0].mxu0
  %v3395 = vadd.f32 0.0, %v3394
  %3396 = vmatprep.mubr.f32.mxu0 0.0
  %3397 = vmatmul.mubr.f32.gmra.mrb[0].mxu0 %v3318
  %v3398 = vpop.f32.mrb[0].mxu0
  %v3399 = vadd.f32 0.0, %v3398
  %v3400 = vpop.f32.mrb[0].mxu0
  %v3401 = vadd.f32 0.0, %v3400
  %3402 = vmatprep.mubr.f32.mxu0 0.0
  %3403 = vmatmul.mubr.f32.gmra.mrb[0].mxu0 %v3321
  %v3404 = vpop.f32.mrb[0].mxu0
  %v3405 = vadd.f32 0.0, %v3404
  %v3406 = vpop.f32.mrb[0].mxu0
  %v3407 = vadd.f32 0.0, %v3406
  %3408 = vmatprep.mubr.f32.mxu0 0.0
  %3409 = vmatmul.mubr.f32.gmra.mrb[0].mxu0 %v3324
  %v3410 = vpop.f32.mrb[0].mxu0
  %v3411 = vadd.f32 0.0, %v3410
  %v3412 = vpop.f32.mrb[0].mxu0
  %v3413 = vadd.f32 0.0, %v3412
  %3414 = vdwg.mxu0
  %s3415 = scalar_lea.vmem %s11, 384
  %v3416 = vld [vmem:[%s3415] sm:$0xff]
  %v3417 = vld [vmem:[%s3415 + $0x8] sm:$0xff]
  %v3418 = vld [vmem:[%s3415 + $0x10] sm:$0xff]
  %v3419 = vld [vmem:[%s3415 + $0x18] sm:$0xff]
  %v3420 = vld [vmem:[%s3415 + $0x20] sm:$0xff]
  %v3421 = vld [vmem:[%s3415 + $0x28] sm:$0xff]
  %v3422 = vld [vmem:[%s3415 + $0x30] sm:$0xff]
  %v3423 = vld [vmem:[%s3415 + $0x38] sm:$0xff]
  %v3424 = vld [vmem:[%s3415 + $0x40] sm:$0xff]
  %v3425 = vld [vmem:[%s3415 + $0x48] sm:$0xff]
  %v3426 = vld [vmem:[%s3415 + $0x50] sm:$0xff]
  %v3427 = vld [vmem:[%s3415 + $0x58] sm:$0xff]
  %v3428 = vld [vmem:[%s3415 + $0x60] sm:$0xff]
  %v3429 = vld [vmem:[%s3415 + $0x68] sm:$0xff]
  %v3430 = vld [vmem:[%s3415 + $0x70] sm:$0xff]
  %v3431 = vld [vmem:[%s3415 + $0x78] sm:$0xff]
  %3432 = vmatprep.subr.mxu0 0.0
  %3433 = vmatpush1.msra.mxu0 %v3416
  %3434 = vmatprep.subr.mxu0 0.0
  %3435 = vmatpush1.msra.mxu0 %v3417
  %3436 = vmatprep.subr.mxu0 0.0
  %3437 = vmatpush1.msra.mxu0 %v3418
  %3438 = vmatprep.subr.mxu0 0.0
  %3439 = vmatpush1.msra.mxu0 %v3419
  %3440 = vmatprep.subr.mxu0 0.0
  %3441 = vmatpush1.msra.mxu0 %v3420
  %3442 = vmatprep.subr.mxu0 0.0
  %3443 = vmatpush1.msra.mxu0 %v3421
  %3444 = vmatprep.subr.mxu0 0.0
  %3445 = vmatpush1.msra.mxu0 %v3422
  %3446 = vmatprep.subr.mxu0 0.0
  %3447 = vmatpush1.msra.mxu0 %v3423
  %3448 = vmatprep.subr.mxu0 0.0
  %3449 = vmatpush1.msra.mxu0 %v3424
  %3450 = vmatprep.subr.mxu0 0.0
  %3451 = vmatpush1.msra.mxu0 %v3425
  %3452 = vmatprep.subr.mxu0 0.0
  %3453 = vmatpush1.msra.mxu0 %v3426
  %3454 = vmatprep.subr.mxu0 0.0
  %3455 = vmatpush1.msra.mxu0 %v3427
  %3456 = vmatprep.subr.mxu0 0.0
  %3457 = vmatpush1.msra.mxu0 %v3428
  %3458 = vmatprep.subr.mxu0 0.0
  %3459 = vmatpush1.msra.mxu0 %v3429
  %3460 = vmatprep.subr.mxu0 0.0
  %3461 = vmatpush1.msra.mxu0 %v3430
  %3462 = vmatprep.subr.mxu0 0.0
  %3463 = vmatpush1.msra.mxu0 %v3431
  %3464 = vmatprep.subr.mxu0 0.0
  %3465 = vmatpush1.msra.mxu0 0.0
  %3466 = vmatprep.subr.mxu0 0.0
  %3467 = vmatpush1.msra.mxu0 0.0
  %3468 = vmatprep.subr.mxu0 0.0
  %3469 = vmatpush1.msra.mxu0 0.0
  %3470 = vmatprep.subr.mxu0 0.0
  %3471 = vmatpush1.msra.mxu0 0.0
  %3472 = vmatprep.subr.mxu0 0.0
  %3473 = vmatpush1.msra.mxu0 0.0
  %3474 = vmatprep.subr.mxu0 0.0
  %3475 = vmatpush1.msra.mxu0 0.0
  %3476 = vmatprep.subr.mxu0 0.0
  %3477 = vmatpush1.msra.mxu0 0.0
  %3478 = vmatprep.subr.mxu0 0.0
  %3479 = vmatpush1.msra.mxu0 0.0
  %3480 = vmatprep.subr.mxu0 0.0
  %3481 = vmatpush1.msra.mxu0 0.0
  %3482 = vmatprep.subr.mxu0 0.0
  %3483 = vmatpush1.msra.mxu0 0.0
  %3484 = vmatprep.subr.mxu0 0.0
  %3485 = vmatpush1.msra.mxu0 0.0
  %3486 = vmatprep.subr.mxu0 0.0
  %3487 = vmatpush1.msra.mxu0 0.0
  %3488 = vmatprep.subr.mxu0 0.0
  %3489 = vmatpush1.msra.mxu0 0.0
  %3490 = vmatprep.subr.mxu0 0.0
  %3491 = vmatpush1.msra.mxu0 0.0
  %3492 = vmatprep.subr.mxu0 0.0
  %3493 = vmatpush1.msra.mxu0 0.0
  %3494 = vmatprep.subr.mxu0 0.0
  %3495 = vmatpush1.msra.mxu0 0.0
  %3496 = vmatprep.mubr.f32.mxu0 0.0
  %3497 = vmatmul.mubr.f32.gmra.mrb[0].mxu0 %v3393
  %v3498 = vpop.f32.mrb[0].mxu0
  %v3499 = vadd.f32 0.0, %v3498
  %v3500 = vpop.f32.mrb[0].mxu0
  %3501 = vmatprep.mubr.f32.mxu0 0.0
  %3502 = vmatmul.mubr.f32.gmra.mrb[0].mxu0 %v3399
  %v3503 = vpop.f32.mrb[0].mxu0
  %v3504 = vadd.f32 0.0, %v3503
  %v3505 = vpop.f32.mrb[0].mxu0
  %3506 = vmatprep.mubr.f32.mxu0 0.0
  %3507 = vmatmul.mubr.f32.gmra.mrb[0].mxu0 %v3405
  %v3508 = vpop.f32.mrb[0].mxu0
  %v3509 = vadd.f32 0.0, %v3508
  %v3510 = vpop.f32.mrb[0].mxu0
  %3511 = vmatprep.mubr.f32.mxu0 0.0
  %3512 = vmatmul.mubr.f32.gmra.mrb[0].mxu0 %v3411
  %v3513 = vpop.f32.mrb[0].mxu0
  %v3514 = vadd.f32 0.0, %v3513
  %v3515 = vpop.f32.mrb[0].mxu0
  %3516 = vdwg.mxu0
  %v3517 = vadd.f32 %v3305, %v3499
  %v3518 = vadd.f32 %v3306, %v3504
  %v3519 = vadd.f32 %v3307, %v3509
  %v3520 = vadd.f32 %v3308, %v3514
  %s3521 = scalar_lea.vmem %s11, 512
  %v3522 = vld [vmem:[%s3521] sm:$0xff]
  %v3523 = vld [vmem:[%s3521 + $0x8] sm:$0xff]
  %v3524 = vld [vmem:[%s3521 + $0x10] sm:$0xff]
  %v3525 = vld [vmem:[%s3521 + $0x18] sm:$0xff]
  %v3526 = vld [vmem:[%s3521 + $0x20] sm:$0xff]
  %v3527 = vld [vmem:[%s3521 + $0x28] sm:$0xff]
  %v3528 = vld [vmem:[%s3521 + $0x30] sm:$0xff]
  %v3529 = vld [vmem:[%s3521 + $0x38] sm:$0xff]
  %v3530 = vld [vmem:[%s3521 + $0x40] sm:$0xff]
  %v3531 = vld [vmem:[%s3521 + $0x48] sm:$0xff]
  %v3532 = vld [vmem:[%s3521 + $0x50] sm:$0xff]
  %v3533 = vld [vmem:[%s3521 + $0x58] sm:$0xff]
  %v3534 = vld [vmem:[%s3521 + $0x60] sm:$0xff]
  %v3535 = vld [vmem:[%s3521 + $0x68] sm:$0xff]
  %v3536 = vld [vmem:[%s3521 + $0x70] sm:$0xff]
  %v3537 = vld [vmem:[%s3521 + $0x78] sm:$0xff]
  %3546 = vrot.lane.b32.xlu0 %v3393, 120
  %v3547 = vpop.permute.xlu0 %3546
  %3548 = vrot.lane.b32.xlu0 %v3395, 120
  %v3549 = vpop.permute.xlu0 %3548
  %3550 = vrot.lane.b32.xlu0 %v3399, 120
  %v3551 = vpop.permute.xlu0 %3550
  %3552 = vrot.lane.b32.xlu0 %v3401, 120
  %v3553 = vpop.permute.xlu0 %3552
  %3554 = vrot.lane.b32.xlu0 %v3405, 120
  %v3555 = vpop.permute.xlu0 %3554
  %3556 = vrot.lane.b32.xlu0 %v3407, 120
  %v3557 = vpop.permute.xlu0 %3556
  %3558 = vrot.lane.b32.xlu0 %v3411, 120
  %v3559 = vpop.permute.xlu0 %3558
  %3560 = vrot.lane.b32.xlu0 %v3413, 120
  %v3561 = vpop.permute.xlu0 %3560
  %v3562 = vsel %vm649, %v3547, %v3549
  %v3563 = vsel %vm649, %v3551, %v3553
  %v3564 = vsel %vm649, %v3555, %v3557
  %v3565 = vsel %vm649, %v3559, %v3561
  %3570 = vmatprep.subr.mxu0 0.0
  %3571 = vmatpush1.msra.mxu0 %v3522
  %3572 = vmatprep.subr.mxu0 0.0
  %3573 = vmatpush1.msra.mxu0 %v3523
  %3574 = vmatprep.subr.mxu0 0.0
  %3575 = vmatpush1.msra.mxu0 %v3524
  %3576 = vmatprep.subr.mxu0 0.0
  %3577 = vmatpush1.msra.mxu0 %v3525
  %3578 = vmatprep.subr.mxu0 0.0
  %3579 = vmatpush1.msra.mxu0 %v3526
  %3580 = vmatprep.subr.mxu0 0.0
  %3581 = vmatpush1.msra.mxu0 %v3527
  %3582 = vmatprep.subr.mxu0 0.0
  %3583 = vmatpush1.msra.mxu0 %v3528
  %3584 = vmatprep.subr.mxu0 0.0
  %3585 = vmatpush1.msra.mxu0 %v3529
  %3586 = vmatprep.subr.mxu0 0.0
  %3587 = vmatpush1.msra.mxu0 %v3530
  %3588 = vmatprep.subr.mxu0 0.0
  %3589 = vmatpush1.msra.mxu0 %v3531
  %3590 = vmatprep.subr.mxu0 0.0
  %3591 = vmatpush1.msra.mxu0 %v3532
  %3592 = vmatprep.subr.mxu0 0.0
  %3593 = vmatpush1.msra.mxu0 %v3533
  %3594 = vmatprep.subr.mxu0 0.0
  %3595 = vmatpush1.msra.mxu0 %v3534
  %3596 = vmatprep.subr.mxu0 0.0
  %3597 = vmatpush1.msra.mxu0 %v3535
  %3598 = vmatprep.subr.mxu0 0.0
  %3599 = vmatpush1.msra.mxu0 %v3536
  %3600 = vmatprep.subr.mxu0 0.0
  %3601 = vmatpush1.msra.mxu0 %v3537
  %3602 = vmatprep.subr.mxu0 0.0
  %3603 = vmatpush1.msra.mxu0 0.0
  %3604 = vmatprep.subr.mxu0 0.0
  %3605 = vmatpush1.msra.mxu0 0.0
  %3606 = vmatprep.subr.mxu0 0.0
  %3607 = vmatpush1.msra.mxu0 0.0
  %3608 = vmatprep.subr.mxu0 0.0
  %3609 = vmatpush1.msra.mxu0 0.0
  %3610 = vmatprep.subr.mxu0 0.0
  %3611 = vmatpush1.msra.mxu0 0.0
  %3612 = vmatprep.subr.mxu0 0.0
  %3613 = vmatpush1.msra.mxu0 0.0
  %3614 = vmatprep.subr.mxu0 0.0
  %3615 = vmatpush1.msra.mxu0 0.0
  %3616 = vmatprep.subr.mxu0 0.0
  %3617 = vmatpush1.msra.mxu0 0.0
  %3618 = vmatprep.subr.mxu0 0.0
  %3619 = vmatpush1.msra.mxu0 0.0
  %3620 = vmatprep.subr.mxu0 0.0
  %3621 = vmatpush1.msra.mxu0 0.0
  %3622 = vmatprep.subr.mxu0 0.0
  %3623 = vmatpush1.msra.mxu0 0.0
  %3624 = vmatprep.subr.mxu0 0.0
  %3625 = vmatpush1.msra.mxu0 0.0
  %3626 = vmatprep.subr.mxu0 0.0
  %3627 = vmatpush1.msra.mxu0 0.0
  %3628 = vmatprep.subr.mxu0 0.0
  %3629 = vmatpush1.msra.mxu0 0.0
  %3630 = vmatprep.subr.mxu0 0.0
  %3631 = vmatpush1.msra.mxu0 0.0
  %3632 = vmatprep.subr.mxu0 0.0
  %3633 = vmatpush1.msra.mxu0 0.0
  %3634 = vmatprep.mubr.f32.mxu0 0.0
  %3635 = vmatmul.mubr.f32.gmra.mrb[0].mxu0 %v3562
  %v3636 = vpop.f32.mrb[0].mxu0
  %v3637 = vadd.f32 0.0, %v3636
  %v3638 = vpop.f32.mrb[0].mxu0
  %3639 = vmatprep.mubr.f32.mxu0 0.0
  %3640 = vmatmul.mubr.f32.gmra.mrb[0].mxu0 %v3563
  %v3641 = vpop.f32.mrb[0].mxu0
  %v3642 = vadd.f32 0.0, %v3641
  %v3643 = vpop.f32.mrb[0].mxu0
  %3644 = vmatprep.mubr.f32.mxu0 0.0
  %3645 = vmatmul.mubr.f32.gmra.mrb[0].mxu0 %v3564
  %v3646 = vpop.f32.mrb[0].mxu0
  %v3647 = vadd.f32 0.0, %v3646
  %v3648 = vpop.f32.mrb[0].mxu0
  %3649 = vmatprep.mubr.f32.mxu0 0.0
  %3650 = vmatmul.mubr.f32.gmra.mrb[0].mxu0 %v3565
  %v3651 = vpop.f32.mrb[0].mxu0
  %v3652 = vadd.f32 0.0, %v3651
  %v3653 = vpop.f32.mrb[0].mxu0
  %3654 = vdwg.mxu0
  %v3655 = vadd.f32 %v3517, %v3637
  %v3656 = vadd.f32 %v3518, %v3642
  %v3657 = vadd.f32 %v3519, %v3647
  %v3658 = vadd.f32 %v3520, %v3652
  %s3659 = scalar_lea.vmem %s11, 640
  %v3660 = vld [vmem:[%s3659] sm:$0xff]
  %v3661 = vld [vmem:[%s3659 + $0x8] sm:$0xff]
  %v3662 = vld [vmem:[%s3659 + $0x10] sm:$0xff]
  %v3663 = vld [vmem:[%s3659 + $0x18] sm:$0xff]
  %v3664 = vld [vmem:[%s3659 + $0x20] sm:$0xff]
  %v3665 = vld [vmem:[%s3659 + $0x28] sm:$0xff]
  %v3666 = vld [vmem:[%s3659 + $0x30] sm:$0xff]
  %v3667 = vld [vmem:[%s3659 + $0x38] sm:$0xff]
  %v3668 = vld [vmem:[%s3659 + $0x40] sm:$0xff]
  %v3669 = vld [vmem:[%s3659 + $0x48] sm:$0xff]
  %v3670 = vld [vmem:[%s3659 + $0x50] sm:$0xff]
  %v3671 = vld [vmem:[%s3659 + $0x58] sm:$0xff]
  %v3672 = vld [vmem:[%s3659 + $0x60] sm:$0xff]
  %v3673 = vld [vmem:[%s3659 + $0x68] sm:$0xff]
  %v3674 = vld [vmem:[%s3659 + $0x70] sm:$0xff]
  %v3675 = vld [vmem:[%s3659 + $0x78] sm:$0xff]
  %3676 = vrot.lane.b32.xlu0 %v3393, 112
  %v3677 = vpop.permute.xlu0 %3676
  %3678 = vrot.lane.b32.xlu0 %v3395, 112
  %v3679 = vpop.permute.xlu0 %3678
  %3680 = vrot.lane.b32.xlu0 %v3399, 112
  %v3681 = vpop.permute.xlu0 %3680
  %3682 = vrot.lane.b32.xlu0 %v3401, 112
  %v3683 = vpop.permute.xlu0 %3682
  %3684 = vrot.lane.b32.xlu0 %v3405, 112
  %v3685 = vpop.permute.xlu0 %3684
  %3686 = vrot.lane.b32.xlu0 %v3407, 112
  %v3687 = vpop.permute.xlu0 %3686
  %3688 = vrot.lane.b32.xlu0 %v3411, 112
  %v3689 = vpop.permute.xlu0 %3688
  %3690 = vrot.lane.b32.xlu0 %v3413, 112
  %v3691 = vpop.permute.xlu0 %3690
  %v3692 = vsel %vm3211, %v3677, %v3679
  %v3693 = vsel %vm3211, %v3681, %v3683
  %v3694 = vsel %vm3211, %v3685, %v3687
  %v3695 = vsel %vm3211, %v3689, %v3691
  %3700 = vmatprep.subr.mxu0 0.0
  %3701 = vmatpush1.msra.mxu0 %v3660
  %3702 = vmatprep.subr.mxu0 0.0
  %3703 = vmatpush1.msra.mxu0 %v3661
  %3704 = vmatprep.subr.mxu0 0.0
  %3705 = vmatpush1.msra.mxu0 %v3662
  %3706 = vmatprep.subr.mxu0 0.0
  %3707 = vmatpush1.msra.mxu0 %v3663
  %3708 = vmatprep.subr.mxu0 0.0
  %3709 = vmatpush1.msra.mxu0 %v3664
  %3710 = vmatprep.subr.mxu0 0.0
  %3711 = vmatpush1.msra.mxu0 %v3665
  %3712 = vmatprep.subr.mxu0 0.0
  %3713 = vmatpush1.msra.mxu0 %v3666
  %3714 = vmatprep.subr.mxu0 0.0
  %3715 = vmatpush1.msra.mxu0 %v3667
  %3716 = vmatprep.subr.mxu0 0.0
  %3717 = vmatpush1.msra.mxu0 %v3668
  %3718 = vmatprep.subr.mxu0 0.0
  %3719 = vmatpush1.msra.mxu0 %v3669
  %3720 = vmatprep.subr.mxu0 0.0
  %3721 = vmatpush1.msra.mxu0 %v3670
  %3722 = vmatprep.subr.mxu0 0.0
  %3723 = vmatpush1.msra.mxu0 %v3671
  %3724 = vmatprep.subr.mxu0 0.0
  %3725 = vmatpush1.msra.mxu0 %v3672
  %3726 = vmatprep.subr.mxu0 0.0
  %3727 = vmatpush1.msra.mxu0 %v3673
  %3728 = vmatprep.subr.mxu0 0.0
  %3729 = vmatpush1.msra.mxu0 %v3674
  %3730 = vmatprep.subr.mxu0 0.0
  %3731 = vmatpush1.msra.mxu0 %v3675
  %3732 = vmatprep.subr.mxu0 0.0
  %3733 = vmatpush1.msra.mxu0 0.0
  %3734 = vmatprep.subr.mxu0 0.0
  %3735 = vmatpush1.msra.mxu0 0.0
  %3736 = vmatprep.subr.mxu0 0.0
  %3737 = vmatpush1.msra.mxu0 0.0
  %3738 = vmatprep.subr.mxu0 0.0
  %3739 = vmatpush1.msra.mxu0 0.0
  %3740 = vmatprep.subr.mxu0 0.0
  %3741 = vmatpush1.msra.mxu0 0.0
  %3742 = vmatprep.subr.mxu0 0.0
  %3743 = vmatpush1.msra.mxu0 0.0
  %3744 = vmatprep.subr.mxu0 0.0
  %3745 = vmatpush1.msra.mxu0 0.0
  %3746 = vmatprep.subr.mxu0 0.0
  %3747 = vmatpush1.msra.mxu0 0.0
  %3748 = vmatprep.subr.mxu0 0.0
  %3749 = vmatpush1.msra.mxu0 0.0
  %3750 = vmatprep.subr.mxu0 0.0
  %3751 = vmatpush1.msra.mxu0 0.0
  %3752 = vmatprep.subr.mxu0 0.0
  %3753 = vmatpush1.msra.mxu0 0.0
  %3754 = vmatprep.subr.mxu0 0.0
  %3755 = vmatpush1.msra.mxu0 0.0
  %3756 = vmatprep.subr.mxu0 0.0
  %3757 = vmatpush1.msra.mxu0 0.0
  %3758 = vmatprep.subr.mxu0 0.0
  %3759 = vmatpush1.msra.mxu0 0.0
  %3760 = vmatprep.subr.mxu0 0.0
  %3761 = vmatpush1.msra.mxu0 0.0
  %3762 = vmatprep.subr.mxu0 0.0
  %3763 = vmatpush1.msra.mxu0 0.0
  %3764 = vmatprep.mubr.f32.mxu0 0.0
  %3765 = vmatmul.mubr.f32.gmra.mrb[0].mxu0 %v3692
  %v3766 = vpop.f32.mrb[0].mxu0
  %v3767 = vadd.f32 0.0, %v3766
  %v3768 = vpop.f32.mrb[0].mxu0
  %3769 = vmatprep.mubr.f32.mxu0 0.0
  %3770 = vmatmul.mubr.f32.gmra.mrb[0].mxu0 %v3693
  %v3771 = vpop.f32.mrb[0].mxu0
  %v3772 = vadd.f32 0.0, %v3771
  %v3773 = vpop.f32.mrb[0].mxu0
  %3774 = vmatprep.mubr.f32.mxu0 0.0
  %3775 = vmatmul.mubr.f32.gmra.mrb[0].mxu0 %v3694
  %v3776 = vpop.f32.mrb[0].mxu0
  %v3777 = vadd.f32 0.0, %v3776
  %v3778 = vpop.f32.mrb[0].mxu0
  %3779 = vmatprep.mubr.f32.mxu0 0.0
  %3780 = vmatmul.mubr.f32.gmra.mrb[0].mxu0 %v3695
  %v3781 = vpop.f32.mrb[0].mxu0
  %v3782 = vadd.f32 0.0, %v3781
  %v3783 = vpop.f32.mrb[0].mxu0
  %3784 = vdwg.mxu0
  %v3785 = vadd.f32 %v3655, %v3767
  %v3786 = vadd.f32 %v3656, %v3772
  %v3787 = vadd.f32 %v3657, %v3777
  %v3788 = vadd.f32 %v3658, %v3782
  %s3789 = scalar_lea.vmem %s5, 64
  %v3790 = vld [vmem:[%s3789] sm:$0xff]
  %v3791 = vld [vmem:[%s3789 + $0x8] sm:$0xff]
  %v3792 = vld [vmem:[%s3789 + $0x10] sm:$0xff]
  %v3793 = vld [vmem:[%s3789 + $0x18] sm:$0xff]
  %v3795 = vsel %vm2841, %v3790, 0
  %v3798 = vsel %vm2841, %v3791, 0
  %v3801 = vsel %vm2841, %v3792, 0
  %v3804 = vsel %vm2841, %v3793, 0
  %3806 = vmatprep.subr.mxu0 %v2805
  %3807 = vmatpush1.msra.mxu0 %v2803
  %3808 = vmatprep.subr.mxu0 %v2811
  %3809 = vmatpush1.msra.mxu0 %v2809
  %3810 = vmatprep.subr.mxu0 %v2817
  %3811 = vmatpush1.msra.mxu0 %v2815
  %3812 = vmatprep.subr.mxu0 %v2823
  %3813 = vmatpush1.msra.mxu0 %v2821
  %3814 = vmatprep.subr.mxu0 %v2829
  %3815 = vmatpush1.msra.mxu0 %v2827
  %3816 = vmatprep.subr.mxu0 %v2835
  %3817 = vmatpush1.msra.mxu0 %v2833
  %3818 = vmatprep.subr.mxu0 0.0
  %3819 = vmatpush1.msra.mxu0 0.0
  %3820 = vmatprep.subr.mxu0 0.0
  %3821 = vmatpush1.msra.mxu0 0.0
  %3822 = vmatprep.subr.mxu0 0.0
  %3823 = vmatpush1.msra.mxu0 0.0
  %3824 = vmatprep.subr.mxu0 0.0
  %3825 = vmatpush1.msra.mxu0 0.0
  %3826 = vmatprep.subr.mxu0 0.0
  %3827 = vmatpush1.msra.mxu0 0.0
  %3828 = vmatprep.subr.mxu0 0.0
  %3829 = vmatpush1.msra.mxu0 0.0
  %3830 = vmatprep.subr.mxu0 0.0
  %3831 = vmatpush1.msra.mxu0 0.0
  %3832 = vmatprep.subr.mxu0 0.0
  %3833 = vmatpush1.msra.mxu0 0.0
  %3834 = vmatprep.subr.mxu0 0.0
  %3835 = vmatpush1.msra.mxu0 0.0
  %3836 = vmatprep.subr.mxu0 0.0
  %3837 = vmatpush1.msra.mxu0 0.0
  %3838 = vmatprep.subr.mxu0 0.0
  %3839 = vmatpush1.msra.mxu0 0.0
  %3840 = vmatprep.subr.mxu0 0.0
  %3841 = vmatpush1.msra.mxu0 0.0
  %3842 = vmatprep.subr.mxu0 0.0
  %3843 = vmatpush1.msra.mxu0 0.0
  %3844 = vmatprep.subr.mxu0 0.0
  %3845 = vmatpush1.msra.mxu0 0.0
  %3846 = vmatprep.subr.mxu0 0.0
  %3847 = vmatpush1.msra.mxu0 0.0
  %3848 = vmatprep.subr.mxu0 0.0
  %3849 = vmatpush1.msra.mxu0 0.0
  %3850 = vmatprep.subr.mxu0 0.0
  %3851 = vmatpush1.msra.mxu0 0.0
  %3852 = vmatprep.subr.mxu0 0.0
  %3853 = vmatpush1.msra.mxu0 0.0
  %3854 = vmatprep.subr.mxu0 0.0
  %3855 = vmatpush1.msra.mxu0 0.0
  %3856 = vmatprep.subr.mxu0 0.0
  %3857 = vmatpush1.msra.mxu0 0.0
  %3858 = vmatprep.subr.mxu0 0.0
  %3859 = vmatpush1.msra.mxu0 0.0
  %3860 = vmatprep.subr.mxu0 0.0
  %3861 = vmatpush1.msra.mxu0 0.0
  %3862 = vmatprep.subr.mxu0 0.0
  %3863 = vmatpush1.msra.mxu0 0.0
  %3864 = vmatprep.subr.mxu0 0.0
  %3865 = vmatpush1.msra.mxu0 0.0
  %3866 = vmatprep.subr.mxu0 0.0
  %3867 = vmatpush1.msra.mxu0 0.0
  %3868 = vmatprep.subr.mxu0 0.0
  %3869 = vmatpush1.msra.mxu0 0.0
  %3870 = vmatprep.mubr.f32.mxu0 0.0
  %3871 = vmatmul.mubr.f32.gmra.mrb[0].mxu0 %v3795
  %v3872 = vpop.f32.mrb[0].mxu0
  %v3873 = vadd.f32 0.0, %v3872
  %v3874 = vpop.f32.mrb[0].mxu0
  %v3875 = vadd.f32 0.0, %v3874
  %3876 = vmatprep.mubr.f32.mxu0 0.0
  %3877 = vmatmul.mubr.f32.gmra.mrb[0].mxu0 %v3798
  %v3878 = vpop.f32.mrb[0].mxu0
  %v3879 = vadd.f32 0.0, %v3878
  %v3880 = vpop.f32.mrb[0].mxu0
  %v3881 = vadd.f32 0.0, %v3880
  %3882 = vmatprep.mubr.f32.mxu0 0.0
  %3883 = vmatmul.mubr.f32.gmra.mrb[0].mxu0 %v3801
  %v3884 = vpop.f32.mrb[0].mxu0
  %v3885 = vadd.f32 0.0, %v3884
  %v3886 = vpop.f32.mrb[0].mxu0
  %v3887 = vadd.f32 0.0, %v3886
  %3888 = vmatprep.mubr.f32.mxu0 0.0
  %3889 = vmatmul.mubr.f32.gmra.mrb[0].mxu0 %v3804
  %v3890 = vpop.f32.mrb[0].mxu0
  %v3891 = vadd.f32 0.0, %v3890
  %v3892 = vpop.f32.mrb[0].mxu0
  %v3893 = vadd.f32 0.0, %v3892
  %3894 = vdwg.mxu0
  %s3895 = scalar_lea.vmem %s11, 768
  %v3896 = vld [vmem:[%s3895] sm:$0xff]
  %v3897 = vld [vmem:[%s3895 + $0x8] sm:$0xff]
  %v3898 = vld [vmem:[%s3895 + $0x10] sm:$0xff]
  %v3899 = vld [vmem:[%s3895 + $0x18] sm:$0xff]
  %v3900 = vld [vmem:[%s3895 + $0x20] sm:$0xff]
  %v3901 = vld [vmem:[%s3895 + $0x28] sm:$0xff]
  %v3902 = vld [vmem:[%s3895 + $0x30] sm:$0xff]
  %v3903 = vld [vmem:[%s3895 + $0x38] sm:$0xff]
  %v3904 = vld [vmem:[%s3895 + $0x40] sm:$0xff]
  %v3905 = vld [vmem:[%s3895 + $0x48] sm:$0xff]
  %v3906 = vld [vmem:[%s3895 + $0x50] sm:$0xff]
  %v3907 = vld [vmem:[%s3895 + $0x58] sm:$0xff]
  %v3908 = vld [vmem:[%s3895 + $0x60] sm:$0xff]
  %v3909 = vld [vmem:[%s3895 + $0x68] sm:$0xff]
  %v3910 = vld [vmem:[%s3895 + $0x70] sm:$0xff]
  %v3911 = vld [vmem:[%s3895 + $0x78] sm:$0xff]
  %3912 = vmatprep.subr.mxu0 0.0
  %3913 = vmatpush1.msra.mxu0 %v3896
  %3914 = vmatprep.subr.mxu0 0.0
  %3915 = vmatpush1.msra.mxu0 %v3897
  %3916 = vmatprep.subr.mxu0 0.0
  %3917 = vmatpush1.msra.mxu0 %v3898
  %3918 = vmatprep.subr.mxu0 0.0
  %3919 = vmatpush1.msra.mxu0 %v3899
  %3920 = vmatprep.subr.mxu0 0.0
  %3921 = vmatpush1.msra.mxu0 %v3900
  %3922 = vmatprep.subr.mxu0 0.0
  %3923 = vmatpush1.msra.mxu0 %v3901
  %3924 = vmatprep.subr.mxu0 0.0
  %3925 = vmatpush1.msra.mxu0 %v3902
  %3926 = vmatprep.subr.mxu0 0.0
  %3927 = vmatpush1.msra.mxu0 %v3903
  %3928 = vmatprep.subr.mxu0 0.0
  %3929 = vmatpush1.msra.mxu0 %v3904
  %3930 = vmatprep.subr.mxu0 0.0
  %3931 = vmatpush1.msra.mxu0 %v3905
  %3932 = vmatprep.subr.mxu0 0.0
  %3933 = vmatpush1.msra.mxu0 %v3906
  %3934 = vmatprep.subr.mxu0 0.0
  %3935 = vmatpush1.msra.mxu0 %v3907
  %3936 = vmatprep.subr.mxu0 0.0
  %3937 = vmatpush1.msra.mxu0 %v3908
  %3938 = vmatprep.subr.mxu0 0.0
  %3939 = vmatpush1.msra.mxu0 %v3909
  %3940 = vmatprep.subr.mxu0 0.0
  %3941 = vmatpush1.msra.mxu0 %v3910
  %3942 = vmatprep.subr.mxu0 0.0
  %3943 = vmatpush1.msra.mxu0 %v3911
  %3944 = vmatprep.subr.mxu0 0.0
  %3945 = vmatpush1.msra.mxu0 0.0
  %3946 = vmatprep.subr.mxu0 0.0
  %3947 = vmatpush1.msra.mxu0 0.0
  %3948 = vmatprep.subr.mxu0 0.0
  %3949 = vmatpush1.msra.mxu0 0.0
  %3950 = vmatprep.subr.mxu0 0.0
  %3951 = vmatpush1.msra.mxu0 0.0
  %3952 = vmatprep.subr.mxu0 0.0
  %3953 = vmatpush1.msra.mxu0 0.0
  %3954 = vmatprep.subr.mxu0 0.0
  %3955 = vmatpush1.msra.mxu0 0.0
  %3956 = vmatprep.subr.mxu0 0.0
  %3957 = vmatpush1.msra.mxu0 0.0
  %3958 = vmatprep.subr.mxu0 0.0
  %3959 = vmatpush1.msra.mxu0 0.0
  %3960 = vmatprep.subr.mxu0 0.0
  %3961 = vmatpush1.msra.mxu0 0.0
  %3962 = vmatprep.subr.mxu0 0.0
  %3963 = vmatpush1.msra.mxu0 0.0
  %3964 = vmatprep.subr.mxu0 0.0
  %3965 = vmatpush1.msra.mxu0 0.0
  %3966 = vmatprep.subr.mxu0 0.0
  %3967 = vmatpush1.msra.mxu0 0.0
  %3968 = vmatprep.subr.mxu0 0.0
  %3969 = vmatpush1.msra.mxu0 0.0
  %3970 = vmatprep.subr.mxu0 0.0
  %3971 = vmatpush1.msra.mxu0 0.0
  %3972 = vmatprep.subr.mxu0 0.0
  %3973 = vmatpush1.msra.mxu0 0.0
  %3974 = vmatprep.subr.mxu0 0.0
  %3975 = vmatpush1.msra.mxu0 0.0
  %3976 = vmatprep.mubr.f32.mxu0 0.0
  %3977 = vmatmul.mubr.f32.gmra.mrb[0].mxu0 %v3873
  %v3978 = vpop.f32.mrb[0].mxu0
  %v3979 = vadd.f32 0.0, %v3978
  %v3980 = vpop.f32.mrb[0].mxu0
  %3981 = vmatprep.mubr.f32.mxu0 0.0
  %3982 = vmatmul.mubr.f32.gmra.mrb[0].mxu0 %v3879
  %v3983 = vpop.f32.mrb[0].mxu0
  %v3984 = vadd.f32 0.0, %v3983
  %v3985 = vpop.f32.mrb[0].mxu0
  %3986 = vmatprep.mubr.f32.mxu0 0.0
  %3987 = vmatmul.mubr.f32.gmra.mrb[0].mxu0 %v3885
  %v3988 = vpop.f32.mrb[0].mxu0
  %v3989 = vadd.f32 0.0, %v3988
  %v3990 = vpop.f32.mrb[0].mxu0
  %3991 = vmatprep.mubr.f32.mxu0 0.0
  %3992 = vmatmul.mubr.f32.gmra.mrb[0].mxu0 %v3891
  %v3993 = vpop.f32.mrb[0].mxu0
  %v3994 = vadd.f32 0.0, %v3993
  %v3995 = vpop.f32.mrb[0].mxu0
  %3996 = vdwg.mxu0
  %v3997 = vadd.f32 %v3785, %v3979
  %v3998 = vadd.f32 %v3786, %v3984
  %v3999 = vadd.f32 %v3787, %v3989
  %v4000 = vadd.f32 %v3788, %v3994
  %s4001 = scalar_lea.vmem %s11, 896
  %v4002 = vld [vmem:[%s4001] sm:$0xff]
  %v4003 = vld [vmem:[%s4001 + $0x8] sm:$0xff]
  %v4004 = vld [vmem:[%s4001 + $0x10] sm:$0xff]
  %v4005 = vld [vmem:[%s4001 + $0x18] sm:$0xff]
  %v4006 = vld [vmem:[%s4001 + $0x20] sm:$0xff]
  %v4007 = vld [vmem:[%s4001 + $0x28] sm:$0xff]
  %v4008 = vld [vmem:[%s4001 + $0x30] sm:$0xff]
  %v4009 = vld [vmem:[%s4001 + $0x38] sm:$0xff]
  %v4010 = vld [vmem:[%s4001 + $0x40] sm:$0xff]
  %v4011 = vld [vmem:[%s4001 + $0x48] sm:$0xff]
  %v4012 = vld [vmem:[%s4001 + $0x50] sm:$0xff]
  %v4013 = vld [vmem:[%s4001 + $0x58] sm:$0xff]
  %v4014 = vld [vmem:[%s4001 + $0x60] sm:$0xff]
  %v4015 = vld [vmem:[%s4001 + $0x68] sm:$0xff]
  %v4016 = vld [vmem:[%s4001 + $0x70] sm:$0xff]
  %v4017 = vld [vmem:[%s4001 + $0x78] sm:$0xff]
  %4026 = vrot.lane.b32.xlu0 %v3873, 120
  %v4027 = vpop.permute.xlu0 %4026
  %4028 = vrot.lane.b32.xlu0 %v3875, 120
  %v4029 = vpop.permute.xlu0 %4028
  %4030 = vrot.lane.b32.xlu0 %v3879, 120
  %v4031 = vpop.permute.xlu0 %4030
  %4032 = vrot.lane.b32.xlu0 %v3881, 120
  %v4033 = vpop.permute.xlu0 %4032
  %4034 = vrot.lane.b32.xlu0 %v3885, 120
  %v4035 = vpop.permute.xlu0 %4034
  %4036 = vrot.lane.b32.xlu0 %v3887, 120
  %v4037 = vpop.permute.xlu0 %4036
  %4038 = vrot.lane.b32.xlu0 %v3891, 120
  %v4039 = vpop.permute.xlu0 %4038
  %4040 = vrot.lane.b32.xlu0 %v3893, 120
  %v4041 = vpop.permute.xlu0 %4040
  %v4042 = vsel %vm649, %v4027, %v4029
  %v4043 = vsel %vm649, %v4031, %v4033
  %v4044 = vsel %vm649, %v4035, %v4037
  %v4045 = vsel %vm649, %v4039, %v4041
  %4050 = vmatprep.subr.mxu0 0.0
  %4051 = vmatpush1.msra.mxu0 %v4002
  %4052 = vmatprep.subr.mxu0 0.0
  %4053 = vmatpush1.msra.mxu0 %v4003
  %4054 = vmatprep.subr.mxu0 0.0
  %4055 = vmatpush1.msra.mxu0 %v4004
  %4056 = vmatprep.subr.mxu0 0.0
  %4057 = vmatpush1.msra.mxu0 %v4005
  %4058 = vmatprep.subr.mxu0 0.0
  %4059 = vmatpush1.msra.mxu0 %v4006
  %4060 = vmatprep.subr.mxu0 0.0
  %4061 = vmatpush1.msra.mxu0 %v4007
  %4062 = vmatprep.subr.mxu0 0.0
  %4063 = vmatpush1.msra.mxu0 %v4008
  %4064 = vmatprep.subr.mxu0 0.0
  %4065 = vmatpush1.msra.mxu0 %v4009
  %4066 = vmatprep.subr.mxu0 0.0
  %4067 = vmatpush1.msra.mxu0 %v4010
  %4068 = vmatprep.subr.mxu0 0.0
  %4069 = vmatpush1.msra.mxu0 %v4011
  %4070 = vmatprep.subr.mxu0 0.0
  %4071 = vmatpush1.msra.mxu0 %v4012
  %4072 = vmatprep.subr.mxu0 0.0
  %4073 = vmatpush1.msra.mxu0 %v4013
  %4074 = vmatprep.subr.mxu0 0.0
  %4075 = vmatpush1.msra.mxu0 %v4014
  %4076 = vmatprep.subr.mxu0 0.0
  %4077 = vmatpush1.msra.mxu0 %v4015
  %4078 = vmatprep.subr.mxu0 0.0
  %4079 = vmatpush1.msra.mxu0 %v4016
  %4080 = vmatprep.subr.mxu0 0.0
  %4081 = vmatpush1.msra.mxu0 %v4017
  %4082 = vmatprep.subr.mxu0 0.0
  %4083 = vmatpush1.msra.mxu0 0.0
  %4084 = vmatprep.subr.mxu0 0.0
  %4085 = vmatpush1.msra.mxu0 0.0
  %4086 = vmatprep.subr.mxu0 0.0
  %4087 = vmatpush1.msra.mxu0 0.0
  %4088 = vmatprep.subr.mxu0 0.0
  %4089 = vmatpush1.msra.mxu0 0.0
  %4090 = vmatprep.subr.mxu0 0.0
  %4091 = vmatpush1.msra.mxu0 0.0
  %4092 = vmatprep.subr.mxu0 0.0
  %4093 = vmatpush1.msra.mxu0 0.0
  %4094 = vmatprep.subr.mxu0 0.0
  %4095 = vmatpush1.msra.mxu0 0.0
  %4096 = vmatprep.subr.mxu0 0.0
  %4097 = vmatpush1.msra.mxu0 0.0
  %4098 = vmatprep.subr.mxu0 0.0
  %4099 = vmatpush1.msra.mxu0 0.0
  %4100 = vmatprep.subr.mxu0 0.0
  %4101 = vmatpush1.msra.mxu0 0.0
  %4102 = vmatprep.subr.mxu0 0.0
  %4103 = vmatpush1.msra.mxu0 0.0
  %4104 = vmatprep.subr.mxu0 0.0
  %4105 = vmatpush1.msra.mxu0 0.0
  %4106 = vmatprep.subr.mxu0 0.0
  %4107 = vmatpush1.msra.mxu0 0.0
  %4108 = vmatprep.subr.mxu0 0.0
  %4109 = vmatpush1.msra.mxu0 0.0
  %4110 = vmatprep.subr.mxu0 0.0
  %4111 = vmatpush1.msra.mxu0 0.0
  %4112 = vmatprep.subr.mxu0 0.0
  %4113 = vmatpush1.msra.mxu0 0.0
  %4114 = vmatprep.mubr.f32.mxu0 0.0
  %4115 = vmatmul.mubr.f32.gmra.mrb[0].mxu0 %v4042
  %v4116 = vpop.f32.mrb[0].mxu0
  %v4117 = vadd.f32 0.0, %v4116
  %v4118 = vpop.f32.mrb[0].mxu0
  %4119 = vmatprep.mubr.f32.mxu0 0.0
  %4120 = vmatmul.mubr.f32.gmra.mrb[0].mxu0 %v4043
  %v4121 = vpop.f32.mrb[0].mxu0
  %v4122 = vadd.f32 0.0, %v4121
  %v4123 = vpop.f32.mrb[0].mxu0
  %4124 = vmatprep.mubr.f32.mxu0 0.0
  %4125 = vmatmul.mubr.f32.gmra.mrb[0].mxu0 %v4044
  %v4126 = vpop.f32.mrb[0].mxu0
  %v4127 = vadd.f32 0.0, %v4126
  %v4128 = vpop.f32.mrb[0].mxu0
  %4129 = vmatprep.mubr.f32.mxu0 0.0
  %4130 = vmatmul.mubr.f32.gmra.mrb[0].mxu0 %v4045
  %v4131 = vpop.f32.mrb[0].mxu0
  %v4132 = vadd.f32 0.0, %v4131
  %v4133 = vpop.f32.mrb[0].mxu0
  %4134 = vdwg.mxu0
  %v4135 = vadd.f32 %v3997, %v4117
  %v4136 = vadd.f32 %v3998, %v4122
  %v4137 = vadd.f32 %v3999, %v4127
  %v4138 = vadd.f32 %v4000, %v4132
  %s4139 = scalar_lea.vmem %s11, 1024
  %v4140 = vld [vmem:[%s4139] sm:$0xff]
  %v4141 = vld [vmem:[%s4139 + $0x8] sm:$0xff]
  %v4142 = vld [vmem:[%s4139 + $0x10] sm:$0xff]
  %v4143 = vld [vmem:[%s4139 + $0x18] sm:$0xff]
  %v4144 = vld [vmem:[%s4139 + $0x20] sm:$0xff]
  %v4145 = vld [vmem:[%s4139 + $0x28] sm:$0xff]
  %v4146 = vld [vmem:[%s4139 + $0x30] sm:$0xff]
  %v4147 = vld [vmem:[%s4139 + $0x38] sm:$0xff]
  %v4148 = vld [vmem:[%s4139 + $0x40] sm:$0xff]
  %v4149 = vld [vmem:[%s4139 + $0x48] sm:$0xff]
  %v4150 = vld [vmem:[%s4139 + $0x50] sm:$0xff]
  %v4151 = vld [vmem:[%s4139 + $0x58] sm:$0xff]
  %v4152 = vld [vmem:[%s4139 + $0x60] sm:$0xff]
  %v4153 = vld [vmem:[%s4139 + $0x68] sm:$0xff]
  %v4154 = vld [vmem:[%s4139 + $0x70] sm:$0xff]
  %v4155 = vld [vmem:[%s4139 + $0x78] sm:$0xff]
  %4156 = vrot.lane.b32.xlu0 %v3873, 112
  %v4157 = vpop.permute.xlu0 %4156
  %4158 = vrot.lane.b32.xlu0 %v3875, 112
  %v4159 = vpop.permute.xlu0 %4158
  %4160 = vrot.lane.b32.xlu0 %v3879, 112
  %v4161 = vpop.permute.xlu0 %4160
  %4162 = vrot.lane.b32.xlu0 %v3881, 112
  %v4163 = vpop.permute.xlu0 %4162
  %4164 = vrot.lane.b32.xlu0 %v3885, 112
  %v4165 = vpop.permute.xlu0 %4164
  %4166 = vrot.lane.b32.xlu0 %v3887, 112
  %v4167 = vpop.permute.xlu0 %4166
  %4168 = vrot.lane.b32.xlu0 %v3891, 112
  %v4169 = vpop.permute.xlu0 %4168
  %4170 = vrot.lane.b32.xlu0 %v3893, 112
  %v4171 = vpop.permute.xlu0 %4170
  %v4172 = vsel %vm3211, %v4157, %v4159
  %v4173 = vsel %vm3211, %v4161, %v4163
  %v4174 = vsel %vm3211, %v4165, %v4167
  %v4175 = vsel %vm3211, %v4169, %v4171
  %4180 = vmatprep.subr.mxu0 0.0
  %4181 = vmatpush1.msra.mxu0 %v4140
  %4182 = vmatprep.subr.mxu0 0.0
  %4183 = vmatpush1.msra.mxu0 %v4141
  %4184 = vmatprep.subr.mxu0 0.0
  %4185 = vmatpush1.msra.mxu0 %v4142
  %4186 = vmatprep.subr.mxu0 0.0
  %4187 = vmatpush1.msra.mxu0 %v4143
  %4188 = vmatprep.subr.mxu0 0.0
  %4189 = vmatpush1.msra.mxu0 %v4144
  %4190 = vmatprep.subr.mxu0 0.0
  %4191 = vmatpush1.msra.mxu0 %v4145
  %4192 = vmatprep.subr.mxu0 0.0
  %4193 = vmatpush1.msra.mxu0 %v4146
  %4194 = vmatprep.subr.mxu0 0.0
  %4195 = vmatpush1.msra.mxu0 %v4147
  %4196 = vmatprep.subr.mxu0 0.0
  %4197 = vmatpush1.msra.mxu0 %v4148
  %4198 = vmatprep.subr.mxu0 0.0
  %4199 = vmatpush1.msra.mxu0 %v4149
  %4200 = vmatprep.subr.mxu0 0.0
  %4201 = vmatpush1.msra.mxu0 %v4150
  %4202 = vmatprep.subr.mxu0 0.0
  %4203 = vmatpush1.msra.mxu0 %v4151
  %4204 = vmatprep.subr.mxu0 0.0
  %4205 = vmatpush1.msra.mxu0 %v4152
  %4206 = vmatprep.subr.mxu0 0.0
  %4207 = vmatpush1.msra.mxu0 %v4153
  %4208 = vmatprep.subr.mxu0 0.0
  %4209 = vmatpush1.msra.mxu0 %v4154
  %4210 = vmatprep.subr.mxu0 0.0
  %4211 = vmatpush1.msra.mxu0 %v4155
  %4212 = vmatprep.subr.mxu0 0.0
  %4213 = vmatpush1.msra.mxu0 0.0
  %4214 = vmatprep.subr.mxu0 0.0
  %4215 = vmatpush1.msra.mxu0 0.0
  %4216 = vmatprep.subr.mxu0 0.0
  %4217 = vmatpush1.msra.mxu0 0.0
  %4218 = vmatprep.subr.mxu0 0.0
  %4219 = vmatpush1.msra.mxu0 0.0
  %4220 = vmatprep.subr.mxu0 0.0
  %4221 = vmatpush1.msra.mxu0 0.0
  %4222 = vmatprep.subr.mxu0 0.0
  %4223 = vmatpush1.msra.mxu0 0.0
  %4224 = vmatprep.subr.mxu0 0.0
  %4225 = vmatpush1.msra.mxu0 0.0
  %4226 = vmatprep.subr.mxu0 0.0
  %4227 = vmatpush1.msra.mxu0 0.0
  %4228 = vmatprep.subr.mxu0 0.0
  %4229 = vmatpush1.msra.mxu0 0.0
  %4230 = vmatprep.subr.mxu0 0.0
  %4231 = vmatpush1.msra.mxu0 0.0
  %4232 = vmatprep.subr.mxu0 0.0
  %4233 = vmatpush1.msra.mxu0 0.0
  %4234 = vmatprep.subr.mxu0 0.0
  %4235 = vmatpush1.msra.mxu0 0.0
  %4236 = vmatprep.subr.mxu0 0.0
  %4237 = vmatpush1.msra.mxu0 0.0
  %4238 = vmatprep.subr.mxu0 0.0
  %4239 = vmatpush1.msra.mxu0 0.0
  %4240 = vmatprep.subr.mxu0 0.0
  %4241 = vmatpush1.msra.mxu0 0.0
  %4242 = vmatprep.subr.mxu0 0.0
  %4243 = vmatpush1.msra.mxu0 0.0
  %4244 = vmatprep.mubr.f32.mxu0 0.0
  %4245 = vmatmul.mubr.f32.gmra.mrb[0].mxu0 %v4172
  %v4246 = vpop.f32.mrb[0].mxu0
  %v4247 = vadd.f32 0.0, %v4246
  %v4248 = vpop.f32.mrb[0].mxu0
  %4249 = vmatprep.mubr.f32.mxu0 0.0
  %4250 = vmatmul.mubr.f32.gmra.mrb[0].mxu0 %v4173
  %v4251 = vpop.f32.mrb[0].mxu0
  %v4252 = vadd.f32 0.0, %v4251
  %v4253 = vpop.f32.mrb[0].mxu0
  %4254 = vmatprep.mubr.f32.mxu0 0.0
  %4255 = vmatmul.mubr.f32.gmra.mrb[0].mxu0 %v4174
  %v4256 = vpop.f32.mrb[0].mxu0
  %v4257 = vadd.f32 0.0, %v4256
  %v4258 = vpop.f32.mrb[0].mxu0
  %4259 = vmatprep.mubr.f32.mxu0 0.0
  %4260 = vmatmul.mubr.f32.gmra.mrb[0].mxu0 %v4175
  %v4261 = vpop.f32.mrb[0].mxu0
  %v4262 = vadd.f32 0.0, %v4261
  %v4263 = vpop.f32.mrb[0].mxu0
  %4264 = vdwg.mxu0
  %v4265 = vadd.f32 %v4135, %v4247
  %v4266 = vadd.f32 %v4136, %v4252
  %v4267 = vadd.f32 %v4137, %v4257
  %v4268 = vadd.f32 %v4138, %v4262
  %v4269 = vld [vmem:[%s12] sm:$0x1]
  %v4271 = vlaneseq
  %v4272 = vshrl.u32 %v4271, 7
  %v4273 = vsub.s32 0, %v4272
  %v4274 = vrot.slane %v4269, %v4273
  %v4276 = vadd.f32 %v4265, %v4274
  %v4277 = vadd.f32 %v4266, %v4274
  %v4278 = vadd.f32 %v4267, %v4274
  %v4279 = vadd.f32 %v4268, %v4274
  %v4280 = vmax.f32 %v4276, 0.0
  %v4281 = vmax.f32 %v4277, 0.0
  %v4282 = vmax.f32 %v4278, 0.0
  %v4283 = vmax.f32 %v4279, 0.0
  %v4284 = vld [vmem:[%s6] sm:$0xff]
  %v4285 = vld [vmem:[%s6 + $0x8] sm:$0xff]
  %v4286 = vld [vmem:[%s6 + $0x10] sm:$0xff]
  %vm4287 = vcmask 261120
  %v4289 = vsel %vm4287, %v4284, 0
  %v4292 = vsel %vm4287, %v4285, 0
  %v4295 = vsel %vm4287, %v4286, 0
  %4297 = vmatprep.subr.mxu0 0.0
  %4298 = vmatpush1.msra.mxu0 %v4280
  %4299 = vmatprep.subr.mxu0 0.0
  %4300 = vmatpush1.msra.mxu0 %v4281
  %4301 = vmatprep.subr.mxu0 0.0
  %4302 = vmatpush1.msra.mxu0 %v4282
  %4303 = vmatprep.subr.mxu0 0.0
  %4304 = vmatpush1.msra.mxu0 %v4283
  %4305 = vmatprep.subr.mxu0 0.0
  %4306 = vmatpush1.msra.mxu0 0.0
  %4307 = vmatprep.subr.mxu0 0.0
  %4308 = vmatpush1.msra.mxu0 0.0
  %4309 = vmatprep.subr.mxu0 0.0
  %4310 = vmatpush1.msra.mxu0 0.0
  %4311 = vmatprep.subr.mxu0 0.0
  %4312 = vmatpush1.msra.mxu0 0.0
  %4313 = vmatprep.subr.mxu0 0.0
  %4314 = vmatpush1.msra.mxu0 0.0
  %4315 = vmatprep.subr.mxu0 0.0
  %4316 = vmatpush1.msra.mxu0 0.0
  %4317 = vmatprep.subr.mxu0 0.0
  %4318 = vmatpush1.msra.mxu0 0.0
  %4319 = vmatprep.subr.mxu0 0.0
  %4320 = vmatpush1.msra.mxu0 0.0
  %4321 = vmatprep.subr.mxu0 0.0
  %4322 = vmatpush1.msra.mxu0 0.0
  %4323 = vmatprep.subr.mxu0 0.0
  %4324 = vmatpush1.msra.mxu0 0.0
  %4325 = vmatprep.subr.mxu0 0.0
  %4326 = vmatpush1.msra.mxu0 0.0
  %4327 = vmatprep.subr.mxu0 0.0
  %4328 = vmatpush1.msra.mxu0 0.0
  %4329 = vmatprep.subr.mxu0 0.0
  %4330 = vmatpush1.msra.mxu0 0.0
  %4331 = vmatprep.subr.mxu0 0.0
  %4332 = vmatpush1.msra.mxu0 0.0
  %4333 = vmatprep.subr.mxu0 0.0
  %4334 = vmatpush1.msra.mxu0 0.0
  %4335 = vmatprep.subr.mxu0 0.0
  %4336 = vmatpush1.msra.mxu0 0.0
  %4337 = vmatprep.subr.mxu0 0.0
  %4338 = vmatpush1.msra.mxu0 0.0
  %4339 = vmatprep.subr.mxu0 0.0
  %4340 = vmatpush1.msra.mxu0 0.0
  %4341 = vmatprep.subr.mxu0 0.0
  %4342 = vmatpush1.msra.mxu0 0.0
  %4343 = vmatprep.subr.mxu0 0.0
  %4344 = vmatpush1.msra.mxu0 0.0
  %4345 = vmatprep.subr.mxu0 0.0
  %4346 = vmatpush1.msra.mxu0 0.0
  %4347 = vmatprep.subr.mxu0 0.0
  %4348 = vmatpush1.msra.mxu0 0.0
  %4349 = vmatprep.subr.mxu0 0.0
  %4350 = vmatpush1.msra.mxu0 0.0
  %4351 = vmatprep.subr.mxu0 0.0
  %4352 = vmatpush1.msra.mxu0 0.0
  %4353 = vmatprep.subr.mxu0 0.0
  %4354 = vmatpush1.msra.mxu0 0.0
  %4355 = vmatprep.subr.mxu0 0.0
  %4356 = vmatpush1.msra.mxu0 0.0
  %4357 = vmatprep.subr.mxu0 0.0
  %4358 = vmatpush1.msra.mxu0 0.0
  %4359 = vmatprep.subr.mxu0 0.0
  %4360 = vmatpush1.msra.mxu0 0.0
  %4361 = vmatprep.mubr.f32.mxu0 0.0
  %4362 = vmatmul.mubr.f32.gmra.mrb[0].mxu0 %v4289
  %v4363 = vpop.f32.mrb[0].mxu0
  %v4364 = vadd.f32 0.0, %v4363
  %v4365 = vpop.f32.mrb[0].mxu0
  %4366 = vmatprep.mubr.f32.mxu0 0.0
  %4367 = vmatmul.mubr.f32.gmra.mrb[0].mxu0 %v4292
  %v4368 = vpop.f32.mrb[0].mxu0
  %v4369 = vadd.f32 0.0, %v4368
  %v4370 = vpop.f32.mrb[0].mxu0
  %4371 = vmatprep.mubr.f32.mxu0 0.0
  %4372 = vmatmul.mubr.f32.gmra.mrb[0].mxu0 %v4295
  %v4373 = vpop.f32.mrb[0].mxu0
  %v4374 = vadd.f32 0.0, %v4373
  %v4375 = vpop.f32.mrb[0].mxu0
  %4376 = vdwg.mxu0
  %v4377 = vld [vmem:[%s7] sm:$0xff]
  %v4378 = vld [vmem:[%s7 + $0x8] sm:$0xff]
  %v4379 = vld [vmem:[%s7 + $0x10] sm:$0xff]
  %v4381 = vsel %vm4287, %v4377, 0
  %v4384 = vsel %vm4287, %v4378, 0
  %v4387 = vsel %vm4287, %v4379, 0
  %4389 = vmatprep.subr.mxu0 0.0
  %4390 = vmatpush1.msra.mxu0 %v4280
  %4391 = vmatprep.subr.mxu0 0.0
  %4392 = vmatpush1.msra.mxu0 %v4281
  %4393 = vmatprep.subr.mxu0 0.0
  %4394 = vmatpush1.msra.mxu0 %v4282
  %4395 = vmatprep.subr.mxu0 0.0
  %4396 = vmatpush1.msra.mxu0 %v4283
  %4397 = vmatprep.subr.mxu0 0.0
  %4398 = vmatpush1.msra.mxu0 0.0
  %4399 = vmatprep.subr.mxu0 0.0
  %4400 = vmatpush1.msra.mxu0 0.0
  %4401 = vmatprep.subr.mxu0 0.0
  %4402 = vmatpush1.msra.mxu0 0.0
  %4403 = vmatprep.subr.mxu0 0.0
  %4404 = vmatpush1.msra.mxu0 0.0
  %4405 = vmatprep.subr.mxu0 0.0
  %4406 = vmatpush1.msra.mxu0 0.0
  %4407 = vmatprep.subr.mxu0 0.0
  %4408 = vmatpush1.msra.mxu0 0.0
  %4409 = vmatprep.subr.mxu0 0.0
  %4410 = vmatpush1.msra.mxu0 0.0
  %4411 = vmatprep.subr.mxu0 0.0
  %4412 = vmatpush1.msra.mxu0 0.0
  %4413 = vmatprep.subr.mxu0 0.0
  %4414 = vmatpush1.msra.mxu0 0.0
  %4415 = vmatprep.subr.mxu0 0.0
  %4416 = vmatpush1.msra.mxu0 0.0
  %4417 = vmatprep.subr.mxu0 0.0
  %4418 = vmatpush1.msra.mxu0 0.0
  %4419 = vmatprep.subr.mxu0 0.0
  %4420 = vmatpush1.msra.mxu0 0.0
  %4421 = vmatprep.subr.mxu0 0.0
  %4422 = vmatpush1.msra.mxu0 0.0
  %4423 = vmatprep.subr.mxu0 0.0
  %4424 = vmatpush1.msra.mxu0 0.0
  %4425 = vmatprep.subr.mxu0 0.0
  %4426 = vmatpush1.msra.mxu0 0.0
  %4427 = vmatprep.subr.mxu0 0.0
  %4428 = vmatpush1.msra.mxu0 0.0
  %4429 = vmatprep.subr.mxu0 0.0
  %4430 = vmatpush1.msra.mxu0 0.0
  %4431 = vmatprep.subr.mxu0 0.0
  %4432 = vmatpush1.msra.mxu0 0.0
  %4433 = vmatprep.subr.mxu0 0.0
  %4434 = vmatpush1.msra.mxu0 0.0
  %4435 = vmatprep.subr.mxu0 0.0
  %4436 = vmatpush1.msra.mxu0 0.0
  %4437 = vmatprep.subr.mxu0 0.0
  %4438 = vmatpush1.msra.mxu0 0.0
  %4439 = vmatprep.subr.mxu0 0.0
  %4440 = vmatpush1.msra.mxu0 0.0
  %4441 = vmatprep.subr.mxu0 0.0
  %4442 = vmatpush1.msra.mxu0 0.0
  %4443 = vmatprep.subr.mxu0 0.0
  %4444 = vmatpush1.msra.mxu0 0.0
  %4445 = vmatprep.subr.mxu0 0.0
  %4446 = vmatpush1.msra.mxu0 0.0
  %4447 = vmatprep.subr.mxu0 0.0
  %4448 = vmatpush1.msra.mxu0 0.0
  %4449 = vmatprep.subr.mxu0 0.0
  %4450 = vmatpush1.msra.mxu0 0.0
  %4451 = vmatprep.subr.mxu0 0.0
  %4452 = vmatpush1.msra.mxu0 0.0
  %4453 = vmatprep.mubr.f32.mxu0 0.0
  %4454 = vmatmul.mubr.f32.gmra.mrb[0].mxu0 %v4381
  %v4455 = vpop.f32.mrb[0].mxu0
  %v4456 = vadd.f32 0.0, %v4455
  %v4457 = vpop.f32.mrb[0].mxu0
  %4458 = vmatprep.mubr.f32.mxu0 0.0
  %4459 = vmatmul.mubr.f32.gmra.mrb[0].mxu0 %v4384
  %v4460 = vpop.f32.mrb[0].mxu0
  %v4461 = vadd.f32 0.0, %v4460
  %v4462 = vpop.f32.mrb[0].mxu0
  %4463 = vmatprep.mubr.f32.mxu0 0.0
  %4464 = vmatmul.mubr.f32.gmra.mrb[0].mxu0 %v4387
  %v4465 = vpop.f32.mrb[0].mxu0
  %v4466 = vadd.f32 0.0, %v4465
  %v4467 = vpop.f32.mrb[0].mxu0
  %4468 = vdwg.mxu0
  %v4469 = vmax.f32 %v4364, %v4456
  %v4470 = vmax.f32 %v4369, %v4461
  %v4471 = vmax.f32 %v4374, %v4466
  %4475 = vrot.lane.b32.xlu0 %v4469, 120
  %v4476 = vpop.permute.xlu0 %4475
  %4477 = vrot.lane.b32.xlu0 %v4470, 120
  %v4478 = vpop.permute.xlu0 %4477
  %4479 = vrot.lane.b32.xlu0 %v4471, 120
  %v4480 = vpop.permute.xlu0 %4479
  %v4484 = vmax.f32 %v4469, %v4476
  %v4485 = vmax.f32 %v4470, %v4478
  %v4486 = vmax.f32 %v4471, %v4480
  %v4487 = vld [vmem:[%s8] sm:$0xff]
  %vm4488 = vcmask 195584
  %v4490 = vsel %vm4488, %v4487, 0
  %4492 = vmatprep.subr.mxu0 0.0
  %4493 = vmatpush1.msra.mxu0 %v4484
  %4494 = vmatprep.subr.mxu0 0.0
  %4495 = vmatpush1.msra.mxu0 %v4485
  %4496 = vmatprep.subr.mxu0 0.0
  %4497 = vmatpush1.msra.mxu0 %v4486
  %4498 = vmatprep.subr.mxu0 0.0
  %4499 = vmatpush1.msra.mxu0 0.0
  %4500 = vmatprep.subr.mxu0 0.0
  %4501 = vmatpush1.msra.mxu0 0.0
  %4502 = vmatprep.subr.mxu0 0.0
  %4503 = vmatpush1.msra.mxu0 0.0
  %4504 = vmatprep.subr.mxu0 0.0
  %4505 = vmatpush1.msra.mxu0 0.0
  %4506 = vmatprep.subr.mxu0 0.0
  %4507 = vmatpush1.msra.mxu0 0.0
  %4508 = vmatprep.subr.mxu0 0.0
  %4509 = vmatpush1.msra.mxu0 0.0
  %4510 = vmatprep.subr.mxu0 0.0
  %4511 = vmatpush1.msra.mxu0 0.0
  %4512 = vmatprep.subr.mxu0 0.0
  %4513 = vmatpush1.msra.mxu0 0.0
  %4514 = vmatprep.subr.mxu0 0.0
  %4515 = vmatpush1.msra.mxu0 0.0
  %4516 = vmatprep.subr.mxu0 0.0
  %4517 = vmatpush1.msra.mxu0 0.0
  %4518 = vmatprep.subr.mxu0 0.0
  %4519 = vmatpush1.msra.mxu0 0.0
  %4520 = vmatprep.subr.mxu0 0.0
  %4521 = vmatpush1.msra.mxu0 0.0
  %4522 = vmatprep.subr.mxu0 0.0
  %4523 = vmatpush1.msra.mxu0 0.0
  %4524 = vmatprep.subr.mxu0 0.0
  %4525 = vmatpush1.msra.mxu0 0.0
  %4526 = vmatprep.subr.mxu0 0.0
  %4527 = vmatpush1.msra.mxu0 0.0
  %4528 = vmatprep.subr.mxu0 0.0
  %4529 = vmatpush1.msra.mxu0 0.0
  %4530 = vmatprep.subr.mxu0 0.0
  %4531 = vmatpush1.msra.mxu0 0.0
  %4532 = vmatprep.subr.mxu0 0.0
  %4533 = vmatpush1.msra.mxu0 0.0
  %4534 = vmatprep.subr.mxu0 0.0
  %4535 = vmatpush1.msra.mxu0 0.0
  %4536 = vmatprep.subr.mxu0 0.0
  %4537 = vmatpush1.msra.mxu0 0.0
  %4538 = vmatprep.subr.mxu0 0.0
  %4539 = vmatpush1.msra.mxu0 0.0
  %4540 = vmatprep.subr.mxu0 0.0
  %4541 = vmatpush1.msra.mxu0 0.0
  %4542 = vmatprep.subr.mxu0 0.0
  %4543 = vmatpush1.msra.mxu0 0.0
  %4544 = vmatprep.subr.mxu0 0.0
  %4545 = vmatpush1.msra.mxu0 0.0
  %4546 = vmatprep.subr.mxu0 0.0
  %4547 = vmatpush1.msra.mxu0 0.0
  %4548 = vmatprep.subr.mxu0 0.0
  %4549 = vmatpush1.msra.mxu0 0.0
  %4550 = vmatprep.subr.mxu0 0.0
  %4551 = vmatpush1.msra.mxu0 0.0
  %4552 = vmatprep.subr.mxu0 0.0
  %4553 = vmatpush1.msra.mxu0 0.0
  %4554 = vmatprep.subr.mxu0 0.0
  %4555 = vmatpush1.msra.mxu0 0.0
  %4556 = vmatprep.mubr.f32.mxu0 0.0
  %4557 = vmatmul.mubr.f32.gmra.mrb[0].mxu0 %v4490
  %v4558 = vpop.f32.mrb[0].mxu0
  %v4559 = vadd.f32 0.0, %v4558
  %v4560 = vpop.f32.mrb[0].mxu0
  %4561 = vdwg.mxu0
  %v4562 = vld [vmem:[%s13] sm:$0xff]
  %v4563 = vld [vmem:[%s13 + $0x8] sm:$0xff]
  %v4564 = vld [vmem:[%s13 + $0x10] sm:$0xff]
  %v4565 = vld [vmem:[%s13 + $0x18] sm:$0xff]
  %v4566 = vld [vmem:[%s13 + $0x20] sm:$0xff]
  %v4567 = vld [vmem:[%s13 + $0x28] sm:$0xff]
  %v4568 = vld [vmem:[%s13 + $0x30] sm:$0xff]
  %v4569 = vld [vmem:[%s13 + $0x38] sm:$0xff]
  %v4570 = vld [vmem:[%s13 + $0x40] sm:$0xff]
  %v4571 = vld [vmem:[%s13 + $0x48] sm:$0xff]
  %v4572 = vld [vmem:[%s13 + $0x50] sm:$0xff]
  %v4573 = vld [vmem:[%s13 + $0x58] sm:$0xff]
  %v4574 = vld [vmem:[%s13 + $0x60] sm:$0xff]
  %v4575 = vld [vmem:[%s13 + $0x68] sm:$0xff]
  %v4576 = vld [vmem:[%s13 + $0x70] sm:$0xff]
  %s4577 = scalar_lea.vmem %s8, 8
  %v4578 = vld [vmem:[%s4577] sm:$0xff]
  %v4580 = vsel %vm4488, %v4578, 0
  %4582 = vmatprep.subr.mxu0 0.0
  %4583 = vmatpush1.msra.mxu0 %v4484
  %4584 = vmatprep.subr.mxu0 0.0
  %4585 = vmatpush1.msra.mxu0 %v4485
  %4586 = vmatprep.subr.mxu0 0.0
  %4587 = vmatpush1.msra.mxu0 %v4486
  %4588 = vmatprep.subr.mxu0 0.0
  %4589 = vmatpush1.msra.mxu0 0.0
  %4590 = vmatprep.subr.mxu0 0.0
  %4591 = vmatpush1.msra.mxu0 0.0
  %4592 = vmatprep.subr.mxu0 0.0
  %4593 = vmatpush1.msra.mxu0 0.0
  %4594 = vmatprep.subr.mxu0 0.0
  %4595 = vmatpush1.msra.mxu0 0.0
  %4596 = vmatprep.subr.mxu0 0.0
  %4597 = vmatpush1.msra.mxu0 0.0
  %4598 = vmatprep.subr.mxu0 0.0
  %4599 = vmatpush1.msra.mxu0 0.0
  %4600 = vmatprep.subr.mxu0 0.0
  %4601 = vmatpush1.msra.mxu0 0.0
  %4602 = vmatprep.subr.mxu0 0.0
  %4603 = vmatpush1.msra.mxu0 0.0
  %4604 = vmatprep.subr.mxu0 0.0
  %4605 = vmatpush1.msra.mxu0 0.0
  %4606 = vmatprep.subr.mxu0 0.0
  %4607 = vmatpush1.msra.mxu0 0.0
  %4608 = vmatprep.subr.mxu0 0.0
  %4609 = vmatpush1.msra.mxu0 0.0
  %4610 = vmatprep.subr.mxu0 0.0
  %4611 = vmatpush1.msra.mxu0 0.0
  %4612 = vmatprep.subr.mxu0 0.0
  %4613 = vmatpush1.msra.mxu0 0.0
  %4614 = vmatprep.subr.mxu0 0.0
  %4615 = vmatpush1.msra.mxu0 0.0
  %4616 = vmatprep.subr.mxu0 0.0
  %4617 = vmatpush1.msra.mxu0 0.0
  %4618 = vmatprep.subr.mxu0 0.0
  %4619 = vmatpush1.msra.mxu0 0.0
  %4620 = vmatprep.subr.mxu0 0.0
  %4621 = vmatpush1.msra.mxu0 0.0
  %4622 = vmatprep.subr.mxu0 0.0
  %4623 = vmatpush1.msra.mxu0 0.0
  %4624 = vmatprep.subr.mxu0 0.0
  %4625 = vmatpush1.msra.mxu0 0.0
  %4626 = vmatprep.subr.mxu0 0.0
  %4627 = vmatpush1.msra.mxu0 0.0
  %4628 = vmatprep.subr.mxu0 0.0
  %4629 = vmatpush1.msra.mxu0 0.0
  %4630 = vmatprep.subr.mxu0 0.0
  %4631 = vmatpush1.msra.mxu0 0.0
  %4632 = vmatprep.subr.mxu0 0.0
  %4633 = vmatpush1.msra.mxu0 0.0
  %4634 = vmatprep.subr.mxu0 0.0
  %4635 = vmatpush1.msra.mxu0 0.0
  %4636 = vmatprep.subr.mxu0 0.0
  %4637 = vmatpush1.msra.mxu0 0.0
  %4638 = vmatprep.subr.mxu0 0.0
  %4639 = vmatpush1.msra.mxu0 0.0
  %4640 = vmatprep.subr.mxu0 0.0
  %4641 = vmatpush1.msra.mxu0 0.0
  %4642 = vmatprep.subr.mxu0 0.0
  %4643 = vmatpush1.msra.mxu0 0.0
  %4644 = vmatprep.subr.mxu0 0.0
  %4645 = vmatpush1.msra.mxu0 0.0
  %4646 = vmatprep.mubr.f32.mxu0 0.0
  %4647 = vmatmul.mubr.f32.gmra.mrb[0].mxu0 %v4580
  %v4648 = vpop.f32.mrb[0].mxu0
  %v4649 = vadd.f32 0.0, %v4648
  %v4650 = vpop.f32.mrb[0].mxu0
  %4651 = vdwg.mxu0
  %s4652 = scalar_lea.vmem %s13, 120
  %v4653 = vld [vmem:[%s4652] sm:$0xff]
  %v4654 = vld [vmem:[%s4652 + $0x8] sm:$0xff]
  %v4655 = vld [vmem:[%s4652 + $0x10] sm:$0xff]
  %v4656 = vld [vmem:[%s4652 + $0x18] sm:$0xff]
  %v4657 = vld [vmem:[%s4652 + $0x20] sm:$0xff]
  %v4658 = vld [vmem:[%s4652 + $0x28] sm:$0xff]
  %v4659 = vld [vmem:[%s4652 + $0x30] sm:$0xff]
  %v4660 = vld [vmem:[%s4652 + $0x38] sm:$0xff]
  %v4661 = vld [vmem:[%s4652 + $0x40] sm:$0xff]
  %v4662 = vld [vmem:[%s4652 + $0x48] sm:$0xff]
  %v4663 = vld [vmem:[%s4652 + $0x50] sm:$0xff]
  %v4664 = vld [vmem:[%s4652 + $0x58] sm:$0xff]
  %v4665 = vld [vmem:[%s4652 + $0x60] sm:$0xff]
  %v4666 = vld [vmem:[%s4652 + $0x68] sm:$0xff]
  %v4667 = vld [vmem:[%s4652 + $0x70] sm:$0xff]
  %v4669 = vsel %vm649, %v4649, 0
  %4671 = vmatprep.subr.mxu0 0.0
  %4672 = vmatpush1.msra.mxu0 %v4653
  %4673 = vmatprep.subr.mxu0 0.0
  %4674 = vmatpush1.msra.mxu0 %v4654
  %4675 = vmatprep.subr.mxu0 0.0
  %4676 = vmatpush1.msra.mxu0 %v4655
  %4677 = vmatprep.subr.mxu0 0.0
  %4678 = vmatpush1.msra.mxu0 %v4656
  %4679 = vmatprep.subr.mxu0 0.0
  %4680 = vmatpush1.msra.mxu0 %v4657
  %4681 = vmatprep.subr.mxu0 0.0
  %4682 = vmatpush1.msra.mxu0 %v4658
  %4683 = vmatprep.subr.mxu0 0.0
  %4684 = vmatpush1.msra.mxu0 %v4659
  %4685 = vmatprep.subr.mxu0 0.0
  %4686 = vmatpush1.msra.mxu0 %v4660
  %4687 = vmatprep.subr.mxu0 0.0
  %4688 = vmatpush1.msra.mxu0 %v4661
  %4689 = vmatprep.subr.mxu0 0.0
  %4690 = vmatpush1.msra.mxu0 %v4662
  %4691 = vmatprep.subr.mxu0 0.0
  %4692 = vmatpush1.msra.mxu0 %v4663
  %4693 = vmatprep.subr.mxu0 0.0
  %4694 = vmatpush1.msra.mxu0 %v4664
  %4695 = vmatprep.subr.mxu0 0.0
  %4696 = vmatpush1.msra.mxu0 %v4665
  %4697 = vmatprep.subr.mxu0 0.0
  %4698 = vmatpush1.msra.mxu0 %v4666
  %4699 = vmatprep.subr.mxu0 0.0
  %4700 = vmatpush1.msra.mxu0 %v4667
  %4701 = vmatprep.subr.mxu0 0.0
  %4702 = vmatpush1.msra.mxu0 0.0
  %4703 = vmatprep.subr.mxu0 0.0
  %4704 = vmatpush1.msra.mxu0 0.0
  %4705 = vmatprep.subr.mxu0 0.0
  %4706 = vmatpush1.msra.mxu0 0.0
  %4707 = vmatprep.subr.mxu0 0.0
  %4708 = vmatpush1.msra.mxu0 0.0
  %4709 = vmatprep.subr.mxu0 0.0
  %4710 = vmatpush1.msra.mxu0 0.0
  %4711 = vmatprep.subr.mxu0 0.0
  %4712 = vmatpush1.msra.mxu0 0.0
  %4713 = vmatprep.subr.mxu0 0.0
  %4714 = vmatpush1.msra.mxu0 0.0
  %4715 = vmatprep.subr.mxu0 0.0
  %4716 = vmatpush1.msra.mxu0 0.0
  %4717 = vmatprep.subr.mxu0 0.0
  %4718 = vmatpush1.msra.mxu0 0.0
  %4719 = vmatprep.subr.mxu0 0.0
  %4720 = vmatpush1.msra.mxu0 0.0
  %4721 = vmatprep.subr.mxu0 0.0
  %4722 = vmatpush1.msra.mxu0 0.0
  %4723 = vmatprep.subr.mxu0 0.0
  %4724 = vmatpush1.msra.mxu0 0.0
  %4725 = vmatprep.subr.mxu0 0.0
  %4726 = vmatpush1.msra.mxu0 0.0
  %4727 = vmatprep.subr.mxu0 0.0
  %4728 = vmatpush1.msra.mxu0 0.0
  %4729 = vmatprep.subr.mxu0 0.0
  %4730 = vmatpush1.msra.mxu0 0.0
  %4731 = vmatprep.subr.mxu0 0.0
  %4732 = vmatpush1.msra.mxu0 0.0
  %4733 = vmatprep.subr.mxu0 0.0
  %4734 = vmatpush1.msra.mxu0 0.0
  %4735 = vmatprep.mubr.f32.mxu0 0.0
  %4736 = vmatmul.mubr.f32.gmra.mrb[0].mxu0 %v4669
  %v4737 = vpop.f32.mrb[0].mxu0
  %v4738 = vadd.f32 0.0, %v4737
  %v4739 = vpop.f32.mrb[0].mxu0
  %4740 = vdwg.mxu0
  %v4742 = vsel %vm649, %v4559, 0
  %4744 = vmatprep.subr.mxu0 0.0
  %4745 = vmatpush1.msra.mxu0 %v4562
  %4746 = vmatprep.subr.mxu0 0.0
  %4747 = vmatpush1.msra.mxu0 %v4563
  %4748 = vmatprep.subr.mxu0 0.0
  %4749 = vmatpush1.msra.mxu0 %v4564
  %4750 = vmatprep.subr.mxu0 0.0
  %4751 = vmatpush1.msra.mxu0 %v4565
  %4752 = vmatprep.subr.mxu0 0.0
  %4753 = vmatpush1.msra.mxu0 %v4566
  %4754 = vmatprep.subr.mxu0 0.0
  %4755 = vmatpush1.msra.mxu0 %v4567
  %4756 = vmatprep.subr.mxu0 0.0
  %4757 = vmatpush1.msra.mxu0 %v4568
  %4758 = vmatprep.subr.mxu0 0.0
  %4759 = vmatpush1.msra.mxu0 %v4569
  %4760 = vmatprep.subr.mxu0 0.0
  %4761 = vmatpush1.msra.mxu0 %v4570
  %4762 = vmatprep.subr.mxu0 0.0
  %4763 = vmatpush1.msra.mxu0 %v4571
  %4764 = vmatprep.subr.mxu0 0.0
  %4765 = vmatpush1.msra.mxu0 %v4572
  %4766 = vmatprep.subr.mxu0 0.0
  %4767 = vmatpush1.msra.mxu0 %v4573
  %4768 = vmatprep.subr.mxu0 0.0
  %4769 = vmatpush1.msra.mxu0 %v4574
  %4770 = vmatprep.subr.mxu0 0.0
  %4771 = vmatpush1.msra.mxu0 %v4575
  %4772 = vmatprep.subr.mxu0 0.0
  %4773 = vmatpush1.msra.mxu0 %v4576
  %4774 = vmatprep.subr.mxu0 0.0
  %4775 = vmatpush1.msra.mxu0 0.0
  %4776 = vmatprep.subr.mxu0 0.0
  %4777 = vmatpush1.msra.mxu0 0.0
  %4778 = vmatprep.subr.mxu0 0.0
  %4779 = vmatpush1.msra.mxu0 0.0
  %4780 = vmatprep.subr.mxu0 0.0
  %4781 = vmatpush1.msra.mxu0 0.0
  %4782 = vmatprep.subr.mxu0 0.0
  %4783 = vmatpush1.msra.mxu0 0.0
  %4784 = vmatprep.subr.mxu0 0.0
  %4785 = vmatpush1.msra.mxu0 0.0
  %4786 = vmatprep.subr.mxu0 0.0
  %4787 = vmatpush1.msra.mxu0 0.0
  %4788 = vmatprep.subr.mxu0 0.0
  %4789 = vmatpush1.msra.mxu0 0.0
  %4790 = vmatprep.subr.mxu0 0.0
  %4791 = vmatpush1.msra.mxu0 0.0
  %4792 = vmatprep.subr.mxu0 0.0
  %4793 = vmatpush1.msra.mxu0 0.0
  %4794 = vmatprep.subr.mxu0 0.0
  %4795 = vmatpush1.msra.mxu0 0.0
  %4796 = vmatprep.subr.mxu0 0.0
  %4797 = vmatpush1.msra.mxu0 0.0
  %4798 = vmatprep.subr.mxu0 0.0
  %4799 = vmatpush1.msra.mxu0 0.0
  %4800 = vmatprep.subr.mxu0 0.0
  %4801 = vmatpush1.msra.mxu0 0.0
  %4802 = vmatprep.subr.mxu0 0.0
  %4803 = vmatpush1.msra.mxu0 0.0
  %4804 = vmatprep.subr.mxu0 0.0
  %4805 = vmatpush1.msra.mxu0 0.0
  %4806 = vmatprep.subr.mxu0 0.0
  %4807 = vmatpush1.msra.mxu0 0.0
  %4808 = vmatprep.mubr.f32.mxu0 0.0
  %4809 = vmatmul.mubr.f32.gmra.mrb[0].mxu0 %v4742
  %v4810 = vpop.f32.mrb[0].mxu0
  %v4811 = vadd.f32 %v4738, %v4810
  %v4812 = vpop.f32.mrb[0].mxu0
  %4813 = vdwg.mxu0
  %s4814 = scalar_lea.vmem %s8, 16
  %v4815 = vld [vmem:[%s4814] sm:$0xff]
  %v4817 = vsel %vm4488, %v4815, 0
  %4819 = vmatprep.subr.mxu0 0.0
  %4820 = vmatpush1.msra.mxu0 %v4484
  %4821 = vmatprep.subr.mxu0 0.0
  %4822 = vmatpush1.msra.mxu0 %v4485
  %4823 = vmatprep.subr.mxu0 0.0
  %4824 = vmatpush1.msra.mxu0 %v4486
  %4825 = vmatprep.subr.mxu0 0.0
  %4826 = vmatpush1.msra.mxu0 0.0
  %4827 = vmatprep.subr.mxu0 0.0
  %4828 = vmatpush1.msra.mxu0 0.0
  %4829 = vmatprep.subr.mxu0 0.0
  %4830 = vmatpush1.msra.mxu0 0.0
  %4831 = vmatprep.subr.mxu0 0.0
  %4832 = vmatpush1.msra.mxu0 0.0
  %4833 = vmatprep.subr.mxu0 0.0
  %4834 = vmatpush1.msra.mxu0 0.0
  %4835 = vmatprep.subr.mxu0 0.0
  %4836 = vmatpush1.msra.mxu0 0.0
  %4837 = vmatprep.subr.mxu0 0.0
  %4838 = vmatpush1.msra.mxu0 0.0
  %4839 = vmatprep.subr.mxu0 0.0
  %4840 = vmatpush1.msra.mxu0 0.0
  %4841 = vmatprep.subr.mxu0 0.0
  %4842 = vmatpush1.msra.mxu0 0.0
  %4843 = vmatprep.subr.mxu0 0.0
  %4844 = vmatpush1.msra.mxu0 0.0
  %4845 = vmatprep.subr.mxu0 0.0
  %4846 = vmatpush1.msra.mxu0 0.0
  %4847 = vmatprep.subr.mxu0 0.0
  %4848 = vmatpush1.msra.mxu0 0.0
  %4849 = vmatprep.subr.mxu0 0.0
  %4850 = vmatpush1.msra.mxu0 0.0
  %4851 = vmatprep.subr.mxu0 0.0
  %4852 = vmatpush1.msra.mxu0 0.0
  %4853 = vmatprep.subr.mxu0 0.0
  %4854 = vmatpush1.msra.mxu0 0.0
  %4855 = vmatprep.subr.mxu0 0.0
  %4856 = vmatpush1.msra.mxu0 0.0
  %4857 = vmatprep.subr.mxu0 0.0
  %4858 = vmatpush1.msra.mxu0 0.0
  %4859 = vmatprep.subr.mxu0 0.0
  %4860 = vmatpush1.msra.mxu0 0.0
  %4861 = vmatprep.subr.mxu0 0.0
  %4862 = vmatpush1.msra.mxu0 0.0
  %4863 = vmatprep.subr.mxu0 0.0
  %4864 = vmatpush1.msra.mxu0 0.0
  %4865 = vmatprep.subr.mxu0 0.0
  %4866 = vmatpush1.msra.mxu0 0.0
  %4867 = vmatprep.subr.mxu0 0.0
  %4868 = vmatpush1.msra.mxu0 0.0
  %4869 = vmatprep.subr.mxu0 0.0
  %4870 = vmatpush1.msra.mxu0 0.0
  %4871 = vmatprep.subr.mxu0 0.0
  %4872 = vmatpush1.msra.mxu0 0.0
  %4873 = vmatprep.subr.mxu0 0.0
  %4874 = vmatpush1.msra.mxu0 0.0
  %4875 = vmatprep.subr.mxu0 0.0
  %4876 = vmatpush1.msra.mxu0 0.0
  %4877 = vmatprep.subr.mxu0 0.0
  %4878 = vmatpush1.msra.mxu0 0.0
  %4879 = vmatprep.subr.mxu0 0.0
  %4880 = vmatpush1.msra.mxu0 0.0
  %4881 = vmatprep.subr.mxu0 0.0
  %4882 = vmatpush1.msra.mxu0 0.0
  %4883 = vmatprep.mubr.f32.mxu0 0.0
  %4884 = vmatmul.mubr.f32.gmra.mrb[0].mxu0 %v4817
  %v4885 = vpop.f32.mrb[0].mxu0
  %v4886 = vadd.f32 0.0, %v4885
  %v4887 = vpop.f32.mrb[0].mxu0
  %4888 = vdwg.mxu0
  %s4889 = scalar_lea.vmem %s13, 240
  %v4890 = vld [vmem:[%s4889] sm:$0xff]
  %v4891 = vld [vmem:[%s4889 + $0x8] sm:$0xff]
  %v4892 = vld [vmem:[%s4889 + $0x10] sm:$0xff]
  %v4893 = vld [vmem:[%s4889 + $0x18] sm:$0xff]
  %v4894 = vld [vmem:[%s4889 + $0x20] sm:$0xff]
  %v4895 = vld [vmem:[%s4889 + $0x28] sm:$0xff]
  %v4896 = vld [vmem:[%s4889 + $0x30] sm:$0xff]
  %v4897 = vld [vmem:[%s4889 + $0x38] sm:$0xff]
  %v4898 = vld [vmem:[%s4889 + $0x40] sm:$0xff]
  %v4899 = vld [vmem:[%s4889 + $0x48] sm:$0xff]
  %v4900 = vld [vmem:[%s4889 + $0x50] sm:$0xff]
  %v4901 = vld [vmem:[%s4889 + $0x58] sm:$0xff]
  %v4902 = vld [vmem:[%s4889 + $0x60] sm:$0xff]
  %v4903 = vld [vmem:[%s4889 + $0x68] sm:$0xff]
  %v4904 = vld [vmem:[%s4889 + $0x70] sm:$0xff]
  %v4906 = vsel %vm649, %v4886, 0
  %4908 = vmatprep.subr.mxu0 0.0
  %4909 = vmatpush1.msra.mxu0 %v4890
  %4910 = vmatprep.subr.mxu0 0.0
  %4911 = vmatpush1.msra.mxu0 %v4891
  %4912 = vmatprep.subr.mxu0 0.0
  %4913 = vmatpush1.msra.mxu0 %v4892
  %4914 = vmatprep.subr.mxu0 0.0
  %4915 = vmatpush1.msra.mxu0 %v4893
  %4916 = vmatprep.subr.mxu0 0.0
  %4917 = vmatpush1.msra.mxu0 %v4894
  %4918 = vmatprep.subr.mxu0 0.0
  %4919 = vmatpush1.msra.mxu0 %v4895
  %4920 = vmatprep.subr.mxu0 0.0
  %4921 = vmatpush1.msra.mxu0 %v4896
  %4922 = vmatprep.subr.mxu0 0.0
  %4923 = vmatpush1.msra.mxu0 %v4897
  %4924 = vmatprep.subr.mxu0 0.0
  %4925 = vmatpush1.msra.mxu0 %v4898
  %4926 = vmatprep.subr.mxu0 0.0
  %4927 = vmatpush1.msra.mxu0 %v4899
  %4928 = vmatprep.subr.mxu0 0.0
  %4929 = vmatpush1.msra.mxu0 %v4900
  %4930 = vmatprep.subr.mxu0 0.0
  %4931 = vmatpush1.msra.mxu0 %v4901
  %4932 = vmatprep.subr.mxu0 0.0
  %4933 = vmatpush1.msra.mxu0 %v4902
  %4934 = vmatprep.subr.mxu0 0.0
  %4935 = vmatpush1.msra.mxu0 %v4903
  %4936 = vmatprep.subr.mxu0 0.0
  %4937 = vmatpush1.msra.mxu0 %v4904
  %4938 = vmatprep.subr.mxu0 0.0
  %4939 = vmatpush1.msra.mxu0 0.0
  %4940 = vmatprep.subr.mxu0 0.0
  %4941 = vmatpush1.msra.mxu0 0.0
  %4942 = vmatprep.subr.mxu0 0.0
  %4943 = vmatpush1.msra.mxu0 0.0
  %4944 = vmatprep.subr.mxu0 0.0
  %4945 = vmatpush1.msra.mxu0 0.0
  %4946 = vmatprep.subr.mxu0 0.0
  %4947 = vmatpush1.msra.mxu0 0.0
  %4948 = vmatprep.subr.mxu0 0.0
  %4949 = vmatpush1.msra.mxu0 0.0
  %4950 = vmatprep.subr.mxu0 0.0
  %4951 = vmatpush1.msra.mxu0 0.0
  %4952 = vmatprep.subr.mxu0 0.0
  %4953 = vmatpush1.msra.mxu0 0.0
  %4954 = vmatprep.subr.mxu0 0.0
  %4955 = vmatpush1.msra.mxu0 0.0
  %4956 = vmatprep.subr.mxu0 0.0
  %4957 = vmatpush1.msra.mxu0 0.0
  %4958 = vmatprep.subr.mxu0 0.0
  %4959 = vmatpush1.msra.mxu0 0.0
  %4960 = vmatprep.subr.mxu0 0.0
  %4961 = vmatpush1.msra.mxu0 0.0
  %4962 = vmatprep.subr.mxu0 0.0
  %4963 = vmatpush1.msra.mxu0 0.0
  %4964 = vmatprep.subr.mxu0 0.0
  %4965 = vmatpush1.msra.mxu0 0.0
  %4966 = vmatprep.subr.mxu0 0.0
  %4967 = vmatpush1.msra.mxu0 0.0
  %4968 = vmatprep.subr.mxu0 0.0
  %4969 = vmatpush1.msra.mxu0 0.0
  %4970 = vmatprep.subr.mxu0 0.0
  %4971 = vmatpush1.msra.mxu0 0.0
  %4972 = vmatprep.mubr.f32.mxu0 0.0
  %4973 = vmatmul.mubr.f32.gmra.mrb[0].mxu0 %v4906
  %v4974 = vpop.f32.mrb[0].mxu0
  %v4975 = vadd.f32 0.0, %v4974
  %v4976 = vpop.f32.mrb[0].mxu0
  %4977 = vdwg.mxu0
  %v4978 = vadd.f32 %v4811, %v4975
  %v4979 = vld [vmem:[%s14] sm:$0x1]
  %v4981 = vlaneseq
  %v4982 = vshrl.u32 %v4981, 7
  %v4983 = vsub.s32 0, %v4982
  %v4984 = vrot.slane %v4979, %v4983
  %v4986 = vadd.f32 %v4978, %v4984
  %v4987 = vmax.f32 %v4986, 0.0
  %v4988 = vld [vmem:[%s15] sm:$0xff]
  %v4989 = vld [vmem:[%s15 + $0x8] sm:$0xff]
  %v4990 = vld [vmem:[%s15 + $0x10] sm:$0xff]
  %v4991 = vld [vmem:[%s15 + $0x18] sm:$0xff]
  %v4992 = vld [vmem:[%s16] sm:$0x1]
  %v4994 = vlaneseq
  %v4995 = vshrl.u32 %v4994, 7
  %v4996 = vsub.s32 0, %v4995
  %v4997 = vrot.slane %v4992, %v4996
  %v5000 = vsel %vm4287, %v4987, 0
  %5002 = vmatprep.subr.mxu0 0.0
  %5003 = vmatpush1.msra.mxu0 %v4988
  %5004 = vmatprep.subr.mxu0 0.0
  %5005 = vmatpush1.msra.mxu0 %v4989
  %5006 = vmatprep.subr.mxu0 0.0
  %5007 = vmatpush1.msra.mxu0 %v4990
  %5008 = vmatprep.subr.mxu0 0.0
  %5009 = vmatpush1.msra.mxu0 %v4991
  %5010 = vmatprep.subr.mxu0 0.0
  %5011 = vmatpush1.msra.mxu0 0.0
  %5012 = vmatprep.subr.mxu0 0.0
  %5013 = vmatpush1.msra.mxu0 0.0
  %5014 = vmatprep.subr.mxu0 0.0
  %5015 = vmatpush1.msra.mxu0 0.0
  %5016 = vmatprep.subr.mxu0 0.0
  %5017 = vmatpush1.msra.mxu0 0.0
  %5018 = vmatprep.subr.mxu0 0.0
  %5019 = vmatpush1.msra.mxu0 0.0
  %5020 = vmatprep.subr.mxu0 0.0
  %5021 = vmatpush1.msra.mxu0 0.0
  %5022 = vmatprep.subr.mxu0 0.0
  %5023 = vmatpush1.msra.mxu0 0.0
  %5024 = vmatprep.subr.mxu0 0.0
  %5025 = vmatpush1.msra.mxu0 0.0
  %5026 = vmatprep.subr.mxu0 0.0
  %5027 = vmatpush1.msra.mxu0 0.0
  %5028 = vmatprep.subr.mxu0 0.0
  %5029 = vmatpush1.msra.mxu0 0.0
  %5030 = vmatprep.subr.mxu0 0.0
  %5031 = vmatpush1.msra.mxu0 0.0
  %5032 = vmatprep.subr.mxu0 0.0
  %5033 = vmatpush1.msra.mxu0 0.0
  %5034 = vmatprep.subr.mxu0 0.0
  %5035 = vmatpush1.msra.mxu0 0.0
  %5036 = vmatprep.subr.mxu0 0.0
  %5037 = vmatpush1.msra.mxu0 0.0
  %5038 = vmatprep.subr.mxu0 0.0
  %5039 = vmatpush1.msra.mxu0 0.0
  %5040 = vmatprep.subr.mxu0 0.0
  %5041 = vmatpush1.msra.mxu0 0.0
  %5042 = vmatprep.subr.mxu0 0.0
  %5043 = vmatpush1.msra.mxu0 0.0
  %5044 = vmatprep.subr.mxu0 0.0
  %5045 = vmatpush1.msra.mxu0 0.0
  %5046 = vmatprep.subr.mxu0 0.0
  %5047 = vmatpush1.msra.mxu0 0.0
  %5048 = vmatprep.subr.mxu0 0.0
  %5049 = vmatpush1.msra.mxu0 0.0
  %5050 = vmatprep.subr.mxu0 0.0
  %5051 = vmatpush1.msra.mxu0 0.0
  %5052 = vmatprep.subr.mxu0 0.0
  %5053 = vmatpush1.msra.mxu0 0.0
  %5054 = vmatprep.subr.mxu0 0.0
  %5055 = vmatpush1.msra.mxu0 0.0
  %5056 = vmatprep.subr.mxu0 0.0
  %5057 = vmatpush1.msra.mxu0 0.0
  %5058 = vmatprep.subr.mxu0 0.0
  %5059 = vmatpush1.msra.mxu0 0.0
  %5060 = vmatprep.subr.mxu0 0.0
  %5061 = vmatpush1.msra.mxu0 0.0
  %5062 = vmatprep.subr.mxu0 0.0
  %5063 = vmatpush1.msra.mxu0 0.0
  %5064 = vmatprep.subr.mxu0 0.0
  %5065 = vmatpush1.msra.mxu0 0.0
  %5066 = vmatprep.mubr.f32.mxu0 0.0
  %5067 = vmatmul.mubr.f32.gmra.mrb[0].mxu0 %v5000
  %v5068 = vpop.f32.mrb[0].mxu0
  %v5069 = vadd.f32 %v4997, %v5068
  %v5070 = vpop.f32.mrb[0].mxu0
  %5071 = vdwg.mxu0
  %v5072 = vmax.f32 %v5069, 0.0
  %v5073 = vld [vmem:[%s17] sm:$0xff]
  %v5074 = vld [vmem:[%s17 + $0x8] sm:$0xff]
  %v5075 = vld [vmem:[%s18] sm:$0x1]
  %v5077 = vlaneseq
  %v5078 = vshrl.u32 %v5077, 7
  %v5079 = vsub.s32 0, %v5078
  %v5080 = vrot.slane %v5075, %v5079
  %vm5082 = vcmask 130048
  %v5084 = vsel %vm5082, %v5072, 0
  %5086 = vmatprep.subr.mxu0 0.0
  %5087 = vmatpush1.msra.mxu0 %v5073
  %5088 = vmatprep.subr.mxu0 0.0
  %5089 = vmatpush1.msra.mxu0 %v5074
  %5090 = vmatprep.subr.mxu0 0.0
  %5091 = vmatpush1.msra.mxu0 0.0
  %5092 = vmatprep.subr.mxu0 0.0
  %5093 = vmatpush1.msra.mxu0 0.0
  %5094 = vmatprep.subr.mxu0 0.0
  %5095 = vmatpush1.msra.mxu0 0.0
  %5096 = vmatprep.subr.mxu0 0.0
  %5097 = vmatpush1.msra.mxu0 0.0
  %5098 = vmatprep.subr.mxu0 0.0
  %5099 = vmatpush1.msra.mxu0 0.0
  %5100 = vmatprep.subr.mxu0 0.0
  %5101 = vmatpush1.msra.mxu0 0.0
  %5102 = vmatprep.subr.mxu0 0.0
  %5103 = vmatpush1.msra.mxu0 0.0
  %5104 = vmatprep.subr.mxu0 0.0
  %5105 = vmatpush1.msra.mxu0 0.0
  %5106 = vmatprep.subr.mxu0 0.0
  %5107 = vmatpush1.msra.mxu0 0.0
  %5108 = vmatprep.subr.mxu0 0.0
  %5109 = vmatpush1.msra.mxu0 0.0
  %5110 = vmatprep.subr.mxu0 0.0
  %5111 = vmatpush1.msra.mxu0 0.0
  %5112 = vmatprep.subr.mxu0 0.0
  %5113 = vmatpush1.msra.mxu0 0.0
  %5114 = vmatprep.subr.mxu0 0.0
  %5115 = vmatpush1.msra.mxu0 0.0
  %5116 = vmatprep.subr.mxu0 0.0
  %5117 = vmatpush1.msra.mxu0 0.0
  %5118 = vmatprep.subr.mxu0 0.0
  %5119 = vmatpush1.msra.mxu0 0.0
  %5120 = vmatprep.subr.mxu0 0.0
  %5121 = vmatpush1.msra.mxu0 0.0
  %5122 = vmatprep.subr.mxu0 0.0
  %5123 = vmatpush1.msra.mxu0 0.0
  %5124 = vmatprep.subr.mxu0 0.0
  %5125 = vmatpush1.msra.mxu0 0.0
  %5126 = vmatprep.subr.mxu0 0.0
  %5127 = vmatpush1.msra.mxu0 0.0
  %5128 = vmatprep.subr.mxu0 0.0
  %5129 = vmatpush1.msra.mxu0 0.0
  %5130 = vmatprep.subr.mxu0 0.0
  %5131 = vmatpush1.msra.mxu0 0.0
  %5132 = vmatprep.subr.mxu0 0.0
  %5133 = vmatpush1.msra.mxu0 0.0
  %5134 = vmatprep.subr.mxu0 0.0
  %5135 = vmatpush1.msra.mxu0 0.0
  %5136 = vmatprep.subr.mxu0 0.0
  %5137 = vmatpush1.msra.mxu0 0.0
  %5138 = vmatprep.subr.mxu0 0.0
  %5139 = vmatpush1.msra.mxu0 0.0
  %5140 = vmatprep.subr.mxu0 0.0
  %5141 = vmatpush1.msra.mxu0 0.0
  %5142 = vmatprep.subr.mxu0 0.0
  %5143 = vmatpush1.msra.mxu0 0.0
  %5144 = vmatprep.subr.mxu0 0.0
  %5145 = vmatpush1.msra.mxu0 0.0
  %5146 = vmatprep.subr.mxu0 0.0
  %5147 = vmatpush1.msra.mxu0 0.0
  %5148 = vmatprep.subr.mxu0 0.0
  %5149 = vmatpush1.msra.mxu0 0.0
  %5150 = vmatprep.mubr.f32.mxu0 0.0
  %5151 = vmatmul.mubr.f32.gmra.mrb[0].mxu0 %v5084
  %v5152 = vpop.f32.mrb[0].mxu0
  %v5153 = vadd.f32 %v5080, %v5152
  %v5154 = vpop.f32.mrb[0].mxu0
  %5155 = vdwg.mxu0
  %vm5156 = vcmask 31744
  %5157 = vst.msk [vmem:[%s19] sm:$0xff] %vm5156, %v5153
  // Predicated region
  $region78: #{tracking_model_forward.1} parent=0 // pred_check
    _
  $region79: #{tracking_model_forward.1} parent=0 // pred_check_branch
    %5159 = sbr.rel (0) target = $region81
  $region80: #{tracking_model_forward.1} parent=0 // pred_region
    _
  $region81: #{tracking_model_forward.1} parent=0 // pred_fallthru
    _
  // Predicated region
  $region82: #{tracking_model_forward.1} parent=0 // pred_check
    _
  $region83: #{tracking_model_forward.1} parent=0 // pred_check_branch
    %5161 = sbr.rel (0) target = $region85
  $region84: #{tracking_model_forward.1} parent=0 // pred_region
    _
  $region85: #{tracking_model_forward.1} parent=0 // pred_fallthru
    _

</llo_original>
